<compile_context>
chip_gen: v7x
topology: tpu7x:2x2x1
jax: 0.10.0
libtpu: 0.0.40
codegen_flags: <defaults>
</compile_context>

<pallas_src>
import functools

import jax
import jax.numpy as jnp
from jax.experimental import pallas as pl
from jax.experimental.pallas import tpu as pltpu


# ----------------------------------------------------------------------------- config

class Config:
    image_size = 16
    channels = 3          # RGB image, NCHW
    patch = 4             # scaled-down patch size for the small demo shapes
    hidden = 32
    num_heads = 2
    head_dim = 16
    intermediate = 64
    num_layers = 12       # -> 13 hidden states (embeddings + 12 layers)
    num_classes = 10
    vocab = 8
    cls_token_id = 1
    ln_eps = 1e-12


# ----------------------------------------------------------------------------- in-kernel math helpers

def _erf_poly(x):
    # Abramowitz & Stegun 7.1.26, |error| < 1.5e-7 — "exact" erf-GELU fidelity using
    # only exp / mul / select, all of which lower cleanly in Mosaic.
    a1, a2, a3, a4, a5 = 0.254829592, -0.284496736, 1.421413741, -1.453152027, 1.061405429
    p = 0.3275911
    sgn = jnp.where(x >= 0.0, 1.0, -1.0)
    ax = jnp.abs(x)
    t = 1.0 / (1.0 + p * ax)
    poly = ((((a5 * t + a4) * t + a3) * t + a2) * t + a1) * t
    return sgn * (1.0 - poly * jnp.exp(-ax * ax))


def _gelu_exact(x):
    return 0.5 * x * (1.0 + _erf_poly(x * 0.7071067811865476))


def _layernorm(x, gamma, beta, eps):
    mean = jnp.mean(x, axis=-1, keepdims=True)
    var = jnp.mean(jnp.square(x - mean), axis=-1, keepdims=True)
    return (x - mean) * jax.lax.rsqrt(var + eps) * gamma + beta


# ----------------------------------------------------------------------------- fully fused ViT kernel

def _vit_kernel(patches_ref, pw_ref, pb_ref, wemb_ref, pos_ref, embln_ref,
                wqkv_ref, bqkv_ref, wo_ref, bo_ref, ln1_ref,
                wff1_ref, bff1_ref, wff2_ref, bff2_ref, ln2_ref,
                poolw_ref, poolb_ref, clsw_ref, clsb_ref,
                hid_ref, logits_ref,
                x_scr,
                *, B, S, P, nh, dh, eps, cls_id):
    """One grid step == one transformer layer; x stays resident in VMEM scratch.

    Step 0 also builds the embedding (patch projection + [CLS] + pos + LayerNorm);
    the last step also runs the pooler + classifier head.
    """
    H = nh * dh
    layer = pl.program_id(0)
    n_layers = pl.num_programs(0)

    # ---- step 0: patch projection + [CLS]/pos embedding + embedding LayerNorm ----
    @pl.when(layer == 0)
    def _():
        pe = (jnp.dot(patches_ref[...], pw_ref[...], preferred_element_type=jnp.float32)
              + pb_ref[...])                                   # (B*P, H)
        cls_row = wemb_ref[cls_id:cls_id + 1, :] + pos_ref[0:1, :]   # (1, H)
        pos_pat = pos_ref[1:S, :]                                    # (P, H)
        rows = []
        for b_i in range(B):                                   # static unroll (B small)
            rows.append(cls_row)
            rows.append(pe[b_i * P:(b_i + 1) * P, :] + pos_pat)
        x0 = jnp.concatenate(rows, axis=0)                     # (B*S, H)
        x_emb = _layernorm(x0, embln_ref[0:1, :], embln_ref[1:2, :], eps)
        x_scr[...] = x_emb
        hid_ref[0] = x_emb                                     # hidden_states[0]

    x = x_scr[...]                                             # (B*S, H)

    # ---- fused QKV projection: (B*S, H) @ (H, 3H) ----
    qkv = jnp.dot(x, wqkv_ref[0], preferred_element_type=jnp.float32) + bqkv_ref[0]

    # ---- multi-head self-attention: all (batch, head) pairs in this single step ----
    scale = dh ** -0.5                                         # static Python float
    batch_ctx = []
    for b_i in range(B):                                       # static unroll (B small)
        r0 = b_i * S
        head_ctx = []
        for h_i in range(nh):                                  # static unroll (nh small)
            c0 = h_i * dh
            q = qkv[r0:r0 + S, c0:c0 + dh]                     # (S, dh)
            k = qkv[r0:r0 + S, H + c0:H + c0 + dh]
            v = qkv[r0:r0 + S, 2 * H + c0:2 * H + c0 + dh]
            # q @ k^T without an explicit transpose: contract dim 1 of both operands.
            s = jax.lax.dot_general(q, k, (((1,), (1,)), ((), ())),
                                    preferred_element_type=jnp.float32) * scale
            s = s - jnp.max(s, axis=-1, keepdims=True)
            p = jnp.exp(s)
            p = p * pl.reciprocal(jnp.sum(p, axis=-1, keepdims=True), approx=True)
            head_ctx.append(jnp.dot(p, v, preferred_element_type=jnp.float32))
        batch_ctx.append(jnp.concatenate(head_ctx, axis=-1))   # (S, H)
    ctx = jnp.concatenate(batch_ctx, axis=0)                   # (B*S, H)

    attn = jnp.dot(ctx, wo_ref[0], preferred_element_type=jnp.float32) + bo_ref[0]
    ln1 = ln1_ref[0]
    x = _layernorm(x + attn, ln1[0:1, :], ln1[1:2, :], eps)

    # ---- MLP (exact erf-GELU) ----
    ff = jnp.dot(x, wff1_ref[0], preferred_element_type=jnp.float32) + bff1_ref[0]
    ff = _gelu_exact(ff)
    ff = jnp.dot(ff, wff2_ref[0], preferred_element_type=jnp.float32) + bff2_ref[0]
    ln2 = ln2_ref[0]
    x = _layernorm(x + ff, ln2[0:1, :], ln2[1:2, :], eps)

    x_scr[...] = x
    hid_ref[layer + 1] = x                                     # hidden_states[layer+1]

    # ---- last step: pooler (tanh) + classifier head on the [CLS] token ----
    @pl.when(layer == n_layers - 1)
    def _():
        cls_rows = jnp.concatenate([x[b_i * S:b_i * S + 1, :] for b_i in range(B)],
                                   axis=0)                     # (B, H)
        pooled = jnp.tanh(
            jnp.dot(cls_rows, poolw_ref[...], preferred_element_type=jnp.float32)
            + poolb_ref[...])
        logits_ref[...] = (jnp.dot(pooled, clsw_ref[...],
                                   preferred_element_type=jnp.float32)
                           + clsb_ref[...]).astype(logits_ref.dtype)


def fused_vit(patches, params, cfg, *, B):
    H, I, L = cfg.hidden, cfg.intermediate, cfg.num_layers
    C = cfg.num_classes
    P = (cfg.image_size // cfg.patch) ** 2
    S = P + 1
    BS = B * S
    patch_dim = cfg.channels * cfg.patch * cfg.patch

    kernel = functools.partial(_vit_kernel, B=B, S=S, P=P, nh=cfg.num_heads,
                               dh=cfg.head_dim, eps=cfg.ln_eps,
                               cls_id=cfg.cls_token_id)

    const2 = lambda l: (0, 0)
    const3 = lambda l: (0, 0, 0)
    per_l = lambda l: (l, 0, 0)

    hidden, logits = pl.pallas_call(
        kernel,
        out_shape=(jax.ShapeDtypeStruct((L + 1, BS, H), jnp.float32),
                   jax.ShapeDtypeStruct((B, C), jnp.float32)),
        grid=(L,),
        in_specs=[
            pl.BlockSpec((B * P, patch_dim), const2),   # patchified image
            pl.BlockSpec((patch_dim, H), const2),       # patch projection W
            pl.BlockSpec((1, H), const2),               # patch projection b
            pl.BlockSpec((cfg.vocab, H), const2),       # word embeddings ([CLS])
            pl.BlockSpec((S, H), const2),               # position embeddings
            pl.BlockSpec((2, H), const2),               # embedding LN gamma/beta
            pl.BlockSpec((1, H, 3 * H), per_l),         # wqkv
            pl.BlockSpec((1, 1, 3 * H), per_l),         # bqkv
            pl.BlockSpec((1, H, H), per_l),             # wo
            pl.BlockSpec((1, 1, H), per_l),             # bo
            pl.BlockSpec((1, 2, H), per_l),             # ln1 gamma/beta
            pl.BlockSpec((1, H, I), per_l),             # wff1
            pl.BlockSpec((1, 1, I), per_l),             # bff1
            pl.BlockSpec((1, I, H), per_l),             # wff2
            pl.BlockSpec((1, 1, H), per_l),             # bff2
            pl.BlockSpec((1, 2, H), per_l),             # ln2 gamma/beta
            pl.BlockSpec((H, H), const2),               # pooler W
            pl.BlockSpec((1, H), const2),               # pooler b
            pl.BlockSpec((H, C), const2),               # classifier W
            pl.BlockSpec((1, C), const2),               # classifier b
        ],
        out_specs=(pl.BlockSpec((L + 1, BS, H), const3),   # all 13 hidden states
                   pl.BlockSpec((B, C), const2)),          # logits
        scratch_shapes=[pltpu.VMEM((BS, H), jnp.float32)],
        compiler_params=pltpu.CompilerParams(dimension_semantics=("arbitrary",)),
    )(patches,
      params["patch_w"], params["patch_b"].reshape(1, H),
      params["word_emb"], params["pos_emb"], params["emb_ln"],
      params["wqkv"], params["bqkv"], params["wo"], params["bo"], params["ln1"],
      params["wff1"], params["bff1"], params["wff2"], params["bff2"], params["ln2"],
      params["pool_w"], params["pool_b"].reshape(1, H),
      params["cls_w"], params["cls_b"].reshape(1, C))
    return hidden, logits


# ----------------------------------------------------------------------------- model

def init_params(cfg, key):
    H, I, L = cfg.hidden, cfg.intermediate, cfg.num_layers
    patch_dim = cfg.channels * cfg.patch * cfg.patch
    S = (cfg.image_size // cfg.patch) ** 2 + 1

    ks = jax.random.split(key, 9)

    def nrm(k, shape):
        return 0.02 * jax.random.normal(k, shape, jnp.float32)

    ln_stack = jnp.stack([jnp.ones((L, H), jnp.float32),
                          jnp.zeros((L, H), jnp.float32)], axis=1)       # (L, 2, H)

    return {
        "word_emb": nrm(ks[0], (cfg.vocab, H)),
        "patch_w": nrm(ks[1], (patch_dim, H)),
        "patch_b": jnp.zeros((H,), jnp.float32),
        "pos_emb": nrm(ks[2], (S, H)),
        "emb_ln": jnp.stack([jnp.ones((H,), jnp.float32),
                             jnp.zeros((H,), jnp.float32)], axis=0),     # (2, H)
        "wqkv": nrm(ks[3], (L, H, 3 * H)),
        "bqkv": jnp.zeros((L, 1, 3 * H), jnp.float32),
        "wo": nrm(ks[4], (L, H, H)),
        "bo": jnp.zeros((L, 1, H), jnp.float32),
        "ln1": ln_stack,
        "wff1": nrm(ks[5], (L, H, I)),
        "bff1": jnp.zeros((L, 1, I), jnp.float32),
        "wff2": nrm(ks[6], (L, I, H)),
        "bff2": jnp.zeros((L, 1, H), jnp.float32),
        "ln2": ln_stack,
        "pool_w": nrm(ks[7], (H, H)),
        "pool_b": jnp.zeros((H,), jnp.float32),
        "cls_w": nrm(ks[8], (H, cfg.num_classes)),
        "cls_b": jnp.zeros((cfg.num_classes,), jnp.float32),
    }


def patchify(image, patch):
    # (B, C, H, W) NCHW -> (B, n_patches, C*patch*patch), matching Conv2d weight layout.
    B, C, Himg, Wimg = image.shape
    gh, gw = Himg // patch, Wimg // patch
    x = image.reshape(B, C, gh, patch, gw, patch)
    x = jnp.transpose(x, (0, 2, 4, 1, 3, 5))          # (B, gh, gw, C, p, p)
    return x.reshape(B, gh * gw, C * patch * patch)


def vit_forward(params, image, cfg):
    """Returns (logits, hidden_states) with hidden_states shape (13, B, S, H)."""
    B = image.shape[0]
    H = cfg.hidden
    P = (cfg.image_size // cfg.patch) ** 2
    S = P + 1
    L = cfg.num_layers

    # Patch embedding == Conv2d(C, H, kernel=patch, stride=patch): patchify outside
    # (pure layout plumbing), linear projection inside the fused kernel.
    patches = patchify(image, cfg.patch).reshape(B * P, -1)

    # Single pallas_call: embedding + 12 transformer layers + pooler/classifier head.
    hidden, logits = fused_vit(patches, params, cfg, B=B)

    # h.unsqueeze(0) for each, then torch.cat(dim=0) -> (num_layers+1, B, S, H):
    # already laid out contiguously by the kernel, so this is a free reshape.
    hidden_states = hidden.reshape(L + 1, B, S, H)
    return logits, hidden_states


# ----------------------------------------------------------------------------- main

if __name__ == "__main__":
    cfg = Config()
    key = jax.random.PRNGKey(0)
    k_param, k_img = jax.random.split(key)

    params = init_params(cfg, k_param)
    image = jax.random.normal(
        k_img, (2, cfg.channels, cfg.image_size, cfg.image_size), jnp.float32)  # NCHW

    fwd = jax.jit(functools.partial(vit_forward, cfg=cfg))
    logits, hidden_states = fwd(params, image)
    jax.block_until_ready((logits, hidden_states))

    seq = (cfg.image_size // cfg.patch) ** 2 + 1
    assert logits.shape == (2, cfg.num_classes)
    assert hidden_states.shape == (cfg.num_layers + 1, 2, seq, cfg.hidden)
    assert bool(jnp.all(jnp.isfinite(logits))) and bool(jnp.all(jnp.isfinite(hidden_states)))
    print("KERNEL_OK")
</pallas_src>

<mosaic_0001>
module attributes {stable_mosaic.version = 11 : i64} {
  func.func @_vit_kernel(%arg0: i32, %arg1: memref<32x48xf32, #tpu.memory_space<vmem>>, %arg2: memref<48x32xf32, #tpu.memory_space<vmem>>, %arg3: memref<1x32xf32, #tpu.memory_space<vmem>>, %arg4: memref<8x32xf32, #tpu.memory_space<vmem>>, %arg5: memref<17x32xf32, #tpu.memory_space<vmem>>, %arg6: memref<2x32xf32, #tpu.memory_space<vmem>>, %arg7: memref<1x32x96xf32, #tpu.memory_space<vmem>>, %arg8: memref<1x1x96xf32, #tpu.memory_space<vmem>>, %arg9: memref<1x32x32xf32, #tpu.memory_space<vmem>>, %arg10: memref<1x1x32xf32, #tpu.memory_space<vmem>>, %arg11: memref<1x2x32xf32, #tpu.memory_space<vmem>>, %arg12: memref<1x32x64xf32, #tpu.memory_space<vmem>>, %arg13: memref<1x1x64xf32, #tpu.memory_space<vmem>>, %arg14: memref<1x64x32xf32, #tpu.memory_space<vmem>>, %arg15: memref<1x1x32xf32, #tpu.memory_space<vmem>>, %arg16: memref<1x2x32xf32, #tpu.memory_space<vmem>>, %arg17: memref<32x32xf32, #tpu.memory_space<vmem>>, %arg18: memref<1x32xf32, #tpu.memory_space<vmem>>, %arg19: memref<32x10xf32, #tpu.memory_space<vmem>>, %arg20: memref<1x10xf32, #tpu.memory_space<vmem>>, %arg21: memref<13x34x32xf32, #tpu.memory_space<vmem>>, %arg22: memref<2x10xf32, #tpu.memory_space<vmem>>, %arg23: memref<34x32xf32, #tpu.memory_space<vmem>>) attributes {dimension_semantics = [#tpu.dimension_semantics<arbitrary>], iteration_bounds = array<i64: 12>, scalar_prefetch = 0 : i64, scratch_operands = 1 : i64, tpu.core_type = #tpu.core_type<tc>, window_params = [{pipeline_mode = #tpu.pipeline_mode<synchronous>, transform_indices = @transform_0, window_bounds = array<i64: 32, 48>}, {pipeline_mode = #tpu.pipeline_mode<synchronous>, transform_indices = @transform_1, window_bounds = array<i64: 48, 32>}, {pipeline_mode = #tpu.pipeline_mode<synchronous>, transform_indices = @transform_2, window_bounds = array<i64: 1, 32>}, {pipeline_mode = #tpu.pipeline_mode<synchronous>, transform_indices = @transform_3, window_bounds = array<i64: 8, 32>}, {pipeline_mode = #tpu.pipeline_mode<synchronous>, transform_indices = @transform_4, window_bounds = array<i64: 17, 32>}, {pipeline_mode = #tpu.pipeline_mode<synchronous>, transform_indices = @transform_5, window_bounds = array<i64: 2, 32>}, {transform_indices = @transform_6, window_bounds = array<i64: 1, 32, 96>}, {transform_indices = @transform_7, window_bounds = array<i64: 1, 1, 96>}, {transform_indices = @transform_8, window_bounds = array<i64: 1, 32, 32>}, {transform_indices = @transform_9, window_bounds = array<i64: 1, 1, 32>}, {transform_indices = @transform_10, window_bounds = array<i64: 1, 2, 32>}, {transform_indices = @transform_11, window_bounds = array<i64: 1, 32, 64>}, {transform_indices = @transform_12, window_bounds = array<i64: 1, 1, 64>}, {transform_indices = @transform_13, window_bounds = array<i64: 1, 64, 32>}, {transform_indices = @transform_14, window_bounds = array<i64: 1, 1, 32>}, {transform_indices = @transform_15, window_bounds = array<i64: 1, 2, 32>}, {pipeline_mode = #tpu.pipeline_mode<synchronous>, transform_indices = @transform_16, window_bounds = array<i64: 32, 32>}, {pipeline_mode = #tpu.pipeline_mode<synchronous>, transform_indices = @transform_17, window_bounds = array<i64: 1, 32>}, {pipeline_mode = #tpu.pipeline_mode<synchronous>, transform_indices = @transform_18, window_bounds = array<i64: 32, 10>}, {pipeline_mode = #tpu.pipeline_mode<synchronous>, transform_indices = @transform_19, window_bounds = array<i64: 1, 10>}, {pipeline_mode = #tpu.pipeline_mode<synchronous>, transform_indices = @transform_20, window_bounds = array<i64: 13, 34, 32>}, {pipeline_mode = #tpu.pipeline_mode<synchronous>, transform_indices = @transform_21, window_bounds = array<i64: 2, 10>}]} {
    %c0_i32 = arith.constant 0 : i32
    %0 = arith.cmpi eq, %arg0, %c0_i32 : i32
    %1 = arith.extui %0 : i1 to i32
    %c0_i32_0 = arith.constant 0 : i32
    %2 = arith.cmpi ne, %1, %c0_i32_0 : i32
    scf.if %2 {
      %c0_86 = arith.constant 0 : index
      %c0_87 = arith.constant 0 : index
      %207 = vector.load %arg1[%c0_86, %c0_87] : memref<32x48xf32, #tpu.memory_space<vmem>>, vector<32x48xf32>
      %c0_88 = arith.constant 0 : index
      %c0_89 = arith.constant 0 : index
      %208 = vector.load %arg2[%c0_88, %c0_89] : memref<48x32xf32, #tpu.memory_space<vmem>>, vector<48x32xf32>
      %cst_90 = arith.constant dense<0.000000e+00> : vector<32x32xf32>
      %209 = tpu.matmul %207, %208, %cst_90 {dimension_numbers = #tpu.dot_dimension_numbers<[1], [0], [0], [1], [0, 0, 1, 1], [], []>} : vector<32x48xf32>, vector<48x32xf32>, vector<32x32xf32> -> vector<32x32xf32>
      %c0_91 = arith.constant 0 : index
      %c0_92 = arith.constant 0 : index
      %210 = vector.load %arg3[%c0_91, %c0_92] : memref<1x32xf32, #tpu.memory_space<vmem>>, vector<1x32xf32>
      %211 = vector.broadcast %210 : vector<1x32xf32> to vector<32x32xf32>
      %212 = arith.addf %209, %211 : vector<32x32xf32>
      %c1 = arith.constant 1 : index
      %c0_93 = arith.constant 0 : index
      %213 = vector.load %arg4[%c1, %c0_93] : memref<8x32xf32, #tpu.memory_space<vmem>>, vector<1x32xf32>
      %c0_94 = arith.constant 0 : index
      %c0_95 = arith.constant 0 : index
      %214 = vector.load %arg5[%c0_94, %c0_95] : memref<17x32xf32, #tpu.memory_space<vmem>>, vector<1x32xf32>
      %215 = arith.addf %213, %214 : vector<1x32xf32>
      %c1_96 = arith.constant 1 : index
      %c0_97 = arith.constant 0 : index
      %216 = vector.load %arg5[%c1_96, %c0_97] : memref<17x32xf32, #tpu.memory_space<vmem>>, vector<16x32xf32>
      %217 = vector.extract_strided_slice %212 {offsets = [0, 0], sizes = [16, 32], strides = [1, 1]} : vector<32x32xf32> to vector<16x32xf32>
      %218 = arith.addf %217, %216 : vector<16x32xf32>
      %219 = vector.extract_strided_slice %212 {offsets = [16, 0], sizes = [16, 32], strides = [1, 1]} : vector<32x32xf32> to vector<16x32xf32>
      %220 = arith.addf %219, %216 : vector<16x32xf32>
      %221 = tpu.concatenate %215, %218, %215, %220 in 0 : vector<1x32xf32>, vector<16x32xf32>, vector<1x32xf32>, vector<16x32xf32> -> vector<34x32xf32>
      %c0_98 = arith.constant 0 : index
      %c0_99 = arith.constant 0 : index
      %222 = vector.load %arg6[%c0_98, %c0_99] : memref<2x32xf32, #tpu.memory_space<vmem>>, vector<1x32xf32>
      %c1_100 = arith.constant 1 : index
      %c0_101 = arith.constant 0 : index
      %223 = vector.load %arg6[%c1_100, %c0_101] : memref<2x32xf32, #tpu.memory_space<vmem>>, vector<1x32xf32>
      %cst_102 = arith.constant dense<0.000000e+00> : vector<34xf32>
      %224 = vector.multi_reduction <add>, %221, %cst_102 [1] : vector<34x32xf32> to vector<34xf32>
      %225 = vector.shape_cast %224 : vector<34xf32> to vector<34x1xf32>
      %cst_103 = arith.constant 3.200000e+01 : f32
      %226 = vector.broadcast %cst_103 : f32 to vector<34x1xf32>
      %227 = arith.divf %225, %226 : vector<34x1xf32>
      %228 = vector.broadcast %227 : vector<34x1xf32> to vector<34x32xf32>
      %229 = arith.subf %221, %228 : vector<34x32xf32>
      %230 = arith.mulf %229, %229 : vector<34x32xf32>
      %cst_104 = arith.constant dense<0.000000e+00> : vector<34xf32>
      %231 = vector.multi_reduction <add>, %230, %cst_104 [1] : vector<34x32xf32> to vector<34xf32>
      %232 = vector.shape_cast %231 : vector<34xf32> to vector<34x1xf32>
      %cst_105 = arith.constant 3.200000e+01 : f32
      %233 = vector.broadcast %cst_105 : f32 to vector<34x1xf32>
      %234 = arith.divf %232, %233 : vector<34x1xf32>
      %235 = vector.broadcast %227 : vector<34x1xf32> to vector<34x32xf32>
      %236 = arith.subf %221, %235 : vector<34x32xf32>
      %cst_106 = arith.constant 9.99999996E-13 : f32
      %237 = vector.broadcast %cst_106 : f32 to vector<34x1xf32>
      %238 = arith.addf %234, %237 : vector<34x1xf32>
      %239 = math.rsqrt %238 : vector<34x1xf32>
      %240 = vector.broadcast %239 : vector<34x1xf32> to vector<34x32xf32>
      %241 = arith.mulf %236, %240 : vector<34x32xf32>
      %242 = vector.broadcast %222 : vector<1x32xf32> to vector<34x32xf32>
      %243 = arith.mulf %241, %242 : vector<34x32xf32>
      %244 = vector.broadcast %223 : vector<1x32xf32> to vector<34x32xf32>
      %245 = arith.addf %243, %244 : vector<34x32xf32>
      %c0_107 = arith.constant 0 : index
      %c0_108 = arith.constant 0 : index
      %246 = vector.load %arg23[%c0_107, %c0_108] : memref<34x32xf32, #tpu.memory_space<vmem>>, vector<34x32xf32>
      tpu.vector_store %arg23[%c0_107, %c0_108], %245 {strides = array<i32>} : memref<34x32xf32, #tpu.memory_space<vmem>>, vector<34x32xf32>,
      %c0_109 = arith.constant 0 : index
      %c0_110 = arith.constant 0 : index
      %c0_111 = arith.constant 0 : index
      %247 = vector.load %arg21[%c0_109, %c0_110, %c0_111] : memref<13x34x32xf32, #tpu.memory_space<vmem>>, vector<1x34x32xf32>
      %248 = vector.shape_cast %247 : vector<1x34x32xf32> to vector<34x32xf32>
      %249 = vector.shape_cast %245 : vector<34x32xf32> to vector<1x34x32xf32>
      tpu.vector_store %arg21[%c0_109, %c0_110, %c0_111], %249 {strides = array<i32>} : memref<13x34x32xf32, #tpu.memory_space<vmem>>, vector<1x34x32xf32>,
    } else {
    }
    %c0 = arith.constant 0 : index
    %c0_1 = arith.constant 0 : index
    %3 = vector.load %arg23[%c0, %c0_1] : memref<34x32xf32, #tpu.memory_space<vmem>>, vector<34x32xf32>
    %c0_2 = arith.constant 0 : index
    %c0_3 = arith.constant 0 : index
    %c0_4 = arith.constant 0 : index
    %4 = vector.load %arg7[%c0_2, %c0_3, %c0_4] : memref<1x32x96xf32, #tpu.memory_space<vmem>>, vector<1x32x96xf32>
    %5 = vector.shape_cast %4 : vector<1x32x96xf32> to vector<32x96xf32>
    %cst = arith.constant dense<0.000000e+00> : vector<34x96xf32>
    %6 = tpu.matmul %3, %5, %cst {dimension_numbers = #tpu.dot_dimension_numbers<[1], [0], [0], [1], [0, 0, 1, 1], [], []>} : vector<34x32xf32>, vector<32x96xf32>, vector<34x96xf32> -> vector<34x96xf32>
    %c0_5 = arith.constant 0 : index
    %c0_6 = arith.constant 0 : index
    %c0_7 = arith.constant 0 : index
    %7 = vector.load %arg8[%c0_5, %c0_6, %c0_7] : memref<1x1x96xf32, #tpu.memory_space<vmem>>, vector<1x1x96xf32>
    %8 = vector.shape_cast %7 : vector<1x1x96xf32> to vector<1x96xf32>
    %9 = vector.broadcast %8 : vector<1x96xf32> to vector<34x96xf32>
    %10 = arith.addf %6, %9 : vector<34x96xf32>
    %11 = vector.extract_strided_slice %10 {offsets = [0, 0], sizes = [17, 16], strides = [1, 1]} : vector<34x96xf32> to vector<17x16xf32>
    %12 = vector.extract_strided_slice %10 {offsets = [0, 32], sizes = [17, 16], strides = [1, 1]} : vector<34x96xf32> to vector<17x16xf32>
    %13 = vector.extract_strided_slice %10 {offsets = [0, 64], sizes = [17, 16], strides = [1, 1]} : vector<34x96xf32> to vector<17x16xf32>
    %cst_8 = arith.constant dense<0.000000e+00> : vector<17x17xf32>
    %14 = tpu.matmul %11, %12, %cst_8 {dimension_numbers = #tpu.dot_dimension_numbers<[1], [1], [0], [0], [0, 0, 1, 0], [], []>} : vector<17x16xf32>, vector<17x16xf32>, vector<17x17xf32> -> vector<17x17xf32>
    %cst_9 = arith.constant 2.500000e-01 : f32
    %15 = vector.broadcast %cst_9 : f32 to vector<17x17xf32>
    %16 = arith.mulf %14, %15 : vector<17x17xf32>
    %cst_10 = arith.constant dense<0xFF800000> : vector<17xf32>
    %17 = vector.multi_reduction <maximumf>, %16, %cst_10 [1] : vector<17x17xf32> to vector<17xf32>
    %18 = vector.shape_cast %17 : vector<17xf32> to vector<17x1xf32>
    %19 = vector.broadcast %18 : vector<17x1xf32> to vector<17x17xf32>
    %20 = arith.subf %16, %19 : vector<17x17xf32>
    %21 = math.exp %20 : vector<17x17xf32>
    %cst_11 = arith.constant dense<0.000000e+00> : vector<17xf32>
    %22 = vector.multi_reduction <add>, %21, %cst_11 [1] : vector<17x17xf32> to vector<17xf32>
    %23 = vector.shape_cast %22 : vector<17xf32> to vector<17x1xf32>
    %24 = tpu.reciprocal %23 {approx = true} : vector<17x1xf32> -> vector<17x1xf32>
    %25 = vector.broadcast %24 : vector<17x1xf32> to vector<17x17xf32>
    %26 = arith.mulf %21, %25 : vector<17x17xf32>
    %cst_12 = arith.constant dense<0.000000e+00> : vector<17x16xf32>
    %27 = tpu.matmul %26, %13, %cst_12 {dimension_numbers = #tpu.dot_dimension_numbers<[1], [0], [0], [1], [0, 0, 1, 1], [], []>} : vector<17x17xf32>, vector<17x16xf32>, vector<17x16xf32> -> vector<17x16xf32>
    %28 = vector.extract_strided_slice %10 {offsets = [0, 16], sizes = [17, 16], strides = [1, 1]} : vector<34x96xf32> to vector<17x16xf32>
    %29 = vector.extract_strided_slice %10 {offsets = [0, 48], sizes = [17, 16], strides = [1, 1]} : vector<34x96xf32> to vector<17x16xf32>
    %30 = vector.extract_strided_slice %10 {offsets = [0, 80], sizes = [17, 16], strides = [1, 1]} : vector<34x96xf32> to vector<17x16xf32>
    %cst_13 = arith.constant dense<0.000000e+00> : vector<17x17xf32>
    %31 = tpu.matmul %28, %29, %cst_13 {dimension_numbers = #tpu.dot_dimension_numbers<[1], [1], [0], [0], [0, 0, 1, 0], [], []>} : vector<17x16xf32>, vector<17x16xf32>, vector<17x17xf32> -> vector<17x17xf32>
    %cst_14 = arith.constant 2.500000e-01 : f32
    %32 = vector.broadcast %cst_14 : f32 to vector<17x17xf32>
    %33 = arith.mulf %31, %32 : vector<17x17xf32>
    %cst_15 = arith.constant dense<0xFF800000> : vector<17xf32>
    %34 = vector.multi_reduction <maximumf>, %33, %cst_15 [1] : vector<17x17xf32> to vector<17xf32>
    %35 = vector.shape_cast %34 : vector<17xf32> to vector<17x1xf32>
    %36 = vector.broadcast %35 : vector<17x1xf32> to vector<17x17xf32>
    %37 = arith.subf %33, %36 : vector<17x17xf32>
    %38 = math.exp %37 : vector<17x17xf32>
    %cst_16 = arith.constant dense<0.000000e+00> : vector<17xf32>
    %39 = vector.multi_reduction <add>, %38, %cst_16 [1] : vector<17x17xf32> to vector<17xf32>
    %40 = vector.shape_cast %39 : vector<17xf32> to vector<17x1xf32>
    %41 = tpu.reciprocal %40 {approx = true} : vector<17x1xf32> -> vector<17x1xf32>
    %42 = vector.broadcast %41 : vector<17x1xf32> to vector<17x17xf32>
    %43 = arith.mulf %38, %42 : vector<17x17xf32>
    %cst_17 = arith.constant dense<0.000000e+00> : vector<17x16xf32>
    %44 = tpu.matmul %43, %30, %cst_17 {dimension_numbers = #tpu.dot_dimension_numbers<[1], [0], [0], [1], [0, 0, 1, 1], [], []>} : vector<17x17xf32>, vector<17x16xf32>, vector<17x16xf32> -> vector<17x16xf32>
    %45 = tpu.concatenate %27, %44 in 1 : vector<17x16xf32>, vector<17x16xf32> -> vector<17x32xf32>
    %46 = vector.extract_strided_slice %10 {offsets = [17, 0], sizes = [17, 16], strides = [1, 1]} : vector<34x96xf32> to vector<17x16xf32>
    %47 = vector.extract_strided_slice %10 {offsets = [17, 32], sizes = [17, 16], strides = [1, 1]} : vector<34x96xf32> to vector<17x16xf32>
    %48 = vector.extract_strided_slice %10 {offsets = [17, 64], sizes = [17, 16], strides = [1, 1]} : vector<34x96xf32> to vector<17x16xf32>
    %cst_18 = arith.constant dense<0.000000e+00> : vector<17x17xf32>
    %49 = tpu.matmul %46, %47, %cst_18 {dimension_numbers = #tpu.dot_dimension_numbers<[1], [1], [0], [0], [0, 0, 1, 0], [], []>} : vector<17x16xf32>, vector<17x16xf32>, vector<17x17xf32> -> vector<17x17xf32>
    %cst_19 = arith.constant 2.500000e-01 : f32
    %50 = vector.broadcast %cst_19 : f32 to vector<17x17xf32>
    %51 = arith.mulf %49, %50 : vector<17x17xf32>
    %cst_20 = arith.constant dense<0xFF800000> : vector<17xf32>
    %52 = vector.multi_reduction <maximumf>, %51, %cst_20 [1] : vector<17x17xf32> to vector<17xf32>
    %53 = vector.shape_cast %52 : vector<17xf32> to vector<17x1xf32>
    %54 = vector.broadcast %53 : vector<17x1xf32> to vector<17x17xf32>
    %55 = arith.subf %51, %54 : vector<17x17xf32>
    %56 = math.exp %55 : vector<17x17xf32>
    %cst_21 = arith.constant dense<0.000000e+00> : vector<17xf32>
    %57 = vector.multi_reduction <add>, %56, %cst_21 [1] : vector<17x17xf32> to vector<17xf32>
    %58 = vector.shape_cast %57 : vector<17xf32> to vector<17x1xf32>
    %59 = tpu.reciprocal %58 {approx = true} : vector<17x1xf32> -> vector<17x1xf32>
    %60 = vector.broadcast %59 : vector<17x1xf32> to vector<17x17xf32>
    %61 = arith.mulf %56, %60 : vector<17x17xf32>
    %cst_22 = arith.constant dense<0.000000e+00> : vector<17x16xf32>
    %62 = tpu.matmul %61, %48, %cst_22 {dimension_numbers = #tpu.dot_dimension_numbers<[1], [0], [0], [1], [0, 0, 1, 1], [], []>} : vector<17x17xf32>, vector<17x16xf32>, vector<17x16xf32> -> vector<17x16xf32>
    %63 = vector.extract_strided_slice %10 {offsets = [17, 16], sizes = [17, 16], strides = [1, 1]} : vector<34x96xf32> to vector<17x16xf32>
    %64 = vector.extract_strided_slice %10 {offsets = [17, 48], sizes = [17, 16], strides = [1, 1]} : vector<34x96xf32> to vector<17x16xf32>
    %65 = vector.extract_strided_slice %10 {offsets = [17, 80], sizes = [17, 16], strides = [1, 1]} : vector<34x96xf32> to vector<17x16xf32>
    %cst_23 = arith.constant dense<0.000000e+00> : vector<17x17xf32>
    %66 = tpu.matmul %63, %64, %cst_23 {dimension_numbers = #tpu.dot_dimension_numbers<[1], [1], [0], [0], [0, 0, 1, 0], [], []>} : vector<17x16xf32>, vector<17x16xf32>, vector<17x17xf32> -> vector<17x17xf32>
    %cst_24 = arith.constant 2.500000e-01 : f32
    %67 = vector.broadcast %cst_24 : f32 to vector<17x17xf32>
    %68 = arith.mulf %66, %67 : vector<17x17xf32>
    %cst_25 = arith.constant dense<0xFF800000> : vector<17xf32>
    %69 = vector.multi_reduction <maximumf>, %68, %cst_25 [1] : vector<17x17xf32> to vector<17xf32>
    %70 = vector.shape_cast %69 : vector<17xf32> to vector<17x1xf32>
    %71 = vector.broadcast %70 : vector<17x1xf32> to vector<17x17xf32>
    %72 = arith.subf %68, %71 : vector<17x17xf32>
    %73 = math.exp %72 : vector<17x17xf32>
    %cst_26 = arith.constant dense<0.000000e+00> : vector<17xf32>
    %74 = vector.multi_reduction <add>, %73, %cst_26 [1] : vector<17x17xf32> to vector<17xf32>
    %75 = vector.shape_cast %74 : vector<17xf32> to vector<17x1xf32>
    %76 = tpu.reciprocal %75 {approx = true} : vector<17x1xf32> -> vector<17x1xf32>
    %77 = vector.broadcast %76 : vector<17x1xf32> to vector<17x17xf32>
    %78 = arith.mulf %73, %77 : vector<17x17xf32>
    %cst_27 = arith.constant dense<0.000000e+00> : vector<17x16xf32>
    %79 = tpu.matmul %78, %65, %cst_27 {dimension_numbers = #tpu.dot_dimension_numbers<[1], [0], [0], [1], [0, 0, 1, 1], [], []>} : vector<17x17xf32>, vector<17x16xf32>, vector<17x16xf32> -> vector<17x16xf32>
    %80 = tpu.concatenate %62, %79 in 1 : vector<17x16xf32>, vector<17x16xf32> -> vector<17x32xf32>
    %81 = tpu.concatenate %45, %80 in 0 : vector<17x32xf32>, vector<17x32xf32> -> vector<34x32xf32>
    %c0_28 = arith.constant 0 : index
    %c0_29 = arith.constant 0 : index
    %c0_30 = arith.constant 0 : index
    %82 = vector.load %arg9[%c0_28, %c0_29, %c0_30] : memref<1x32x32xf32, #tpu.memory_space<vmem>>, vector<1x32x32xf32>
    %83 = vector.shape_cast %82 : vector<1x32x32xf32> to vector<32x32xf32>
    %cst_31 = arith.constant dense<0.000000e+00> : vector<34x32xf32>
    %84 = tpu.matmul %81, %83, %cst_31 {dimension_numbers = #tpu.dot_dimension_numbers<[1], [0], [0], [1], [0, 0, 1, 1], [], []>} : vector<34x32xf32>, vector<32x32xf32>, vector<34x32xf32> -> vector<34x32xf32>
    %c0_32 = arith.constant 0 : index
    %c0_33 = arith.constant 0 : index
    %c0_34 = arith.constant 0 : index
    %85 = vector.load %arg10[%c0_32, %c0_33, %c0_34] : memref<1x1x32xf32, #tpu.memory_space<vmem>>, vector<1x1x32xf32>
    %86 = vector.shape_cast %85 : vector<1x1x32xf32> to vector<1x32xf32>
    %87 = vector.broadcast %86 : vector<1x32xf32> to vector<34x32xf32>
    %88 = arith.addf %84, %87 : vector<34x32xf32>
    %c0_35 = arith.constant 0 : index
    %c0_36 = arith.constant 0 : index
    %c0_37 = arith.constant 0 : index
    %89 = vector.load %arg11[%c0_35, %c0_36, %c0_37] : memref<1x2x32xf32, #tpu.memory_space<vmem>>, vector<1x2x32xf32>
    %90 = vector.shape_cast %89 : vector<1x2x32xf32> to vector<2x32xf32>
    %91 = arith.addf %3, %88 : vector<34x32xf32>
    %92 = vector.extract_strided_slice %90 {offsets = [0, 0], sizes = [1, 32], strides = [1, 1]} : vector<2x32xf32> to vector<1x32xf32>
    %93 = vector.extract_strided_slice %90 {offsets = [1, 0], sizes = [1, 32], strides = [1, 1]} : vector<2x32xf32> to vector<1x32xf32>
    %cst_38 = arith.constant dense<0.000000e+00> : vector<34xf32>
    %94 = vector.multi_reduction <add>, %91, %cst_38 [1] : vector<34x32xf32> to vector<34xf32>
    %95 = vector.shape_cast %94 : vector<34xf32> to vector<34x1xf32>
    %cst_39 = arith.constant 3.200000e+01 : f32
    %96 = vector.broadcast %cst_39 : f32 to vector<34x1xf32>
    %97 = arith.divf %95, %96 : vector<34x1xf32>
    %98 = vector.broadcast %97 : vector<34x1xf32> to vector<34x32xf32>
    %99 = arith.subf %91, %98 : vector<34x32xf32>
    %100 = arith.mulf %99, %99 : vector<34x32xf32>
    %cst_40 = arith.constant dense<0.000000e+00> : vector<34xf32>
    %101 = vector.multi_reduction <add>, %100, %cst_40 [1] : vector<34x32xf32> to vector<34xf32>
    %102 = vector.shape_cast %101 : vector<34xf32> to vector<34x1xf32>
    %cst_41 = arith.constant 3.200000e+01 : f32
    %103 = vector.broadcast %cst_41 : f32 to vector<34x1xf32>
    %104 = arith.divf %102, %103 : vector<34x1xf32>
    %105 = vector.broadcast %97 : vector<34x1xf32> to vector<34x32xf32>
    %106 = arith.subf %91, %105 : vector<34x32xf32>
    %cst_42 = arith.constant 9.99999996E-13 : f32
    %107 = vector.broadcast %cst_42 : f32 to vector<34x1xf32>
    %108 = arith.addf %104, %107 : vector<34x1xf32>
    %109 = math.rsqrt %108 : vector<34x1xf32>
    %110 = vector.broadcast %109 : vector<34x1xf32> to vector<34x32xf32>
    %111 = arith.mulf %106, %110 : vector<34x32xf32>
    %112 = vector.broadcast %92 : vector<1x32xf32> to vector<34x32xf32>
    %113 = arith.mulf %111, %112 : vector<34x32xf32>
    %114 = vector.broadcast %93 : vector<1x32xf32> to vector<34x32xf32>
    %115 = arith.addf %113, %114 : vector<34x32xf32>
    %c0_43 = arith.constant 0 : index
    %c0_44 = arith.constant 0 : index
    %c0_45 = arith.constant 0 : index
    %116 = vector.load %arg12[%c0_43, %c0_44, %c0_45] : memref<1x32x64xf32, #tpu.memory_space<vmem>>, vector<1x32x64xf32>
    %117 = vector.shape_cast %116 : vector<1x32x64xf32> to vector<32x64xf32>
    %cst_46 = arith.constant dense<0.000000e+00> : vector<34x64xf32>
    %118 = tpu.matmul %115, %117, %cst_46 {dimension_numbers = #tpu.dot_dimension_numbers<[1], [0], [0], [1], [0, 0, 1, 1], [], []>} : vector<34x32xf32>, vector<32x64xf32>, vector<34x64xf32> -> vector<34x64xf32>
    %c0_47 = arith.constant 0 : index
    %c0_48 = arith.constant 0 : index
    %c0_49 = arith.constant 0 : index
    %119 = vector.load %arg13[%c0_47, %c0_48, %c0_49] : memref<1x1x64xf32, #tpu.memory_space<vmem>>, vector<1x1x64xf32>
    %120 = vector.shape_cast %119 : vector<1x1x64xf32> to vector<1x64xf32>
    %121 = vector.broadcast %120 : vector<1x64xf32> to vector<34x64xf32>
    %122 = arith.addf %118, %121 : vector<34x64xf32>
    %cst_50 = arith.constant 5.000000e-01 : f32
    %123 = vector.broadcast %cst_50 : f32 to vector<34x64xf32>
    %124 = arith.mulf %123, %122 : vector<34x64xf32>
    %cst_51 = arith.constant 0.707106769 : f32
    %125 = vector.broadcast %cst_51 : f32 to vector<34x64xf32>
    %126 = arith.mulf %122, %125 : vector<34x64xf32>
    %cst_52 = arith.constant 0.000000e+00 : f32
    %127 = vector.broadcast %cst_52 : f32 to vector<34x64xf32>
    %128 = arith.cmpf oge, %126, %127 : vector<34x64xf32>
    %cst_53 = arith.constant 1.000000e+00 : f32
    %cst_54 = arith.constant -1.000000e+00 : f32
    %129 = vector.broadcast %cst_53 : f32 to vector<34x64xf32>
    %130 = vector.broadcast %cst_54 : f32 to vector<34x64xf32>
    %131 = arith.select %128, %129, %130 : vector<34x64xi1>, vector<34x64xf32>
    %132 = math.absf %126 : vector<34x64xf32>
    %cst_55 = arith.constant 0.327591091 : f32
    %133 = vector.broadcast %cst_55 : f32 to vector<34x64xf32>
    %134 = arith.mulf %133, %132 : vector<34x64xf32>
    %cst_56 = arith.constant 1.000000e+00 : f32
    %135 = vector.broadcast %cst_56 : f32 to vector<34x64xf32>
    %136 = arith.addf %135, %134 : vector<34x64xf32>
    %cst_57 = arith.constant 1.000000e+00 : f32
    %137 = vector.broadcast %cst_57 : f32 to vector<34x64xf32>
    %138 = arith.divf %137, %136 : vector<34x64xf32>
    %cst_58 = arith.constant 1.06140542 : f32
    %139 = vector.broadcast %cst_58 : f32 to vector<34x64xf32>
    %140 = arith.mulf %139, %138 : vector<34x64xf32>
    %cst_59 = arith.constant -1.45315206 : f32
    %141 = vector.broadcast %cst_59 : f32 to vector<34x64xf32>
    %142 = arith.addf %140, %141 : vector<34x64xf32>
    %143 = arith.mulf %142, %138 : vector<34x64xf32>
    %cst_60 = arith.constant 1.42141378 : f32
    %144 = vector.broadcast %cst_60 : f32 to vector<34x64xf32>
    %145 = arith.addf %143, %144 : vector<34x64xf32>
    %146 = arith.mulf %145, %138 : vector<34x64xf32>
    %cst_61 = arith.constant -0.284496725 : f32
    %147 = vector.broadcast %cst_61 : f32 to vector<34x64xf32>
    %148 = arith.addf %146, %147 : vector<34x64xf32>
    %149 = arith.mulf %148, %138 : vector<34x64xf32>
    %cst_62 = arith.constant 0.254829586 : f32
    %150 = vector.broadcast %cst_62 : f32 to vector<34x64xf32>
    %151 = arith.addf %149, %150 : vector<34x64xf32>
    %152 = arith.mulf %151, %138 : vector<34x64xf32>
    %cst_63 = arith.constant 0.000000e+00 : f32
    %153 = vector.broadcast %cst_63 : f32 to vector<34x64xf32>
    %154 = arith.subf %153, %132 : vector<34x64xf32>
    %155 = arith.mulf %154, %132 : vector<34x64xf32>
    %156 = math.exp %155 : vector<34x64xf32>
    %157 = arith.mulf %152, %156 : vector<34x64xf32>
    %cst_64 = arith.constant 1.000000e+00 : f32
    %158 = vector.broadcast %cst_64 : f32 to vector<34x64xf32>
    %159 = arith.subf %158, %157 : vector<34x64xf32>
    %160 = arith.mulf %131, %159 : vector<34x64xf32>
    %cst_65 = arith.constant 1.000000e+00 : f32
    %161 = vector.broadcast %cst_65 : f32 to vector<34x64xf32>
    %162 = arith.addf %161, %160 : vector<34x64xf32>
    %163 = arith.mulf %124, %162 : vector<34x64xf32>
    %c0_66 = arith.constant 0 : index
    %c0_67 = arith.constant 0 : index
    %c0_68 = arith.constant 0 : index
    %164 = vector.load %arg14[%c0_66, %c0_67, %c0_68] : memref<1x64x32xf32, #tpu.memory_space<vmem>>, vector<1x64x32xf32>
    %165 = vector.shape_cast %164 : vector<1x64x32xf32> to vector<64x32xf32>
    %cst_69 = arith.constant dense<0.000000e+00> : vector<34x32xf32>
    %166 = tpu.matmul %163, %165, %cst_69 {dimension_numbers = #tpu.dot_dimension_numbers<[1], [0], [0], [1], [0, 0, 1, 1], [], []>} : vector<34x64xf32>, vector<64x32xf32>, vector<34x32xf32> -> vector<34x32xf32>
    %c0_70 = arith.constant 0 : index
    %c0_71 = arith.constant 0 : index
    %c0_72 = arith.constant 0 : index
    %167 = vector.load %arg15[%c0_70, %c0_71, %c0_72] : memref<1x1x32xf32, #tpu.memory_space<vmem>>, vector<1x1x32xf32>
    %168 = vector.shape_cast %167 : vector<1x1x32xf32> to vector<1x32xf32>
    %169 = vector.broadcast %168 : vector<1x32xf32> to vector<34x32xf32>
    %170 = arith.addf %166, %169 : vector<34x32xf32>
    %c0_73 = arith.constant 0 : index
    %c0_74 = arith.constant 0 : index
    %c0_75 = arith.constant 0 : index
    %171 = vector.load %arg16[%c0_73, %c0_74, %c0_75] : memref<1x2x32xf32, #tpu.memory_space<vmem>>, vector<1x2x32xf32>
    %172 = vector.shape_cast %171 : vector<1x2x32xf32> to vector<2x32xf32>
    %173 = arith.addf %115, %170 : vector<34x32xf32>
    %174 = vector.extract_strided_slice %172 {offsets = [0, 0], sizes = [1, 32], strides = [1, 1]} : vector<2x32xf32> to vector<1x32xf32>
    %175 = vector.extract_strided_slice %172 {offsets = [1, 0], sizes = [1, 32], strides = [1, 1]} : vector<2x32xf32> to vector<1x32xf32>
    %cst_76 = arith.constant dense<0.000000e+00> : vector<34xf32>
    %176 = vector.multi_reduction <add>, %173, %cst_76 [1] : vector<34x32xf32> to vector<34xf32>
    %177 = vector.shape_cast %176 : vector<34xf32> to vector<34x1xf32>
    %cst_77 = arith.constant 3.200000e+01 : f32
    %178 = vector.broadcast %cst_77 : f32 to vector<34x1xf32>
    %179 = arith.divf %177, %178 : vector<34x1xf32>
    %180 = vector.broadcast %179 : vector<34x1xf32> to vector<34x32xf32>
    %181 = arith.subf %173, %180 : vector<34x32xf32>
    %182 = arith.mulf %181, %181 : vector<34x32xf32>
    %cst_78 = arith.constant dense<0.000000e+00> : vector<34xf32>
    %183 = vector.multi_reduction <add>, %182, %cst_78 [1] : vector<34x32xf32> to vector<34xf32>
    %184 = vector.shape_cast %183 : vector<34xf32> to vector<34x1xf32>
    %cst_79 = arith.constant 3.200000e+01 : f32
    %185 = vector.broadcast %cst_79 : f32 to vector<34x1xf32>
    %186 = arith.divf %184, %185 : vector<34x1xf32>
    %187 = vector.broadcast %179 : vector<34x1xf32> to vector<34x32xf32>
    %188 = arith.subf %173, %187 : vector<34x32xf32>
    %cst_80 = arith.constant 9.99999996E-13 : f32
    %189 = vector.broadcast %cst_80 : f32 to vector<34x1xf32>
    %190 = arith.addf %186, %189 : vector<34x1xf32>
    %191 = math.rsqrt %190 : vector<34x1xf32>
    %192 = vector.broadcast %191 : vector<34x1xf32> to vector<34x32xf32>
    %193 = arith.mulf %188, %192 : vector<34x32xf32>
    %194 = vector.broadcast %174 : vector<1x32xf32> to vector<34x32xf32>
    %195 = arith.mulf %193, %194 : vector<34x32xf32>
    %196 = vector.broadcast %175 : vector<1x32xf32> to vector<34x32xf32>
    %197 = arith.addf %195, %196 : vector<34x32xf32>
    %c0_81 = arith.constant 0 : index
    %c0_82 = arith.constant 0 : index
    %198 = vector.load %arg23[%c0_81, %c0_82] : memref<34x32xf32, #tpu.memory_space<vmem>>, vector<34x32xf32>
    tpu.vector_store %arg23[%c0_81, %c0_82], %197 {strides = array<i32>} : memref<34x32xf32, #tpu.memory_space<vmem>>, vector<34x32xf32>,
    %c1_i32 = arith.constant 1 : i32
    %199 = arith.addi %arg0, %c1_i32 : i32
    %200 = arith.index_cast %199 : i32 to index
    %c0_83 = arith.constant 0 : index
    %c0_84 = arith.constant 0 : index
    %201 = vector.load %arg21[%200, %c0_83, %c0_84] : memref<13x34x32xf32, #tpu.memory_space<vmem>>, vector<1x34x32xf32>
    %202 = vector.shape_cast %201 : vector<1x34x32xf32> to vector<34x32xf32>
    %203 = vector.shape_cast %197 : vector<34x32xf32> to vector<1x34x32xf32>
    tpu.vector_store %arg21[%200, %c0_83, %c0_84], %203 {strides = array<i32>} : memref<13x34x32xf32, #tpu.memory_space<vmem>>, vector<1x34x32xf32>,
    %c11_i32 = arith.constant 11 : i32
    %204 = arith.cmpi eq, %arg0, %c11_i32 : i32
    %205 = arith.extui %204 : i1 to i32
    %c0_i32_85 = arith.constant 0 : i32
    %206 = arith.cmpi ne, %205, %c0_i32_85 : i32
    scf.if %206 {
      %207 = vector.extract_strided_slice %197 {offsets = [0, 0], sizes = [1, 32], strides = [1, 1]} : vector<34x32xf32> to vector<1x32xf32>
      %208 = vector.extract_strided_slice %197 {offsets = [17, 0], sizes = [1, 32], strides = [1, 1]} : vector<34x32xf32> to vector<1x32xf32>
      %209 = tpu.concatenate %207, %208 in 0 : vector<1x32xf32>, vector<1x32xf32> -> vector<2x32xf32>
      %c0_86 = arith.constant 0 : index
      %c0_87 = arith.constant 0 : index
      %210 = vector.load %arg17[%c0_86, %c0_87] : memref<32x32xf32, #tpu.memory_space<vmem>>, vector<32x32xf32>
      %cst_88 = arith.constant dense<0.000000e+00> : vector<2x32xf32>
      %211 = tpu.matmul %209, %210, %cst_88 {dimension_numbers = #tpu.dot_dimension_numbers<[1], [0], [0], [1], [0, 0, 1, 1], [], []>} : vector<2x32xf32>, vector<32x32xf32>, vector<2x32xf32> -> vector<2x32xf32>
      %c0_89 = arith.constant 0 : index
      %c0_90 = arith.constant 0 : index
      %212 = vector.load %arg18[%c0_89, %c0_90] : memref<1x32xf32, #tpu.memory_space<vmem>>, vector<1x32xf32>
      %213 = vector.broadcast %212 : vector<1x32xf32> to vector<2x32xf32>
      %214 = arith.addf %211, %213 : vector<2x32xf32>
      %215 = math.tanh %214 : vector<2x32xf32>
      %c0_91 = arith.constant 0 : index
      %c0_92 = arith.constant 0 : index
      %216 = vector.load %arg19[%c0_91, %c0_92] : memref<32x10xf32, #tpu.memory_space<vmem>>, vector<32x10xf32>
      %cst_93 = arith.constant dense<0.000000e+00> : vector<2x10xf32>
      %217 = tpu.matmul %215, %216, %cst_93 {dimension_numbers = #tpu.dot_dimension_numbers<[1], [0], [0], [1], [0, 0, 1, 1], [], []>} : vector<2x32xf32>, vector<32x10xf32>, vector<2x10xf32> -> vector<2x10xf32>
      %c0_94 = arith.constant 0 : index
      %c0_95 = arith.constant 0 : index
      %218 = vector.load %arg20[%c0_94, %c0_95] : memref<1x10xf32, #tpu.memory_space<vmem>>, vector<1x10xf32>
      %219 = vector.broadcast %218 : vector<1x10xf32> to vector<2x10xf32>
      %220 = arith.addf %217, %219 : vector<2x10xf32>
      %c0_96 = arith.constant 0 : index
      %c0_97 = arith.constant 0 : index
      %221 = vector.load %arg22[%c0_96, %c0_97] : memref<2x10xf32, #tpu.memory_space<vmem>>, vector<2x10xf32>
      tpu.vector_store %arg22[%c0_96, %c0_97], %220 {strides = array<i32>} : memref<2x10xf32, #tpu.memory_space<vmem>>, vector<2x10xf32>,
    } else {
    }
    return
  }
  func.func @transform_0(%arg0: i32) -> (i32, i32) {
    %c0_i32 = arith.constant 0 : i32
    %c0_i32_0 = arith.constant 0 : i32
    %c0_i32_1 = arith.constant 0 : i32
    return %c0_i32, %c0_i32_0 : i32, i32
  }
  func.func @transform_1(%arg0: i32) -> (i32, i32) {
    %c0_i32 = arith.constant 0 : i32
    %c0_i32_0 = arith.constant 0 : i32
    %c0_i32_1 = arith.constant 0 : i32
    return %c0_i32, %c0_i32_0 : i32, i32
  }
  func.func @transform_2(%arg0: i32) -> (i32, i32) {
    %c0_i32 = arith.constant 0 : i32
    %c0_i32_0 = arith.constant 0 : i32
    %c0_i32_1 = arith.constant 0 : i32
    return %c0_i32, %c0_i32_0 : i32, i32
  }
  func.func @transform_3(%arg0: i32) -> (i32, i32) {
    %c0_i32 = arith.constant 0 : i32
    %c0_i32_0 = arith.constant 0 : i32
    %c0_i32_1 = arith.constant 0 : i32
    return %c0_i32, %c0_i32_0 : i32, i32
  }
  func.func @transform_4(%arg0: i32) -> (i32, i32) {
    %c0_i32 = arith.constant 0 : i32
    %c0_i32_0 = arith.constant 0 : i32
    %c0_i32_1 = arith.constant 0 : i32
    return %c0_i32, %c0_i32_0 : i32, i32
  }
  func.func @transform_5(%arg0: i32) -> (i32, i32) {
    %c0_i32 = arith.constant 0 : i32
    %c0_i32_0 = arith.constant 0 : i32
    %c0_i32_1 = arith.constant 0 : i32
    return %c0_i32, %c0_i32_0 : i32, i32
  }
  func.func @transform_6(%arg0: i32) -> (i32, i32, i32) {
    %c0_i32 = arith.constant 0 : i32
    %c0_i32_0 = arith.constant 0 : i32
    %c0_i32_1 = arith.constant 0 : i32
    return %arg0, %c0_i32, %c0_i32_0 : i32, i32, i32
  }
  func.func @transform_7(%arg0: i32) -> (i32, i32, i32) {
    %c0_i32 = arith.constant 0 : i32
    %c0_i32_0 = arith.constant 0 : i32
    %c0_i32_1 = arith.constant 0 : i32
    return %arg0, %c0_i32, %c0_i32_0 : i32, i32, i32
  }
  func.func @transform_8(%arg0: i32) -> (i32, i32, i32) {
    %c0_i32 = arith.constant 0 : i32
    %c0_i32_0 = arith.constant 0 : i32
    %c0_i32_1 = arith.constant 0 : i32
    return %arg0, %c0_i32, %c0_i32_0 : i32, i32, i32
  }
  func.func @transform_9(%arg0: i32) -> (i32, i32, i32) {
    %c0_i32 = arith.constant 0 : i32
    %c0_i32_0 = arith.constant 0 : i32
    %c0_i32_1 = arith.constant 0 : i32
    return %arg0, %c0_i32, %c0_i32_0 : i32, i32, i32
  }
  func.func @transform_10(%arg0: i32) -> (i32, i32, i32) {
    %c0_i32 = arith.constant 0 : i32
    %c0_i32_0 = arith.constant 0 : i32
    %c0_i32_1 = arith.constant 0 : i32
    return %arg0, %c0_i32, %c0_i32_0 : i32, i32, i32
  }
  func.func @transform_11(%arg0: i32) -> (i32, i32, i32) {
    %c0_i32 = arith.constant 0 : i32
    %c0_i32_0 = arith.constant 0 : i32
    %c0_i32_1 = arith.constant 0 : i32
    return %arg0, %c0_i32, %c0_i32_0 : i32, i32, i32
  }
  func.func @transform_12(%arg0: i32) -> (i32, i32, i32) {
    %c0_i32 = arith.constant 0 : i32
    %c0_i32_0 = arith.constant 0 : i32
    %c0_i32_1 = arith.constant 0 : i32
    return %arg0, %c0_i32, %c0_i32_0 : i32, i32, i32
  }
  func.func @transform_13(%arg0: i32) -> (i32, i32, i32) {
    %c0_i32 = arith.constant 0 : i32
    %c0_i32_0 = arith.constant 0 : i32
    %c0_i32_1 = arith.constant 0 : i32
    return %arg0, %c0_i32, %c0_i32_0 : i32, i32, i32
  }
  func.func @transform_14(%arg0: i32) -> (i32, i32, i32) {
    %c0_i32 = arith.constant 0 : i32
    %c0_i32_0 = arith.constant 0 : i32
    %c0_i32_1 = arith.constant 0 : i32
    return %arg0, %c0_i32, %c0_i32_0 : i32, i32, i32
  }
  func.func @transform_15(%arg0: i32) -> (i32, i32, i32) {
    %c0_i32 = arith.constant 0 : i32
    %c0_i32_0 = arith.constant 0 : i32
    %c0_i32_1 = arith.constant 0 : i32
    return %arg0, %c0_i32, %c0_i32_0 : i32, i32, i32
  }
  func.func @transform_16(%arg0: i32) -> (i32, i32) {
    %c0_i32 = arith.constant 0 : i32
    %c0_i32_0 = arith.constant 0 : i32
    %c0_i32_1 = arith.constant 0 : i32
    return %c0_i32, %c0_i32_0 : i32, i32
  }
  func.func @transform_17(%arg0: i32) -> (i32, i32) {
    %c0_i32 = arith.constant 0 : i32
    %c0_i32_0 = arith.constant 0 : i32
    %c0_i32_1 = arith.constant 0 : i32
    return %c0_i32, %c0_i32_0 : i32, i32
  }
  func.func @transform_18(%arg0: i32) -> (i32, i32) {
    %c0_i32 = arith.constant 0 : i32
    %c0_i32_0 = arith.constant 0 : i32
    %c0_i32_1 = arith.constant 0 : i32
    return %c0_i32, %c0_i32_0 : i32, i32
  }
  func.func @transform_19(%arg0: i32) -> (i32, i32) {
    %c0_i32 = arith.constant 0 : i32
    %c0_i32_0 = arith.constant 0 : i32
    %c0_i32_1 = arith.constant 0 : i32
    return %c0_i32, %c0_i32_0 : i32, i32
  }
  func.func @transform_20(%arg0: i32) -> (i32, i32, i32) {
    %c0_i32 = arith.constant 0 : i32
    %c0_i32_0 = arith.constant 0 : i32
    %c0_i32_1 = arith.constant 0 : i32
    %c0_i32_2 = arith.constant 0 : i32
    return %c0_i32, %c0_i32_0, %c0_i32_1 : i32, i32, i32
  }
  func.func @transform_21(%arg0: i32) -> (i32, i32) {
    %c0_i32 = arith.constant 0 : i32
    %c0_i32_0 = arith.constant 0 : i32
    %c0_i32_1 = arith.constant 0 : i32
    return %c0_i32, %c0_i32_0 : i32, i32
  }
}

</mosaic_0001>

<llo_original>
// kernel: vit_forward.1
$region0: #{vit_forward.1}
  #allocation0 [shape = 'u32[]', space=smem, size = 0x4, offset = 0x4, fixed_abs, tag = 'smem constant byte address 0x4 - core index']
  #allocation1 [shape = 'u32[144,128]{1,0:T(1,128)}', space=vmem, size = 0x12000, scoped, tag = 'internal scratch']
  #allocation2 [shape = 'f32[34,32]{1,0:T(8,128)}', space=vmem, size = 0x5000, scoped, tag = 'scratch operand']
  %s0 = inlined_call_operand.vmem [shape: f32[32,48], index: 0, kind: input, shape index: {}]
  %s1 = inlined_call_operand.vmem [shape: f32[48,32], index: 1, kind: input, shape index: {}]
  %s2 = inlined_call_operand.vmem [shape: f32[1,32], index: 2, kind: input, shape index: {}]
  %s3 = inlined_call_operand.vmem [shape: f32[8,32], index: 3, kind: input, shape index: {}]
  %s4 = inlined_call_operand.vmem [shape: f32[17,32], index: 4, kind: input, shape index: {}]
  %s5 = inlined_call_operand.vmem [shape: f32[2,32], index: 5, kind: input, shape index: {}]
  %s6 = inlined_call_operand.vmem [shape: f32[12,32,96], index: 6, kind: input, shape index: {}]
  %s7 = inlined_call_operand.vmem [shape: f32[12,1,96], index: 7, kind: input, shape index: {}]
  %s8 = inlined_call_operand.vmem [shape: f32[12,32,32], index: 8, kind: input, shape index: {}]
  %s9 = inlined_call_operand.vmem [shape: f32[12,1,32], index: 9, kind: input, shape index: {}]
  %s10 = inlined_call_operand.vmem [shape: f32[12,2,32], index: 10, kind: input, shape index: {}]
  %s11 = inlined_call_operand.vmem [shape: f32[12,32,64], index: 11, kind: input, shape index: {}]
  %s12 = inlined_call_operand.vmem [shape: f32[12,1,64], index: 12, kind: input, shape index: {}]
  %s13 = inlined_call_operand.vmem [shape: f32[12,64,32], index: 13, kind: input, shape index: {}]
  %s14 = inlined_call_operand.vmem [shape: f32[12,1,32], index: 14, kind: input, shape index: {}]
  %s15 = inlined_call_operand.vmem [shape: f32[12,2,32], index: 15, kind: input, shape index: {}]
  %s16 = inlined_call_operand.vmem [shape: f32[32,32], index: 16, kind: input, shape index: {}]
  %s17 = inlined_call_operand.vmem [shape: f32[1,32], index: 17, kind: input, shape index: {}]
  %s18 = inlined_call_operand.vmem [shape: f32[32,10], index: 18, kind: input, shape index: {}]
  %s19 = inlined_call_operand.vmem [shape: f32[1,10], index: 19, kind: input, shape index: {}]
  %s20 = inlined_call_operand.vmem [shape: f32[13,34,32], index: 20, kind: output, shape index: {0}]
  %s21 = inlined_call_operand.hbm [shape: f32[2,10], index: 21, kind: output, shape index: {1}]
  %22 = xla_tuple %s20, %s21
  %s23 = sld [smem:[#allocation0]]
  $region129: #{vit_forward.1} parent=0
    _
  %s25 = ssub.s32 1, %s23
  %s26 = scalar_select 0, %s25, %s23
  $region1: #{vit_forward.1} parent=0
    #allocation3 [shape = 'u8[1024]{0}', space=vmem, size = 0x400, scoped, tag = 'output window, operand 1, single buffered']
    #allocation4 [shape = 's32[2]{0}', space=sflag, size = 0x8, scoped, tag = 'scoped memory for vit_forward.1']
    %27 = vsyncpa [#allocation4], 0
    loop: start=0, step=1, limit=14
    $region2: #{vit_forward.1} parent=1 // loop_pre_header
      _
    $region3: #{vit_forward.1} parent=1 // loop_header
      %s29 = sphi 0, %s33
      %p30 = scmp.ge.s32.totalorder %s29, 14
      %s37 = sphi 0, %s37
      %s39 = sphi 0, %s37
      %s40 = sphi 0, %s39
      %s54 = sphi 0, %s40
      %s58 = sphi 0, %s58
      %s60 = sphi 0, %s58
      %s61 = sphi 0, %s60
      %s75 = sphi 0, %s61
      %s79 = sphi 0, %s79
      %s81 = sphi 0, %s79
      %s82 = sphi 0, %s81
      %s96 = sphi 0, %s82
      %s100 = sphi 0, %s100
      %s102 = sphi 0, %s100
      %s103 = sphi 0, %s102
      %s117 = sphi 0, %s103
      %s121 = sphi 0, %s121
      %s123 = sphi 0, %s121
      %s124 = sphi 0, %s123
      %s138 = sphi 0, %s124
      %s142 = sphi 0, %s142
      %s144 = sphi 0, %s142
      %s145 = sphi 0, %s144
      %s159 = sphi 0, %s145
      %s165 = sphi 0, %s167
      %s168 = sphi 0, %s165
      %s169 = sphi 0, %s168
      %s185 = sphi 0, %s169
      %s191 = sphi 0, %s193
      %s194 = sphi 0, %s191
      %s195 = sphi 0, %s194
      %s211 = sphi 0, %s195
      %s217 = sphi 0, %s219
      %s220 = sphi 0, %s217
      %s221 = sphi 0, %s220
      %s237 = sphi 0, %s221
      %s243 = sphi 0, %s245
      %s246 = sphi 0, %s243
      %s247 = sphi 0, %s246
      %s263 = sphi 0, %s247
      %s269 = sphi 0, %s271
      %s272 = sphi 0, %s269
      %s273 = sphi 0, %s272
      %s289 = sphi 0, %s273
      %s295 = sphi 0, %s297
      %s298 = sphi 0, %s295
      %s299 = sphi 0, %s298
      %s315 = sphi 0, %s299
      %s321 = sphi 0, %s323
      %s324 = sphi 0, %s321
      %s325 = sphi 0, %s324
      %s341 = sphi 0, %s325
      %s347 = sphi 0, %s349
      %s350 = sphi 0, %s347
      %s351 = sphi 0, %s350
      %s367 = sphi 0, %s351
      %s373 = sphi 0, %s375
      %s376 = sphi 0, %s373
      %s377 = sphi 0, %s376
      %s393 = sphi 0, %s377
      %s399 = sphi 0, %s401
      %s402 = sphi 0, %s399
      %s403 = sphi 0, %s402
      %s419 = sphi 0, %s403
      %s423 = sphi 0, %s423
      %s425 = sphi 0, %s423
      %s426 = sphi 0, %s425
      %s440 = sphi 0, %s426
      %s444 = sphi 0, %s444
      %s446 = sphi 0, %s444
      %s447 = sphi 0, %s446
      %s461 = sphi 0, %s447
      %s465 = sphi 0, %s465
      %s467 = sphi 0, %s465
      %s468 = sphi 0, %s467
      %s482 = sphi 0, %s468
      %s486 = sphi 0, %s486
      %s488 = sphi 0, %s486
      %s489 = sphi 0, %s488
      %s503 = sphi 0, %s489
      %s507 = sphi 0, %s507
      %s509 = sphi 0, %s507
      %s510 = sphi 0, %s509
      %s524 = sphi 0, %s510
      %s528 = sphi 0, %s528
      %s530 = sphi 0, %s528
      %s531 = sphi 0, %s530
      %s545 = sphi 0, %s531
    $region4: #{vit_forward.1} parent=1 // loop_header_branch
      %32 = sbr.rel (%p30) target = $region8
    $region5: #{vit_forward.1} parent=1 // loop_body
      %s34 = ssub.s32 %s29, 1
      %s35 = ssub.s32 %s29, 2
      %s36 = sadd.s32 %s29, 1
      %s38 = sadd.s32 %s37, 1
      %p41 = scmp.eq.s32.totalorder %s29, 11
      %p42 = scmp.ne.s32.totalorder %s37, %s39
      %p43 = scmp.eq.s32.totalorder %s29, 0
      %p44 = por %p42, %p43
      %p45 = scmp.ne.s32.totalorder %s37, %s39
      %p46 = scmp.eq.s32.totalorder %s34, 11
      %p47 = por %p45, %p46
      %p48 = scmp.ne.s32.totalorder %s39, %s40
      %p49 = scmp.eq.s32.totalorder %s34, 0
      %p50 = por %p48, %p49
      %p51 = scmp.ne.s32.totalorder %s39, %s40
      %p52 = scmp.eq.s32.totalorder %s35, 11
      %p53 = por %p51, %p52
      %p55 = scmp.ne.s32.totalorder %s40, %s54
      %p56 = scmp.eq.s32.totalorder %s35, 0
      %p57 = por %p55, %p56
      %s59 = sadd.s32 %s58, 1
      %p62 = scmp.eq.s32.totalorder %s29, 11
      %p63 = scmp.ne.s32.totalorder %s58, %s60
      %p64 = scmp.eq.s32.totalorder %s29, 0
      %p65 = por %p63, %p64
      %p66 = scmp.ne.s32.totalorder %s58, %s60
      %p67 = scmp.eq.s32.totalorder %s34, 11
      %p68 = por %p66, %p67
      %p69 = scmp.ne.s32.totalorder %s60, %s61
      %p70 = scmp.eq.s32.totalorder %s34, 0
      %p71 = por %p69, %p70
      %p72 = scmp.ne.s32.totalorder %s60, %s61
      %p73 = scmp.eq.s32.totalorder %s35, 11
      %p74 = por %p72, %p73
      %p76 = scmp.ne.s32.totalorder %s61, %s75
      %p77 = scmp.eq.s32.totalorder %s35, 0
      %p78 = por %p76, %p77
      %s80 = sadd.s32 %s79, 1
      %p83 = scmp.eq.s32.totalorder %s29, 11
      %p84 = scmp.ne.s32.totalorder %s79, %s81
      %p85 = scmp.eq.s32.totalorder %s29, 0
      %p86 = por %p84, %p85
      %p87 = scmp.ne.s32.totalorder %s79, %s81
      %p88 = scmp.eq.s32.totalorder %s34, 11
      %p89 = por %p87, %p88
      %p90 = scmp.ne.s32.totalorder %s81, %s82
      %p91 = scmp.eq.s32.totalorder %s34, 0
      %p92 = por %p90, %p91
      %p93 = scmp.ne.s32.totalorder %s81, %s82
      %p94 = scmp.eq.s32.totalorder %s35, 11
      %p95 = por %p93, %p94
      %p97 = scmp.ne.s32.totalorder %s82, %s96
      %p98 = scmp.eq.s32.totalorder %s35, 0
      %p99 = por %p97, %p98
      %s101 = sadd.s32 %s100, 1
      %p104 = scmp.eq.s32.totalorder %s29, 11
      %p105 = scmp.ne.s32.totalorder %s100, %s102
      %p106 = scmp.eq.s32.totalorder %s29, 0
      %p107 = por %p105, %p106
      %p108 = scmp.ne.s32.totalorder %s100, %s102
      %p109 = scmp.eq.s32.totalorder %s34, 11
      %p110 = por %p108, %p109
      %p111 = scmp.ne.s32.totalorder %s102, %s103
      %p112 = scmp.eq.s32.totalorder %s34, 0
      %p113 = por %p111, %p112
      %p114 = scmp.ne.s32.totalorder %s102, %s103
      %p115 = scmp.eq.s32.totalorder %s35, 11
      %p116 = por %p114, %p115
      %p118 = scmp.ne.s32.totalorder %s103, %s117
      %p119 = scmp.eq.s32.totalorder %s35, 0
      %p120 = por %p118, %p119
      %s122 = sadd.s32 %s121, 1
      %p125 = scmp.eq.s32.totalorder %s29, 11
      %p126 = scmp.ne.s32.totalorder %s121, %s123
      %p127 = scmp.eq.s32.totalorder %s29, 0
      %p128 = por %p126, %p127
      %p129 = scmp.ne.s32.totalorder %s121, %s123
      %p130 = scmp.eq.s32.totalorder %s34, 11
      %p131 = por %p129, %p130
      %p132 = scmp.ne.s32.totalorder %s123, %s124
      %p133 = scmp.eq.s32.totalorder %s34, 0
      %p134 = por %p132, %p133
      %p135 = scmp.ne.s32.totalorder %s123, %s124
      %p136 = scmp.eq.s32.totalorder %s35, 11
      %p137 = por %p135, %p136
      %p139 = scmp.ne.s32.totalorder %s124, %s138
      %p140 = scmp.eq.s32.totalorder %s35, 0
      %p141 = por %p139, %p140
      %s143 = sadd.s32 %s142, 1
      %p146 = scmp.eq.s32.totalorder %s29, 11
      %p147 = scmp.ne.s32.totalorder %s142, %s144
      %p148 = scmp.eq.s32.totalorder %s29, 0
      %p149 = por %p147, %p148
      %p150 = scmp.ne.s32.totalorder %s142, %s144
      %p151 = scmp.eq.s32.totalorder %s34, 11
      %p152 = por %p150, %p151
      %p153 = scmp.ne.s32.totalorder %s144, %s145
      %p154 = scmp.eq.s32.totalorder %s34, 0
      %p155 = por %p153, %p154
      %p156 = scmp.ne.s32.totalorder %s144, %s145
      %p157 = scmp.eq.s32.totalorder %s35, 11
      %p158 = por %p156, %p157
      %p160 = scmp.ne.s32.totalorder %s145, %s159
      %p161 = scmp.eq.s32.totalorder %s35, 0
      %p162 = por %p160, %p161
      %s163 = ssub.s32 %s29, %s36
      %p164 = scmp.eq.s32.totalorder %s163, 0
      %s166 = sadd.s32 %s165, 1
      %s167 = scalar_select %p164, %s165, %s166
      %p170 = pneg %p164
      %p171 = scmp.eq.s32.totalorder %s29, 11
      %p172 = por %p170, %p171
      %p173 = scmp.ne.s32.totalorder %s165, %s168
      %p174 = scmp.eq.s32.totalorder %s29, 0
      %p175 = por %p173, %p174
      %p176 = scmp.ne.s32.totalorder %s165, %s168
      %p177 = scmp.eq.s32.totalorder %s34, 11
      %p178 = por %p176, %p177
      %p179 = scmp.ne.s32.totalorder %s168, %s169
      %p180 = scmp.eq.s32.totalorder %s34, 0
      %p181 = por %p179, %p180
      %p182 = scmp.ne.s32.totalorder %s168, %s169
      %p183 = scmp.eq.s32.totalorder %s35, 11
      %p184 = por %p182, %p183
      %p186 = scmp.ne.s32.totalorder %s169, %s185
      %p187 = scmp.eq.s32.totalorder %s35, 0
      %p188 = por %p186, %p187
      %s189 = ssub.s32 %s29, %s36
      %p190 = scmp.eq.s32.totalorder %s189, 0
      %s192 = sadd.s32 %s191, 1
      %s193 = scalar_select %p190, %s191, %s192
      %p196 = pneg %p190
      %p197 = scmp.eq.s32.totalorder %s29, 11
      %p198 = por %p196, %p197
      %p199 = scmp.ne.s32.totalorder %s191, %s194
      %p200 = scmp.eq.s32.totalorder %s29, 0
      %p201 = por %p199, %p200
      %p202 = scmp.ne.s32.totalorder %s191, %s194
      %p203 = scmp.eq.s32.totalorder %s34, 11
      %p204 = por %p202, %p203
      %p205 = scmp.ne.s32.totalorder %s194, %s195
      %p206 = scmp.eq.s32.totalorder %s34, 0
      %p207 = por %p205, %p206
      %p208 = scmp.ne.s32.totalorder %s194, %s195
      %p209 = scmp.eq.s32.totalorder %s35, 11
      %p210 = por %p208, %p209
      %p212 = scmp.ne.s32.totalorder %s195, %s211
      %p213 = scmp.eq.s32.totalorder %s35, 0
      %p214 = por %p212, %p213
      %s215 = ssub.s32 %s29, %s36
      %p216 = scmp.eq.s32.totalorder %s215, 0
      %s218 = sadd.s32 %s217, 1
      %s219 = scalar_select %p216, %s217, %s218
      %p222 = pneg %p216
      %p223 = scmp.eq.s32.totalorder %s29, 11
      %p224 = por %p222, %p223
      %p225 = scmp.ne.s32.totalorder %s217, %s220
      %p226 = scmp.eq.s32.totalorder %s29, 0
      %p227 = por %p225, %p226
      %p228 = scmp.ne.s32.totalorder %s217, %s220
      %p229 = scmp.eq.s32.totalorder %s34, 11
      %p230 = por %p228, %p229
      %p231 = scmp.ne.s32.totalorder %s220, %s221
      %p232 = scmp.eq.s32.totalorder %s34, 0
      %p233 = por %p231, %p232
      %p234 = scmp.ne.s32.totalorder %s220, %s221
      %p235 = scmp.eq.s32.totalorder %s35, 11
      %p236 = por %p234, %p235
      %p238 = scmp.ne.s32.totalorder %s221, %s237
      %p239 = scmp.eq.s32.totalorder %s35, 0
      %p240 = por %p238, %p239
      %s241 = ssub.s32 %s29, %s36
      %p242 = scmp.eq.s32.totalorder %s241, 0
      %s244 = sadd.s32 %s243, 1
      %s245 = scalar_select %p242, %s243, %s244
      %p248 = pneg %p242
      %p249 = scmp.eq.s32.totalorder %s29, 11
      %p250 = por %p248, %p249
      %p251 = scmp.ne.s32.totalorder %s243, %s246
      %p252 = scmp.eq.s32.totalorder %s29, 0
      %p253 = por %p251, %p252
      %p254 = scmp.ne.s32.totalorder %s243, %s246
      %p255 = scmp.eq.s32.totalorder %s34, 11
      %p256 = por %p254, %p255
      %p257 = scmp.ne.s32.totalorder %s246, %s247
      %p258 = scmp.eq.s32.totalorder %s34, 0
      %p259 = por %p257, %p258
      %p260 = scmp.ne.s32.totalorder %s246, %s247
      %p261 = scmp.eq.s32.totalorder %s35, 11
      %p262 = por %p260, %p261
      %p264 = scmp.ne.s32.totalorder %s247, %s263
      %p265 = scmp.eq.s32.totalorder %s35, 0
      %p266 = por %p264, %p265
      %s267 = ssub.s32 %s29, %s36
      %p268 = scmp.eq.s32.totalorder %s267, 0
      %s270 = sadd.s32 %s269, 1
      %s271 = scalar_select %p268, %s269, %s270
      %p274 = pneg %p268
      %p275 = scmp.eq.s32.totalorder %s29, 11
      %p276 = por %p274, %p275
      %p277 = scmp.ne.s32.totalorder %s269, %s272
      %p278 = scmp.eq.s32.totalorder %s29, 0
      %p279 = por %p277, %p278
      %p280 = scmp.ne.s32.totalorder %s269, %s272
      %p281 = scmp.eq.s32.totalorder %s34, 11
      %p282 = por %p280, %p281
      %p283 = scmp.ne.s32.totalorder %s272, %s273
      %p284 = scmp.eq.s32.totalorder %s34, 0
      %p285 = por %p283, %p284
      %p286 = scmp.ne.s32.totalorder %s272, %s273
      %p287 = scmp.eq.s32.totalorder %s35, 11
      %p288 = por %p286, %p287
      %p290 = scmp.ne.s32.totalorder %s273, %s289
      %p291 = scmp.eq.s32.totalorder %s35, 0
      %p292 = por %p290, %p291
      %s293 = ssub.s32 %s29, %s36
      %p294 = scmp.eq.s32.totalorder %s293, 0
      %s296 = sadd.s32 %s295, 1
      %s297 = scalar_select %p294, %s295, %s296
      %p300 = pneg %p294
      %p301 = scmp.eq.s32.totalorder %s29, 11
      %p302 = por %p300, %p301
      %p303 = scmp.ne.s32.totalorder %s295, %s298
      %p304 = scmp.eq.s32.totalorder %s29, 0
      %p305 = por %p303, %p304
      %p306 = scmp.ne.s32.totalorder %s295, %s298
      %p307 = scmp.eq.s32.totalorder %s34, 11
      %p308 = por %p306, %p307
      %p309 = scmp.ne.s32.totalorder %s298, %s299
      %p310 = scmp.eq.s32.totalorder %s34, 0
      %p311 = por %p309, %p310
      %p312 = scmp.ne.s32.totalorder %s298, %s299
      %p313 = scmp.eq.s32.totalorder %s35, 11
      %p314 = por %p312, %p313
      %p316 = scmp.ne.s32.totalorder %s299, %s315
      %p317 = scmp.eq.s32.totalorder %s35, 0
      %p318 = por %p316, %p317
      %s319 = ssub.s32 %s29, %s36
      %p320 = scmp.eq.s32.totalorder %s319, 0
      %s322 = sadd.s32 %s321, 1
      %s323 = scalar_select %p320, %s321, %s322
      %p326 = pneg %p320
      %p327 = scmp.eq.s32.totalorder %s29, 11
      %p328 = por %p326, %p327
      %p329 = scmp.ne.s32.totalorder %s321, %s324
      %p330 = scmp.eq.s32.totalorder %s29, 0
      %p331 = por %p329, %p330
      %p332 = scmp.ne.s32.totalorder %s321, %s324
      %p333 = scmp.eq.s32.totalorder %s34, 11
      %p334 = por %p332, %p333
      %p335 = scmp.ne.s32.totalorder %s324, %s325
      %p336 = scmp.eq.s32.totalorder %s34, 0
      %p337 = por %p335, %p336
      %p338 = scmp.ne.s32.totalorder %s324, %s325
      %p339 = scmp.eq.s32.totalorder %s35, 11
      %p340 = por %p338, %p339
      %p342 = scmp.ne.s32.totalorder %s325, %s341
      %p343 = scmp.eq.s32.totalorder %s35, 0
      %p344 = por %p342, %p343
      %s345 = ssub.s32 %s29, %s36
      %p346 = scmp.eq.s32.totalorder %s345, 0
      %s348 = sadd.s32 %s347, 1
      %s349 = scalar_select %p346, %s347, %s348
      %p352 = pneg %p346
      %p353 = scmp.eq.s32.totalorder %s29, 11
      %p354 = por %p352, %p353
      %p355 = scmp.ne.s32.totalorder %s347, %s350
      %p356 = scmp.eq.s32.totalorder %s29, 0
      %p357 = por %p355, %p356
      %p358 = scmp.ne.s32.totalorder %s347, %s350
      %p359 = scmp.eq.s32.totalorder %s34, 11
      %p360 = por %p358, %p359
      %p361 = scmp.ne.s32.totalorder %s350, %s351
      %p362 = scmp.eq.s32.totalorder %s34, 0
      %p363 = por %p361, %p362
      %p364 = scmp.ne.s32.totalorder %s350, %s351
      %p365 = scmp.eq.s32.totalorder %s35, 11
      %p366 = por %p364, %p365
      %p368 = scmp.ne.s32.totalorder %s351, %s367
      %p369 = scmp.eq.s32.totalorder %s35, 0
      %p370 = por %p368, %p369
      %s371 = ssub.s32 %s29, %s36
      %p372 = scmp.eq.s32.totalorder %s371, 0
      %s374 = sadd.s32 %s373, 1
      %s375 = scalar_select %p372, %s373, %s374
      %p378 = pneg %p372
      %p379 = scmp.eq.s32.totalorder %s29, 11
      %p380 = por %p378, %p379
      %p381 = scmp.ne.s32.totalorder %s373, %s376
      %p382 = scmp.eq.s32.totalorder %s29, 0
      %p383 = por %p381, %p382
      %p384 = scmp.ne.s32.totalorder %s373, %s376
      %p385 = scmp.eq.s32.totalorder %s34, 11
      %p386 = por %p384, %p385
      %p387 = scmp.ne.s32.totalorder %s376, %s377
      %p388 = scmp.eq.s32.totalorder %s34, 0
      %p389 = por %p387, %p388
      %p390 = scmp.ne.s32.totalorder %s376, %s377
      %p391 = scmp.eq.s32.totalorder %s35, 11
      %p392 = por %p390, %p391
      %p394 = scmp.ne.s32.totalorder %s377, %s393
      %p395 = scmp.eq.s32.totalorder %s35, 0
      %p396 = por %p394, %p395
      %s397 = ssub.s32 %s29, %s36
      %p398 = scmp.eq.s32.totalorder %s397, 0
      %s400 = sadd.s32 %s399, 1
      %s401 = scalar_select %p398, %s399, %s400
      %p404 = pneg %p398
      %p405 = scmp.eq.s32.totalorder %s29, 11
      %p406 = por %p404, %p405
      %p407 = scmp.ne.s32.totalorder %s399, %s402
      %p408 = scmp.eq.s32.totalorder %s29, 0
      %p409 = por %p407, %p408
      %p410 = scmp.ne.s32.totalorder %s399, %s402
      %p411 = scmp.eq.s32.totalorder %s34, 11
      %p412 = por %p410, %p411
      %p413 = scmp.ne.s32.totalorder %s402, %s403
      %p414 = scmp.eq.s32.totalorder %s34, 0
      %p415 = por %p413, %p414
      %p416 = scmp.ne.s32.totalorder %s402, %s403
      %p417 = scmp.eq.s32.totalorder %s35, 11
      %p418 = por %p416, %p417
      %p420 = scmp.ne.s32.totalorder %s403, %s419
      %p421 = scmp.eq.s32.totalorder %s35, 0
      %p422 = por %p420, %p421
      %s424 = sadd.s32 %s423, 1
      %p427 = scmp.eq.s32.totalorder %s29, 11
      %p428 = scmp.ne.s32.totalorder %s423, %s425
      %p429 = scmp.eq.s32.totalorder %s29, 0
      %p430 = por %p428, %p429
      %p431 = scmp.ne.s32.totalorder %s423, %s425
      %p432 = scmp.eq.s32.totalorder %s34, 11
      %p433 = por %p431, %p432
      %p434 = scmp.ne.s32.totalorder %s425, %s426
      %p435 = scmp.eq.s32.totalorder %s34, 0
      %p436 = por %p434, %p435
      %p437 = scmp.ne.s32.totalorder %s425, %s426
      %p438 = scmp.eq.s32.totalorder %s35, 11
      %p439 = por %p437, %p438
      %p441 = scmp.ne.s32.totalorder %s426, %s440
      %p442 = scmp.eq.s32.totalorder %s35, 0
      %p443 = por %p441, %p442
      %s445 = sadd.s32 %s444, 1
      %p448 = scmp.eq.s32.totalorder %s29, 11
      %p449 = scmp.ne.s32.totalorder %s444, %s446
      %p450 = scmp.eq.s32.totalorder %s29, 0
      %p451 = por %p449, %p450
      %p452 = scmp.ne.s32.totalorder %s444, %s446
      %p453 = scmp.eq.s32.totalorder %s34, 11
      %p454 = por %p452, %p453
      %p455 = scmp.ne.s32.totalorder %s446, %s447
      %p456 = scmp.eq.s32.totalorder %s34, 0
      %p457 = por %p455, %p456
      %p458 = scmp.ne.s32.totalorder %s446, %s447
      %p459 = scmp.eq.s32.totalorder %s35, 11
      %p460 = por %p458, %p459
      %p462 = scmp.ne.s32.totalorder %s447, %s461
      %p463 = scmp.eq.s32.totalorder %s35, 0
      %p464 = por %p462, %p463
      %s466 = sadd.s32 %s465, 1
      %p469 = scmp.eq.s32.totalorder %s29, 11
      %p470 = scmp.ne.s32.totalorder %s465, %s467
      %p471 = scmp.eq.s32.totalorder %s29, 0
      %p472 = por %p470, %p471
      %p473 = scmp.ne.s32.totalorder %s465, %s467
      %p474 = scmp.eq.s32.totalorder %s34, 11
      %p475 = por %p473, %p474
      %p476 = scmp.ne.s32.totalorder %s467, %s468
      %p477 = scmp.eq.s32.totalorder %s34, 0
      %p478 = por %p476, %p477
      %p479 = scmp.ne.s32.totalorder %s467, %s468
      %p480 = scmp.eq.s32.totalorder %s35, 11
      %p481 = por %p479, %p480
      %p483 = scmp.ne.s32.totalorder %s468, %s482
      %p484 = scmp.eq.s32.totalorder %s35, 0
      %p485 = por %p483, %p484
      %s487 = sadd.s32 %s486, 1
      %p490 = scmp.eq.s32.totalorder %s29, 11
      %p491 = scmp.ne.s32.totalorder %s486, %s488
      %p492 = scmp.eq.s32.totalorder %s29, 0
      %p493 = por %p491, %p492
      %p494 = scmp.ne.s32.totalorder %s486, %s488
      %p495 = scmp.eq.s32.totalorder %s34, 11
      %p496 = por %p494, %p495
      %p497 = scmp.ne.s32.totalorder %s488, %s489
      %p498 = scmp.eq.s32.totalorder %s34, 0
      %p499 = por %p497, %p498
      %p500 = scmp.ne.s32.totalorder %s488, %s489
      %p501 = scmp.eq.s32.totalorder %s35, 11
      %p502 = por %p500, %p501
      %p504 = scmp.ne.s32.totalorder %s489, %s503
      %p505 = scmp.eq.s32.totalorder %s35, 0
      %p506 = por %p504, %p505
      %s508 = sadd.s32 %s507, 1
      %p511 = scmp.eq.s32.totalorder %s29, 11
      %p512 = scmp.ne.s32.totalorder %s507, %s509
      %p513 = scmp.eq.s32.totalorder %s29, 0
      %p514 = por %p512, %p513
      %p515 = scmp.ne.s32.totalorder %s507, %s509
      %p516 = scmp.eq.s32.totalorder %s34, 11
      %p517 = por %p515, %p516
      %p518 = scmp.ne.s32.totalorder %s509, %s510
      %p519 = scmp.eq.s32.totalorder %s34, 0
      %p520 = por %p518, %p519
      %p521 = scmp.ne.s32.totalorder %s509, %s510
      %p522 = scmp.eq.s32.totalorder %s35, 11
      %p523 = por %p521, %p522
      %p525 = scmp.ne.s32.totalorder %s510, %s524
      %p526 = scmp.eq.s32.totalorder %s35, 0
      %p527 = por %p525, %p526
      %s529 = sadd.s32 %s528, 1
      %p532 = scmp.eq.s32.totalorder %s29, 11
      %p533 = scmp.ne.s32.totalorder %s528, %s530
      %p534 = scmp.eq.s32.totalorder %s29, 0
      %p535 = por %p533, %p534
      %p536 = scmp.ne.s32.totalorder %s528, %s530
      %p537 = scmp.eq.s32.totalorder %s34, 11
      %p538 = por %p536, %p537
      %p539 = scmp.ne.s32.totalorder %s530, %s531
      %p540 = scmp.eq.s32.totalorder %s34, 0
      %p541 = por %p539, %p540
      %p542 = scmp.ne.s32.totalorder %s530, %s531
      %p543 = scmp.eq.s32.totalorder %s35, 11
      %p544 = por %p542, %p543
      %p546 = scmp.ne.s32.totalorder %s531, %s545
      %p547 = scmp.eq.s32.totalorder %s35, 0
      %p548 = por %p546, %p547
      %p549 = scmp.le.s32.totalorder 1, %s29
      %p550 = scmp.lt.s32.totalorder %s29, 13
      %p551 = pnand %p549, %p550
      %p552 = pneg %p551
      // Predicated region
      $region9: #{vit_forward.1} parent=5 // pred_check
        _
      $region10: #{vit_forward.1} parent=5 // pred_check_branch
        %554 = sbr.rel (%p551) target = $region12
      $region11: #{vit_forward.1} parent=5 // pred_region
        %s555 = ssub.s32 %s29, 1
        // Predicated region
        $region13: #{vit_forward.1} parent=11 // pred_check
          %p556 = pneg %p50
        $region14: #{vit_forward.1} parent=11 // pred_check_branch
          %558 = sbr.rel (%p556) target = $region16
        $region15: #{vit_forward.1} parent=11 // pred_region
          _
        $region16: #{vit_forward.1} parent=11 // pred_fallthru
          _
        // Predicated region
        $region17: #{vit_forward.1} parent=11 // pred_check
          %p559 = pneg %p71
        $region18: #{vit_forward.1} parent=11 // pred_check_branch
          %561 = sbr.rel (%p559) target = $region20
        $region19: #{vit_forward.1} parent=11 // pred_region
          _
        $region20: #{vit_forward.1} parent=11 // pred_fallthru
          _
        // Predicated region
        $region21: #{vit_forward.1} parent=11 // pred_check
          %p562 = pneg %p92
        $region22: #{vit_forward.1} parent=11 // pred_check_branch
          %564 = sbr.rel (%p562) target = $region24
        $region23: #{vit_forward.1} parent=11 // pred_region
          _
        $region24: #{vit_forward.1} parent=11 // pred_fallthru
          _
        // Predicated region
        $region25: #{vit_forward.1} parent=11 // pred_check
          %p565 = pneg %p113
        $region26: #{vit_forward.1} parent=11 // pred_check_branch
          %567 = sbr.rel (%p565) target = $region28
        $region27: #{vit_forward.1} parent=11 // pred_region
          _
        $region28: #{vit_forward.1} parent=11 // pred_fallthru
          _
        // Predicated region
        $region29: #{vit_forward.1} parent=11 // pred_check
          %p568 = pneg %p134
        $region30: #{vit_forward.1} parent=11 // pred_check_branch
          %570 = sbr.rel (%p568) target = $region32
        $region31: #{vit_forward.1} parent=11 // pred_region
          _
        $region32: #{vit_forward.1} parent=11 // pred_fallthru
          _
        // Predicated region
        $region33: #{vit_forward.1} parent=11 // pred_check
          %p571 = pneg %p155
        $region34: #{vit_forward.1} parent=11 // pred_check_branch
          %573 = sbr.rel (%p571) target = $region36
        $region35: #{vit_forward.1} parent=11 // pred_region
          _
        $region36: #{vit_forward.1} parent=11 // pred_fallthru
          _
        // Predicated region
        $region37: #{vit_forward.1} parent=11 // pred_check
          %p574 = pneg %p436
        $region38: #{vit_forward.1} parent=11 // pred_check_branch
          %576 = sbr.rel (%p574) target = $region40
        $region39: #{vit_forward.1} parent=11 // pred_region
          _
        $region40: #{vit_forward.1} parent=11 // pred_fallthru
          _
        // Predicated region
        $region41: #{vit_forward.1} parent=11 // pred_check
          %p577 = pneg %p457
        $region42: #{vit_forward.1} parent=11 // pred_check_branch
          %579 = sbr.rel (%p577) target = $region44
        $region43: #{vit_forward.1} parent=11 // pred_region
          _
        $region44: #{vit_forward.1} parent=11 // pred_fallthru
          _
        // Predicated region
        $region45: #{vit_forward.1} parent=11 // pred_check
          %p580 = pneg %p478
        $region46: #{vit_forward.1} parent=11 // pred_check_branch
          %582 = sbr.rel (%p580) target = $region48
        $region47: #{vit_forward.1} parent=11 // pred_region
          _
        $region48: #{vit_forward.1} parent=11 // pred_fallthru
          _
        // Predicated region
        $region49: #{vit_forward.1} parent=11 // pred_check
          %p583 = pneg %p499
        $region50: #{vit_forward.1} parent=11 // pred_check_branch
          %585 = sbr.rel (%p583) target = $region52
        $region51: #{vit_forward.1} parent=11 // pred_region
          _
        $region52: #{vit_forward.1} parent=11 // pred_fallthru
          _
      $region12: #{vit_forward.1} parent=5 // pred_fallthru
        _
      %p586 = scmp.lt.s32.totalorder %s29, 12
      // Predicated region
      $region53: #{vit_forward.1} parent=5 // pred_check
        %p587 = pneg %p586
      $region54: #{vit_forward.1} parent=5 // pred_check_branch
        %589 = sbr.rel (%p587) target = $region56
      $region55: #{vit_forward.1} parent=5 // pred_region
        // Predicated region
        $region57: #{vit_forward.1} parent=55 // pred_check
          %p590 = pneg %p175
        $region58: #{vit_forward.1} parent=55 // pred_check_branch
          %592 = sbr.rel (%p590) target = $region60
        $region59: #{vit_forward.1} parent=55 // pred_region
          %p593 = scmp.lt.s32.totalorder %s29, 11
          %s594 = scalar_select %p593, %s29, 11
          %s595 = smul.addr %s594, 4
          %s596 = smul.addr %s595, 8
          %s597 = scalar_lea.vmem %s6, %s596
        $region60: #{vit_forward.1} parent=55 // pred_fallthru
          _
        // Predicated region
        $region61: #{vit_forward.1} parent=55 // pred_check
          %p598 = pneg %p201
        $region62: #{vit_forward.1} parent=55 // pred_check_branch
          %600 = sbr.rel (%p598) target = $region64
        $region63: #{vit_forward.1} parent=55 // pred_region
          %p601 = scmp.lt.s32.totalorder %s29, 11
          %s602 = scalar_select %p601, %s29, 11
          %s603 = scalar_lea.vmem %s7, %s602
        $region64: #{vit_forward.1} parent=55 // pred_fallthru
          _
        // Predicated region
        $region65: #{vit_forward.1} parent=55 // pred_check
          %p604 = pneg %p227
        $region66: #{vit_forward.1} parent=55 // pred_check_branch
          %606 = sbr.rel (%p604) target = $region68
        $region67: #{vit_forward.1} parent=55 // pred_region
          %p607 = scmp.lt.s32.totalorder %s29, 11
          %s608 = scalar_select %p607, %s29, 11
          %s609 = smul.addr %s608, 4
          %s610 = smul.addr %s609, 8
          %s611 = scalar_lea.vmem %s8, %s610
        $region68: #{vit_forward.1} parent=55 // pred_fallthru
          _
        // Predicated region
        $region69: #{vit_forward.1} parent=55 // pred_check
          %p612 = pneg %p253
        $region70: #{vit_forward.1} parent=55 // pred_check_branch
          %614 = sbr.rel (%p612) target = $region72
        $region71: #{vit_forward.1} parent=55 // pred_region
          %p615 = scmp.lt.s32.totalorder %s29, 11
          %s616 = scalar_select %p615, %s29, 11
          %s617 = scalar_lea.vmem %s9, %s616
        $region72: #{vit_forward.1} parent=55 // pred_fallthru
          _
        // Predicated region
        $region73: #{vit_forward.1} parent=55 // pred_check
          %p618 = pneg %p279
        $region74: #{vit_forward.1} parent=55 // pred_check_branch
          %620 = sbr.rel (%p618) target = $region76
        $region75: #{vit_forward.1} parent=55 // pred_region
          %p621 = scmp.lt.s32.totalorder %s29, 11
          %s622 = scalar_select %p621, %s29, 11
          %s623 = smul.addr %s622, 2
          %s624 = scalar_lea.vmem %s10, %s623
        $region76: #{vit_forward.1} parent=55 // pred_fallthru
          _
        // Predicated region
        $region77: #{vit_forward.1} parent=55 // pred_check
          %p625 = pneg %p305
        $region78: #{vit_forward.1} parent=55 // pred_check_branch
          %627 = sbr.rel (%p625) target = $region80
        $region79: #{vit_forward.1} parent=55 // pred_region
          %p628 = scmp.lt.s32.totalorder %s29, 11
          %s629 = scalar_select %p628, %s29, 11
          %s630 = smul.addr %s629, 4
          %s631 = smul.addr %s630, 8
          %s632 = scalar_lea.vmem %s11, %s631
        $region80: #{vit_forward.1} parent=55 // pred_fallthru
          _
        // Predicated region
        $region81: #{vit_forward.1} parent=55 // pred_check
          %p633 = pneg %p331
        $region82: #{vit_forward.1} parent=55 // pred_check_branch
          %635 = sbr.rel (%p633) target = $region84
        $region83: #{vit_forward.1} parent=55 // pred_region
          %p636 = scmp.lt.s32.totalorder %s29, 11
          %s637 = scalar_select %p636, %s29, 11
          %s638 = scalar_lea.vmem %s12, %s637
        $region84: #{vit_forward.1} parent=55 // pred_fallthru
          _
        // Predicated region
        $region85: #{vit_forward.1} parent=55 // pred_check
          %p639 = pneg %p357
        $region86: #{vit_forward.1} parent=55 // pred_check_branch
          %641 = sbr.rel (%p639) target = $region88
        $region87: #{vit_forward.1} parent=55 // pred_region
          %p642 = scmp.lt.s32.totalorder %s29, 11
          %s643 = scalar_select %p642, %s29, 11
          %s644 = smul.addr %s643, 8
          %s645 = smul.addr %s644, 8
          %s646 = scalar_lea.vmem %s13, %s645
        $region88: #{vit_forward.1} parent=55 // pred_fallthru
          _
        // Predicated region
        $region89: #{vit_forward.1} parent=55 // pred_check
          %p647 = pneg %p383
        $region90: #{vit_forward.1} parent=55 // pred_check_branch
          %649 = sbr.rel (%p647) target = $region92
        $region91: #{vit_forward.1} parent=55 // pred_region
          %p650 = scmp.lt.s32.totalorder %s29, 11
          %s651 = scalar_select %p650, %s29, 11
          %s652 = scalar_lea.vmem %s14, %s651
        $region92: #{vit_forward.1} parent=55 // pred_fallthru
          _
        // Predicated region
        $region93: #{vit_forward.1} parent=55 // pred_check
          %p653 = pneg %p409
        $region94: #{vit_forward.1} parent=55 // pred_check_branch
          %655 = sbr.rel (%p653) target = $region96
        $region95: #{vit_forward.1} parent=55 // pred_region
          %p656 = scmp.lt.s32.totalorder %s29, 11
          %s657 = scalar_select %p656, %s29, 11
          %s658 = smul.addr %s657, 2
          %s659 = scalar_lea.vmem %s15, %s658
        $region96: #{vit_forward.1} parent=55 // pred_fallthru
          _
      $region56: #{vit_forward.1} parent=5 // pred_fallthru
        _
      %p660 = scmp.le.s32.totalorder 1, %s29
      %p661 = scmp.lt.s32.totalorder %s29, 13
      %p662 = pnand %p660, %p661
      %p663 = pneg %p662
      // Predicated region
      $region97: #{vit_forward.1} parent=5 // pred_check
        _
      $region98: #{vit_forward.1} parent=5 // pred_check_branch
        %665 = sbr.rel (%p662) target = $region100
      $region99: #{vit_forward.1} parent=5 // pred_region
        %s666 = ssub.s32 %s29, 1
        %p667 = pneg %p50
        %p668 = pneg %p47
        %p669 = pneg %p71
        %p670 = pneg %p68
        %p671 = pneg %p92
        %p672 = pneg %p89
        %p673 = pneg %p113
        %p674 = pneg %p110
        %p675 = pneg %p134
        %p676 = pneg %p131
        %p677 = pneg %p155
        %p678 = pneg %p152
        %p679 = scmp.lt.s32.totalorder %s34, 11
        %s680 = scalar_select %p679, %s34, 11
        %s681 = smul.addr %s680, 4
        %s682 = smul.addr %s681, 8
        %s683 = scalar_lea.vmem %s6, %s682
        %p684 = pneg %p181
        %p685 = pneg %p178
        %p686 = scmp.lt.s32.totalorder %s34, 11
        %s687 = scalar_select %p686, %s34, 11
        %s688 = scalar_lea.vmem %s7, %s687
        %p689 = pneg %p207
        %p690 = pneg %p204
        %p691 = scmp.lt.s32.totalorder %s34, 11
        %s692 = scalar_select %p691, %s34, 11
        %s693 = smul.addr %s692, 4
        %s694 = smul.addr %s693, 8
        %s695 = scalar_lea.vmem %s8, %s694
        %p696 = pneg %p233
        %p697 = pneg %p230
        %p698 = scmp.lt.s32.totalorder %s34, 11
        %s699 = scalar_select %p698, %s34, 11
        %s700 = scalar_lea.vmem %s9, %s699
        %p701 = pneg %p259
        %p702 = pneg %p256
        %p703 = scmp.lt.s32.totalorder %s34, 11
        %s704 = scalar_select %p703, %s34, 11
        %s705 = smul.addr %s704, 2
        %s706 = scalar_lea.vmem %s10, %s705
        %p707 = pneg %p285
        %p708 = pneg %p282
        %p709 = scmp.lt.s32.totalorder %s34, 11
        %s710 = scalar_select %p709, %s34, 11
        %s711 = smul.addr %s710, 4
        %s712 = smul.addr %s711, 8
        %s713 = scalar_lea.vmem %s11, %s712
        %p714 = pneg %p311
        %p715 = pneg %p308
        %p716 = scmp.lt.s32.totalorder %s34, 11
        %s717 = scalar_select %p716, %s34, 11
        %s718 = scalar_lea.vmem %s12, %s717
        %p719 = pneg %p337
        %p720 = pneg %p334
        %p721 = scmp.lt.s32.totalorder %s34, 11
        %s722 = scalar_select %p721, %s34, 11
        %s723 = smul.addr %s722, 8
        %s724 = smul.addr %s723, 8
        %s725 = scalar_lea.vmem %s13, %s724
        %p726 = pneg %p363
        %p727 = pneg %p360
        %p728 = scmp.lt.s32.totalorder %s34, 11
        %s729 = scalar_select %p728, %s34, 11
        %s730 = scalar_lea.vmem %s14, %s729
        %p731 = pneg %p389
        %p732 = pneg %p386
        %p733 = scmp.lt.s32.totalorder %s34, 11
        %s734 = scalar_select %p733, %s34, 11
        %s735 = smul.addr %s734, 2
        %s736 = scalar_lea.vmem %s15, %s735
        %p737 = pneg %p415
        %p738 = pneg %p412
        %p739 = pneg %p436
        %p740 = pneg %p433
        %p741 = pneg %p457
        %p742 = pneg %p454
        %p743 = pneg %p478
        %p744 = pneg %p475
        %p745 = pneg %p499
        %p746 = pneg %p496
        %p747 = pneg %p520
        %p748 = pneg %p517
        %p749 = pneg %p541
        %p750 = pneg %p538
        %p751 = scmp.lt.s32.totalorder %s34, 11
        %s752 = scalar_select %p751, %s34, 11
        %s753 = smul.addr %s752, 4
        %s754 = smul.addr %s753, 8
        %s755 = scalar_lea.vmem %s6, %s754
        %p756 = scmp.lt.s32.totalorder %s34, 11
        %s757 = scalar_select %p756, %s34, 11
        %s758 = scalar_lea.vmem %s7, %s757
        %p759 = scmp.lt.s32.totalorder %s34, 11
        %s760 = scalar_select %p759, %s34, 11
        %s761 = smul.addr %s760, 4
        %s762 = smul.addr %s761, 8
        %s763 = scalar_lea.vmem %s8, %s762
        %p764 = scmp.lt.s32.totalorder %s34, 11
        %s765 = scalar_select %p764, %s34, 11
        %s766 = scalar_lea.vmem %s9, %s765
        %p767 = scmp.lt.s32.totalorder %s34, 11
        %s768 = scalar_select %p767, %s34, 11
        %s769 = smul.addr %s768, 2
        %s770 = scalar_lea.vmem %s10, %s769
        %p771 = scmp.lt.s32.totalorder %s34, 11
        %s772 = scalar_select %p771, %s34, 11
        %s773 = smul.addr %s772, 4
        %s774 = smul.addr %s773, 8
        %s775 = scalar_lea.vmem %s11, %s774
        %p776 = scmp.lt.s32.totalorder %s34, 11
        %s777 = scalar_select %p776, %s34, 11
        %s778 = scalar_lea.vmem %s12, %s777
        %p779 = scmp.lt.s32.totalorder %s34, 11
        %s780 = scalar_select %p779, %s34, 11
        %s781 = smul.addr %s780, 8
        %s782 = smul.addr %s781, 8
        %s783 = scalar_lea.vmem %s13, %s782
        %p784 = scmp.lt.s32.totalorder %s34, 11
        %s785 = scalar_select %p784, %s34, 11
        %s786 = scalar_lea.vmem %s14, %s785
        %p787 = scmp.lt.s32.totalorder %s34, 11
        %s788 = scalar_select %p787, %s34, 11
        %s789 = smul.addr %s788, 2
        %s790 = scalar_lea.vmem %s15, %s789
        %p791 = scmp.eq.s32.totalorder %s34, 0
        // Predicated region
        $region101: #{vit_forward.1} parent=99 // pred_check
          %p792 = pneg %p791
        $region102: #{vit_forward.1} parent=99 // pred_check_branch
          %794 = sbr.rel (%p792) target = $region104
        $region103: #{vit_forward.1} parent=99 // pred_region
          %v795 = vld [vmem:[%s0] sm:$0xff]
          %v796 = vld [vmem:[%s0 + $0x8] sm:$0xff]
          %v797 = vld [vmem:[%s0 + $0x10] sm:$0xff]
          %v798 = vld [vmem:[%s0 + $0x18] sm:$0xff]
          %v799 = vld [vmem:[%s1] sm:$0xff]
          %v800 = vld [vmem:[%s1 + $0x8] sm:$0xff]
          %v801 = vld [vmem:[%s1 + $0x10] sm:$0xff]
          %v802 = vld [vmem:[%s1 + $0x18] sm:$0xff]
          %v803 = vld [vmem:[%s1 + $0x20] sm:$0xff]
          %v804 = vld [vmem:[%s1 + $0x28] sm:$0xff]
          %v805 = vld [vmem:[%s2] sm:$0x1]
          %v807 = vlaneseq
          %v808 = vshrl.u32 %v807, 7
          %v809 = vsub.s32 0, %v808
          %v810 = vrot.slane %v805, %v809
          %vm812 = vcmask 392192
          %v814 = vsel %vm812, %v795, 0
          %v817 = vsel %vm812, %v796, 0
          %v820 = vsel %vm812, %v797, 0
          %v823 = vsel %vm812, %v798, 0
          %825 = vmatprep.subr.mxu0 0.0
          %826 = vmatpush1.msra.mxu0 %v799
          %827 = vmatprep.subr.mxu0 0.0
          %828 = vmatpush1.msra.mxu0 %v800
          %829 = vmatprep.subr.mxu0 0.0
          %830 = vmatpush1.msra.mxu0 %v801
          %831 = vmatprep.subr.mxu0 0.0
          %832 = vmatpush1.msra.mxu0 %v802
          %833 = vmatprep.subr.mxu0 0.0
          %834 = vmatpush1.msra.mxu0 %v803
          %835 = vmatprep.subr.mxu0 0.0
          %836 = vmatpush1.msra.mxu0 %v804
          %837 = vmatprep.subr.mxu0 0.0
          %838 = vmatpush1.msra.mxu0 0.0
          %839 = vmatprep.subr.mxu0 0.0
          %840 = vmatpush1.msra.mxu0 0.0
          %841 = vmatprep.subr.mxu0 0.0
          %842 = vmatpush1.msra.mxu0 0.0
          %843 = vmatprep.subr.mxu0 0.0
          %844 = vmatpush1.msra.mxu0 0.0
          %845 = vmatprep.subr.mxu0 0.0
          %846 = vmatpush1.msra.mxu0 0.0
          %847 = vmatprep.subr.mxu0 0.0
          %848 = vmatpush1.msra.mxu0 0.0
          %849 = vmatprep.subr.mxu0 0.0
          %850 = vmatpush1.msra.mxu0 0.0
          %851 = vmatprep.subr.mxu0 0.0
          %852 = vmatpush1.msra.mxu0 0.0
          %853 = vmatprep.subr.mxu0 0.0
          %854 = vmatpush1.msra.mxu0 0.0
          %855 = vmatprep.subr.mxu0 0.0
          %856 = vmatpush1.msra.mxu0 0.0
          %857 = vmatprep.subr.mxu0 0.0
          %858 = vmatpush1.msra.mxu0 0.0
          %859 = vmatprep.subr.mxu0 0.0
          %860 = vmatpush1.msra.mxu0 0.0
          %861 = vmatprep.subr.mxu0 0.0
          %862 = vmatpush1.msra.mxu0 0.0
          %863 = vmatprep.subr.mxu0 0.0
          %864 = vmatpush1.msra.mxu0 0.0
          %865 = vmatprep.subr.mxu0 0.0
          %866 = vmatpush1.msra.mxu0 0.0
          %867 = vmatprep.subr.mxu0 0.0
          %868 = vmatpush1.msra.mxu0 0.0
          %869 = vmatprep.subr.mxu0 0.0
          %870 = vmatpush1.msra.mxu0 0.0
          %871 = vmatprep.subr.mxu0 0.0
          %872 = vmatpush1.msra.mxu0 0.0
          %873 = vmatprep.subr.mxu0 0.0
          %874 = vmatpush1.msra.mxu0 0.0
          %875 = vmatprep.subr.mxu0 0.0
          %876 = vmatpush1.msra.mxu0 0.0
          %877 = vmatprep.subr.mxu0 0.0
          %878 = vmatpush1.msra.mxu0 0.0
          %879 = vmatprep.subr.mxu0 0.0
          %880 = vmatpush1.msra.mxu0 0.0
          %881 = vmatprep.subr.mxu0 0.0
          %882 = vmatpush1.msra.mxu0 0.0
          %883 = vmatprep.subr.mxu0 0.0
          %884 = vmatpush1.msra.mxu0 0.0
          %885 = vmatprep.subr.mxu0 0.0
          %886 = vmatpush1.msra.mxu0 0.0
          %887 = vmatprep.subr.mxu0 0.0
          %888 = vmatpush1.msra.mxu0 0.0
          %889 = vmatprep.mubr.f32.mxu0 0.0
          %890 = vmatmul.mubr.f32.gmra.mrb[0].mxu0 %v814
          %v891 = vpop.f32.mrb[0].mxu0
          %v892 = vadd.f32 %v810, %v891
          %v893 = vpop.f32.mrb[0].mxu0
          %894 = vmatprep.mubr.f32.mxu0 0.0
          %895 = vmatmul.mubr.f32.gmra.mrb[0].mxu0 %v817
          %v896 = vpop.f32.mrb[0].mxu0
          %v897 = vadd.f32 %v810, %v896
          %v898 = vpop.f32.mrb[0].mxu0
          %899 = vmatprep.mubr.f32.mxu0 0.0
          %900 = vmatmul.mubr.f32.gmra.mrb[0].mxu0 %v820
          %v901 = vpop.f32.mrb[0].mxu0
          %v902 = vadd.f32 %v810, %v901
          %v903 = vpop.f32.mrb[0].mxu0
          %904 = vmatprep.mubr.f32.mxu0 0.0
          %905 = vmatmul.mubr.f32.gmra.mrb[0].mxu0 %v823
          %v906 = vpop.f32.mrb[0].mxu0
          %v907 = vadd.f32 %v810, %v906
          %v908 = vpop.f32.mrb[0].mxu0
          %909 = vdwg.mxu0
          %v910 = vld [vmem:[%s3 + $0x1] sm:$0x1]
          %v911 = vld [vmem:[%s4] sm:$0x1]
          %v912 = vadd.f32 %v910, %v911
          %v913 = vld [vmem:[%s4 + $0x1] sm:$0xff]
          %v914 = vld [vmem:[%s4 + $0x9] sm:$0xff]
          %v915 = vadd.f32 %v892, %v913
          %v916 = vadd.f32 %v897, %v914
          %v917 = vadd.f32 %v902, %v913
          %v918 = vadd.f32 %v907, %v914
          %vm921 = vcmask 1040384
          %v922 = vrot.slane %v915, 7
          %v923 = vrot.slane %v916, 7
          %v924 = vsel %vm921, %v922, %v923
          %v929 = vrot.slane %v912, 7
          %vm933 = vcmask 1041408
          %v934 = vrot.slane %v917, 6
          %v935 = vrot.slane %v918, 6
          %v936 = vsel %vm933, %v934, %v935
          %v940 = vsel %vm921, %v912, %v922
          %v941 = vsel %vm921, %v923, %v929
          %v942 = vsel %vm933, %v941, %v934
          %v943 = vld [vmem:[%s5] sm:$0x1]
          %v944 = vld [vmem:[%s5 + $0x1] sm:$0x1]
          %vm945 = vcmask 261120
          %v946 = vsel %vm945, %v940, 0.0
          %947 = vadd.xlane.f32.xlu0 %v946
          %v948 = vpop.xlane.xlu0 %947
          %v949 = vsel %vm945, %v924, 0.0
          %950 = vadd.xlane.f32.xlu0 %v949
          %v951 = vpop.xlane.xlu0 %950
          %v952 = vsel %vm945, %v942, 0.0
          %953 = vadd.xlane.f32.xlu0 %v952
          %v954 = vpop.xlane.xlu0 %953
          %v955 = vsel %vm945, %v936, 0.0
          %956 = vadd.xlane.f32.xlu0 %v955
          %v957 = vpop.xlane.xlu0 %956
          %vm958 = vcmask 254976
          %v959 = vsel %vm958, %v935, 0.0
          %960 = vadd.xlane.f32.xlu0 %v959
          %v961 = vpop.xlane.xlu0 %960
          %v962 = vrcp.pop 32.0
          %v963 = vmul.f32 %v948, %v962
          %v964 = vmul.f32 %v951, %v962
          %v965 = vmul.f32 %v954, %v962
          %v966 = vmul.f32 %v957, %v962
          %v967 = vmul.f32 %v961, %v962
          %v968 = vsub.f32 %v940, %v963
          %v969 = vsub.f32 %v924, %v964
          %v970 = vsub.f32 %v942, %v965
          %v971 = vsub.f32 %v936, %v966
          %v972 = vsub.f32 %v935, %v967
          %v973 = vmul.f32 %v968, %v968
          %v974 = vmul.f32 %v969, %v969
          %v975 = vmul.f32 %v970, %v970
          %v976 = vmul.f32 %v971, %v971
          %v977 = vmul.f32 %v972, %v972
          %v978 = vsel %vm945, %v973, 0.0
          %979 = vadd.xlane.f32.xlu0 %v978
          %v980 = vpop.xlane.xlu0 %979
          %v981 = vsel %vm945, %v974, 0.0
          %982 = vadd.xlane.f32.xlu0 %v981
          %v983 = vpop.xlane.xlu0 %982
          %v984 = vsel %vm945, %v975, 0.0
          %985 = vadd.xlane.f32.xlu0 %v984
          %v986 = vpop.xlane.xlu0 %985
          %v987 = vsel %vm945, %v976, 0.0
          %988 = vadd.xlane.f32.xlu0 %v987
          %v989 = vpop.xlane.xlu0 %988
          %v990 = vsel %vm958, %v977, 0.0
          %991 = vadd.xlane.f32.xlu0 %v990
          %v992 = vpop.xlane.xlu0 %991
          %v993 = vmul.f32 %v980, %v962
          %v994 = vmul.f32 %v983, %v962
          %v995 = vmul.f32 %v986, %v962
          %v996 = vmul.f32 %v989, %v962
          %v997 = vmul.f32 %v992, %v962
          %v998 = vadd.f32 %v993, 1e-12
          %v999 = vadd.f32 %v994, 1e-12
          %v1000 = vadd.f32 %v995, 1e-12
          %v1001 = vadd.f32 %v996, 1e-12
          %v1002 = vadd.f32 %v997, 1e-12
          %v1003 = vrsqrt.pop %v998
          %v1004 = vrsqrt.pop %v999
          %v1005 = vrsqrt.pop %v1000
          %v1006 = vrsqrt.pop %v1001
          %v1007 = vrsqrt.pop %v1002
          %v1008 = vmul.f32 %v968, %v1003
          %v1009 = vmul.f32 %v969, %v1004
          %v1010 = vmul.f32 %v970, %v1005
          %v1011 = vmul.f32 %v971, %v1006
          %v1012 = vmul.f32 %v972, %v1007
          %v1013 = vlaneseq
          %v1014 = vshrl.u32 %v1013, 7
          %v1015 = vsub.s32 0, %v1014
          %v1016 = vrot.slane %v943, %v1015
          %v1017 = vmul.f32 %v1008, %v1016
          %v1018 = vmul.f32 %v1009, %v1016
          %v1019 = vmul.f32 %v1010, %v1016
          %v1020 = vmul.f32 %v1011, %v1016
          %v1021 = vmul.f32 %v1012, %v1016
          %v1022 = vlaneseq
          %v1023 = vshrl.u32 %v1022, 7
          %v1024 = vsub.s32 0, %v1023
          %v1025 = vrot.slane %v944, %v1024
          %v1026 = vadd.f32 %v1017, %v1025
          %v1027 = vadd.f32 %v1018, %v1025
          %v1028 = vadd.f32 %v1019, %v1025
          %v1029 = vadd.f32 %v1020, %v1025
          %v1030 = vadd.f32 %v1021, %v1025
          %1031 = vst.msk [vmem:[#allocation2] sm:$0xff] %vm945, %v1026
          %1032 = vst.msk [vmem:[#allocation2 + $0x8] sm:$0xff] %vm945, %v1027
          %1033 = vst.msk [vmem:[#allocation2 + $0x10] sm:$0xff] %vm945, %v1028
          %1034 = vst.msk [vmem:[#allocation2 + $0x18] sm:$0xff] %vm945, %v1029
          %1035 = vst.msk [vmem:[#allocation2 + $0x20] sm:$0x3] %vm958, %v1030
          %1036 = vst.msk [vmem:[%s20] sm:$0xff] %vm945, %v1026
          %1037 = vst.msk [vmem:[%s20 + $0x8] sm:$0xff] %vm945, %v1027
          %1038 = vst.msk [vmem:[%s20 + $0x10] sm:$0xff] %vm945, %v1028
          %1039 = vst.msk [vmem:[%s20 + $0x18] sm:$0xff] %vm945, %v1029
          %1040 = vst.msk [vmem:[%s20 + $0x20] sm:$0x3] %vm958, %v1030
        $region104: #{vit_forward.1} parent=99 // pred_fallthru
          _
        %v1041 = vld [vmem:[#allocation2] sm:$0xff]
        %v1042 = vld [vmem:[#allocation2 + $0x8] sm:$0xff]
        %v1043 = vld [vmem:[#allocation2 + $0x10] sm:$0xff]
        %v1044 = vld [vmem:[#allocation2 + $0x18] sm:$0xff]
        %v1045 = vld [vmem:[#allocation2 + $0x20] sm:$0x3]
        %v1046 = vld [vmem:[%s755] sm:$0xff]
        %v1047 = vld [vmem:[%s755 + $0x8] sm:$0xff]
        %v1048 = vld [vmem:[%s755 + $0x10] sm:$0xff]
        %v1049 = vld [vmem:[%s755 + $0x18] sm:$0xff]
        %v1050 = vld [vmem:[%s758] sm:$0x1]
        %v1052 = vlaneseq
        %v1053 = vshrl.u32 %v1052, 7
        %v1054 = vsub.s32 0, %v1053
        %v1055 = vrot.slane %v1050, %v1054
        %vm1057 = vcmask 261120
        %v1059 = vsel %vm1057, %v1041, 0
        %v1062 = vsel %vm1057, %v1042, 0
        %v1065 = vsel %vm1057, %v1043, 0
        %v1068 = vsel %vm1057, %v1044, 0
        %v1071 = vsel %vm1057, %v1045, 0
        %1073 = vmatprep.subr.mxu0 0.0
        %1074 = vmatpush1.msra.mxu0 %v1046
        %1075 = vmatprep.subr.mxu0 0.0
        %1076 = vmatpush1.msra.mxu0 %v1047
        %1077 = vmatprep.subr.mxu0 0.0
        %1078 = vmatpush1.msra.mxu0 %v1048
        %1079 = vmatprep.subr.mxu0 0.0
        %1080 = vmatpush1.msra.mxu0 %v1049
        %1081 = vmatprep.subr.mxu0 0.0
        %1082 = vmatpush1.msra.mxu0 0.0
        %1083 = vmatprep.subr.mxu0 0.0
        %1084 = vmatpush1.msra.mxu0 0.0
        %1085 = vmatprep.subr.mxu0 0.0
        %1086 = vmatpush1.msra.mxu0 0.0
        %1087 = vmatprep.subr.mxu0 0.0
        %1088 = vmatpush1.msra.mxu0 0.0
        %1089 = vmatprep.subr.mxu0 0.0
        %1090 = vmatpush1.msra.mxu0 0.0
        %1091 = vmatprep.subr.mxu0 0.0
        %1092 = vmatpush1.msra.mxu0 0.0
        %1093 = vmatprep.subr.mxu0 0.0
        %1094 = vmatpush1.msra.mxu0 0.0
        %1095 = vmatprep.subr.mxu0 0.0
        %1096 = vmatpush1.msra.mxu0 0.0
        %1097 = vmatprep.subr.mxu0 0.0
        %1098 = vmatpush1.msra.mxu0 0.0
        %1099 = vmatprep.subr.mxu0 0.0
        %1100 = vmatpush1.msra.mxu0 0.0
        %1101 = vmatprep.subr.mxu0 0.0
        %1102 = vmatpush1.msra.mxu0 0.0
        %1103 = vmatprep.subr.mxu0 0.0
        %1104 = vmatpush1.msra.mxu0 0.0
        %1105 = vmatprep.subr.mxu0 0.0
        %1106 = vmatpush1.msra.mxu0 0.0
        %1107 = vmatprep.subr.mxu0 0.0
        %1108 = vmatpush1.msra.mxu0 0.0
        %1109 = vmatprep.subr.mxu0 0.0
        %1110 = vmatpush1.msra.mxu0 0.0
        %1111 = vmatprep.subr.mxu0 0.0
        %1112 = vmatpush1.msra.mxu0 0.0
        %1113 = vmatprep.subr.mxu0 0.0
        %1114 = vmatpush1.msra.mxu0 0.0
        %1115 = vmatprep.subr.mxu0 0.0
        %1116 = vmatpush1.msra.mxu0 0.0
        %1117 = vmatprep.subr.mxu0 0.0
        %1118 = vmatpush1.msra.mxu0 0.0
        %1119 = vmatprep.subr.mxu0 0.0
        %1120 = vmatpush1.msra.mxu0 0.0
        %1121 = vmatprep.subr.mxu0 0.0
        %1122 = vmatpush1.msra.mxu0 0.0
        %1123 = vmatprep.subr.mxu0 0.0
        %1124 = vmatpush1.msra.mxu0 0.0
        %1125 = vmatprep.subr.mxu0 0.0
        %1126 = vmatpush1.msra.mxu0 0.0
        %1127 = vmatprep.subr.mxu0 0.0
        %1128 = vmatpush1.msra.mxu0 0.0
        %1129 = vmatprep.subr.mxu0 0.0
        %1130 = vmatpush1.msra.mxu0 0.0
        %1131 = vmatprep.subr.mxu0 0.0
        %1132 = vmatpush1.msra.mxu0 0.0
        %1133 = vmatprep.subr.mxu0 0.0
        %1134 = vmatpush1.msra.mxu0 0.0
        %1135 = vmatprep.subr.mxu0 0.0
        %1136 = vmatpush1.msra.mxu0 0.0
        %1137 = vmatprep.mubr.f32.mxu0 0.0
        %1138 = vmatmul.mubr.f32.gmra.mrb[0].mxu0 %v1059
        %v1139 = vpop.f32.mrb[0].mxu0
        %v1140 = vadd.f32 %v1055, %v1139
        %v1141 = vpop.f32.mrb[0].mxu0
        %1142 = vmatprep.mubr.f32.mxu0 0.0
        %1143 = vmatmul.mubr.f32.gmra.mrb[0].mxu0 %v1062
        %v1144 = vpop.f32.mrb[0].mxu0
        %v1145 = vadd.f32 %v1055, %v1144
        %v1146 = vpop.f32.mrb[0].mxu0
        %1147 = vmatprep.mubr.f32.mxu0 0.0
        %1148 = vmatmul.mubr.f32.gmra.mrb[0].mxu0 %v1065
        %v1149 = vpop.f32.mrb[0].mxu0
        %v1150 = vadd.f32 %v1055, %v1149
        %v1151 = vpop.f32.mrb[0].mxu0
        %1152 = vmatprep.mubr.f32.mxu0 0.0
        %1153 = vmatmul.mubr.f32.gmra.mrb[0].mxu0 %v1068
        %v1154 = vpop.f32.mrb[0].mxu0
        %v1155 = vadd.f32 %v1055, %v1154
        %v1156 = vpop.f32.mrb[0].mxu0
        %1157 = vmatprep.mubr.f32.mxu0 0.0
        %1158 = vmatmul.mubr.f32.gmra.mrb[0].mxu0 %v1071
        %v1159 = vpop.f32.mrb[0].mxu0
        %v1160 = vadd.f32 %v1055, %v1159
        %v1161 = vpop.f32.mrb[0].mxu0
        %1162 = vdwg.mxu0
        %1166 = vrot.lane.b32.xlu0 %v1140, 96
        %v1167 = vpop.permute.xlu0 %1166
        %1168 = vrot.lane.b32.xlu0 %v1145, 96
        %v1169 = vpop.permute.xlu0 %1168
        %1170 = vrot.lane.b32.xlu0 %v1150, 96
        %v1171 = vpop.permute.xlu0 %1170
        %vm1172 = vcmask 130048
        %v1173 = vsel %vm1172, %v1140, 0
        %v1175 = vsel %vm1172, %v1145, 0
        %v1177 = vsel %vm1172, %v1150, 0
        %v1179 = vsel %vm1172, %v1167, 0
        %v1181 = vsel %vm1172, %v1169, 0
        %v1183 = vsel %vm1172, %v1171, 0
        %1185 = vmatprep.subr.mxu0 0.0
        %1186 = vmatpush1.xpose.msra.mxu0 %v1179
        %1187 = vmatprep.subr.mxu0 0.0
        %1188 = vmatpush1.xpose.msra.mxu0 %v1181
        %1189 = vmatprep.subr.mxu0 0.0
        %1190 = vmatpush1.xpose.msra.mxu0 %v1183
        %1191 = vmatprep.subr.mxu0 0.0
        %1192 = vmatpush1.xpose.msra.mxu0 0.0
        %1193 = vmatprep.subr.mxu0 0.0
        %1194 = vmatpush1.xpose.msra.mxu0 0.0
        %1195 = vmatprep.subr.mxu0 0.0
        %1196 = vmatpush1.xpose.msra.mxu0 0.0
        %1197 = vmatprep.subr.mxu0 0.0
        %1198 = vmatpush1.xpose.msra.mxu0 0.0
        %1199 = vmatprep.subr.mxu0 0.0
        %1200 = vmatpush1.xpose.msra.mxu0 0.0
        %1201 = vmatprep.subr.mxu0 0.0
        %1202 = vmatpush1.xpose.msra.mxu0 0.0
        %1203 = vmatprep.subr.mxu0 0.0
        %1204 = vmatpush1.xpose.msra.mxu0 0.0
        %1205 = vmatprep.subr.mxu0 0.0
        %1206 = vmatpush1.xpose.msra.mxu0 0.0
        %1207 = vmatprep.subr.mxu0 0.0
        %1208 = vmatpush1.xpose.msra.mxu0 0.0
        %1209 = vmatprep.subr.mxu0 0.0
        %1210 = vmatpush1.xpose.msra.mxu0 0.0
        %1211 = vmatprep.subr.mxu0 0.0
        %1212 = vmatpush1.xpose.msra.mxu0 0.0
        %1213 = vmatprep.subr.mxu0 0.0
        %1214 = vmatpush1.xpose.msra.mxu0 0.0
        %1215 = vmatprep.subr.mxu0 0.0
        %1216 = vmatpush1.xpose.msra.mxu0 0.0
        %1217 = vmatprep.subr.mxu0 0.0
        %1218 = vmatpush1.xpose.msra.mxu0 0.0
        %1219 = vmatprep.subr.mxu0 0.0
        %1220 = vmatpush1.xpose.msra.mxu0 0.0
        %1221 = vmatprep.subr.mxu0 0.0
        %1222 = vmatpush1.xpose.msra.mxu0 0.0
        %1223 = vmatprep.subr.mxu0 0.0
        %1224 = vmatpush1.xpose.msra.mxu0 0.0
        %1225 = vmatprep.subr.mxu0 0.0
        %1226 = vmatpush1.xpose.msra.mxu0 0.0
        %1227 = vmatprep.subr.mxu0 0.0
        %1228 = vmatpush1.xpose.msra.mxu0 0.0
        %1229 = vmatprep.subr.mxu0 0.0
        %1230 = vmatpush1.xpose.msra.mxu0 0.0
        %1231 = vmatprep.subr.mxu0 0.0
        %1232 = vmatpush1.xpose.msra.mxu0 0.0
        %1233 = vmatprep.subr.mxu0 0.0
        %1234 = vmatpush1.xpose.msra.mxu0 0.0
        %1235 = vmatprep.subr.mxu0 0.0
        %1236 = vmatpush1.xpose.msra.mxu0 0.0
        %1237 = vmatprep.subr.mxu0 0.0
        %1238 = vmatpush1.xpose.msra.mxu0 0.0
        %1239 = vmatprep.subr.mxu0 0.0
        %1240 = vmatpush1.xpose.msra.mxu0 0.0
        %1241 = vmatprep.subr.mxu0 0.0
        %1242 = vmatpush1.xpose.msra.mxu0 0.0
        %1243 = vmatprep.subr.mxu0 0.0
        %1244 = vmatpush1.xpose.msra.mxu0 0.0
        %1245 = vmatprep.subr.mxu0 0.0
        %1246 = vmatpush1.xpose.msra.mxu0 0.0
        %1247 = vmatprep.subr.mxu0 0.0
        %1248 = vmatpush1.xpose.msra.mxu0 0.0
        %1249 = vmatprep.mubr.f32.mxu0 0.0
        %1250 = vmatmul.mubr.f32.gmra.mrb[0].mxu0 %v1173
        %v1251 = vpop.f32.mrb[0].mxu0
        %v1252 = vadd.f32 0.0, %v1251
        %v1253 = vpop.f32.mrb[0].mxu0
        %1254 = vmatprep.mubr.f32.mxu0 0.0
        %1255 = vmatmul.mubr.f32.gmra.mrb[0].mxu0 %v1175
        %v1256 = vpop.f32.mrb[0].mxu0
        %v1257 = vadd.f32 0.0, %v1256
        %v1258 = vpop.f32.mrb[0].mxu0
        %1259 = vmatprep.mubr.f32.mxu0 0.0
        %1260 = vmatmul.mubr.f32.gmra.mrb[0].mxu0 %v1177
        %v1261 = vpop.f32.mrb[0].mxu0
        %v1262 = vadd.f32 0.0, %v1261
        %v1263 = vpop.f32.mrb[0].mxu0
        %1264 = vdwg.mxu0
        %v1265 = vmul.f32 %v1252, 0.25
        %v1266 = vmul.f32 %v1257, 0.25
        %v1267 = vmul.f32 %v1262, 0.25
        %vm1268 = vcmask 138240
        %v1269 = vsel %vm1268, %v1265, -inf
        %1270 = vmax.xlane.f32.xlu0 %v1269
        %v1271 = vpop.xlane.xlu0 %1270
        %v1272 = vsel %vm1268, %v1266, -inf
        %1273 = vmax.xlane.f32.xlu0 %v1272
        %v1274 = vpop.xlane.xlu0 %1273
        %vm1275 = vcmask 131072
        %v1276 = vsel %vm1275, %v1267, -inf
        %1277 = vmax.xlane.f32.xlu0 %v1276
        %v1278 = vpop.xlane.xlu0 %1277
        %v1279 = vsub.f32 %v1265, %v1271
        %v1280 = vsub.f32 %v1266, %v1274
        %v1281 = vsub.f32 %v1267, %v1278
        %v1282 = vmul.f32 %v1279, 1.442695
        %v1283 = vpow.pop %v1282
        %v1284 = vmul.f32 %v1280, 1.442695
        %v1285 = vpow.pop %v1284
        %v1286 = vmul.f32 %v1281, 1.442695
        %v1287 = vpow.pop %v1286
        %v1288 = vsel %vm1268, %v1283, 0.0
        %1289 = vadd.xlane.f32.xlu0 %v1288
        %v1290 = vpop.xlane.xlu0 %1289
        %v1291 = vsel %vm1268, %v1285, 0.0
        %1292 = vadd.xlane.f32.xlu0 %v1291
        %v1293 = vpop.xlane.xlu0 %1292
        %v1294 = vsel %vm1275, %v1287, 0.0
        %1295 = vadd.xlane.f32.xlu0 %v1294
        %v1296 = vpop.xlane.xlu0 %1295
        %v1297 = vrcp.pop %v1290
        %v1298 = vrcp.pop %v1293
        %v1299 = vrcp.pop %v1296
        %v1300 = vmul.f32 %v1283, %v1297
        %v1301 = vmul.f32 %v1285, %v1298
        %v1302 = vmul.f32 %v1287, %v1299
        %1303 = vrot.lane.b32.xlu0 %v1140, 64
        %v1304 = vpop.permute.xlu0 %1303
        %1305 = vrot.lane.b32.xlu0 %v1145, 64
        %v1306 = vpop.permute.xlu0 %1305
        %1307 = vrot.lane.b32.xlu0 %v1150, 64
        %v1308 = vpop.permute.xlu0 %1307
        %v1312 = vsel %vm1268, %v1300, 0
        %v1315 = vsel %vm1268, %v1301, 0
        %v1318 = vsel %vm1268, %v1302, 0
        %vm1320 = vcmask 1040384
        %v1321 = vsel %vm1320, %v1308, 0
        %1323 = vmatprep.subr.mxu0 0.0
        %1324 = vmatpush1.msra.mxu0 %v1304
        %1325 = vmatprep.subr.mxu0 0.0
        %1326 = vmatpush1.msra.mxu0 %v1306
        %1327 = vmatprep.subr.mxu0 0.0
        %1328 = vmatpush1.msra.mxu0 %v1321
        %1329 = vmatprep.subr.mxu0 0.0
        %1330 = vmatpush1.msra.mxu0 0.0
        %1331 = vmatprep.subr.mxu0 0.0
        %1332 = vmatpush1.msra.mxu0 0.0
        %1333 = vmatprep.subr.mxu0 0.0
        %1334 = vmatpush1.msra.mxu0 0.0
        %1335 = vmatprep.subr.mxu0 0.0
        %1336 = vmatpush1.msra.mxu0 0.0
        %1337 = vmatprep.subr.mxu0 0.0
        %1338 = vmatpush1.msra.mxu0 0.0
        %1339 = vmatprep.subr.mxu0 0.0
        %1340 = vmatpush1.msra.mxu0 0.0
        %1341 = vmatprep.subr.mxu0 0.0
        %1342 = vmatpush1.msra.mxu0 0.0
        %1343 = vmatprep.subr.mxu0 0.0
        %1344 = vmatpush1.msra.mxu0 0.0
        %1345 = vmatprep.subr.mxu0 0.0
        %1346 = vmatpush1.msra.mxu0 0.0
        %1347 = vmatprep.subr.mxu0 0.0
        %1348 = vmatpush1.msra.mxu0 0.0
        %1349 = vmatprep.subr.mxu0 0.0
        %1350 = vmatpush1.msra.mxu0 0.0
        %1351 = vmatprep.subr.mxu0 0.0
        %1352 = vmatpush1.msra.mxu0 0.0
        %1353 = vmatprep.subr.mxu0 0.0
        %1354 = vmatpush1.msra.mxu0 0.0
        %1355 = vmatprep.subr.mxu0 0.0
        %1356 = vmatpush1.msra.mxu0 0.0
        %1357 = vmatprep.subr.mxu0 0.0
        %1358 = vmatpush1.msra.mxu0 0.0
        %1359 = vmatprep.subr.mxu0 0.0
        %1360 = vmatpush1.msra.mxu0 0.0
        %1361 = vmatprep.subr.mxu0 0.0
        %1362 = vmatpush1.msra.mxu0 0.0
        %1363 = vmatprep.subr.mxu0 0.0
        %1364 = vmatpush1.msra.mxu0 0.0
        %1365 = vmatprep.subr.mxu0 0.0
        %1366 = vmatpush1.msra.mxu0 0.0
        %1367 = vmatprep.subr.mxu0 0.0
        %1368 = vmatpush1.msra.mxu0 0.0
        %1369 = vmatprep.subr.mxu0 0.0
        %1370 = vmatpush1.msra.mxu0 0.0
        %1371 = vmatprep.subr.mxu0 0.0
        %1372 = vmatpush1.msra.mxu0 0.0
        %1373 = vmatprep.subr.mxu0 0.0
        %1374 = vmatpush1.msra.mxu0 0.0
        %1375 = vmatprep.subr.mxu0 0.0
        %1376 = vmatpush1.msra.mxu0 0.0
        %1377 = vmatprep.subr.mxu0 0.0
        %1378 = vmatpush1.msra.mxu0 0.0
        %1379 = vmatprep.subr.mxu0 0.0
        %1380 = vmatpush1.msra.mxu0 0.0
        %1381 = vmatprep.subr.mxu0 0.0
        %1382 = vmatpush1.msra.mxu0 0.0
        %1383 = vmatprep.subr.mxu0 0.0
        %1384 = vmatpush1.msra.mxu0 0.0
        %1385 = vmatprep.subr.mxu0 0.0
        %1386 = vmatpush1.msra.mxu0 0.0
        %1387 = vmatprep.mubr.f32.mxu0 0.0
        %1388 = vmatmul.mubr.f32.gmra.mrb[0].mxu0 %v1312
        %v1389 = vpop.f32.mrb[0].mxu0
        %v1390 = vadd.f32 0.0, %v1389
        %v1391 = vpop.f32.mrb[0].mxu0
        %1392 = vmatprep.mubr.f32.mxu0 0.0
        %1393 = vmatmul.mubr.f32.gmra.mrb[0].mxu0 %v1315
        %v1394 = vpop.f32.mrb[0].mxu0
        %v1395 = vadd.f32 0.0, %v1394
        %v1396 = vpop.f32.mrb[0].mxu0
        %1397 = vmatprep.mubr.f32.mxu0 0.0
        %1398 = vmatmul.mubr.f32.gmra.mrb[0].mxu0 %v1318
        %v1399 = vpop.f32.mrb[0].mxu0
        %v1400 = vadd.f32 0.0, %v1399
        %v1401 = vpop.f32.mrb[0].mxu0
        %1402 = vdwg.mxu0
        %1403 = vrot.lane.b32.xlu0 %v1140, 112
        %v1404 = vpop.permute.xlu0 %1403
        %1405 = vrot.lane.b32.xlu0 %v1145, 112
        %v1406 = vpop.permute.xlu0 %1405
        %1407 = vrot.lane.b32.xlu0 %v1150, 112
        %v1408 = vpop.permute.xlu0 %1407
        %1409 = vrot.lane.b32.xlu0 %v1140, 80
        %v1410 = vpop.permute.xlu0 %1409
        %1411 = vrot.lane.b32.xlu0 %v1145, 80
        %v1412 = vpop.permute.xlu0 %1411
        %1413 = vrot.lane.b32.xlu0 %v1150, 80
        %v1414 = vpop.permute.xlu0 %1413
        %v1415 = vsel %vm1172, %v1404, 0
        %v1417 = vsel %vm1172, %v1406, 0
        %v1419 = vsel %vm1172, %v1408, 0
        %v1421 = vsel %vm1172, %v1410, 0
        %v1423 = vsel %vm1172, %v1412, 0
        %v1425 = vsel %vm1172, %v1414, 0
        %1427 = vmatprep.subr.mxu0 0.0
        %1428 = vmatpush1.xpose.msra.mxu0 %v1421
        %1429 = vmatprep.subr.mxu0 0.0
        %1430 = vmatpush1.xpose.msra.mxu0 %v1423
        %1431 = vmatprep.subr.mxu0 0.0
        %1432 = vmatpush1.xpose.msra.mxu0 %v1425
        %1433 = vmatprep.subr.mxu0 0.0
        %1434 = vmatpush1.xpose.msra.mxu0 0.0
        %1435 = vmatprep.subr.mxu0 0.0
        %1436 = vmatpush1.xpose.msra.mxu0 0.0
        %1437 = vmatprep.subr.mxu0 0.0
        %1438 = vmatpush1.xpose.msra.mxu0 0.0
        %1439 = vmatprep.subr.mxu0 0.0
        %1440 = vmatpush1.xpose.msra.mxu0 0.0
        %1441 = vmatprep.subr.mxu0 0.0
        %1442 = vmatpush1.xpose.msra.mxu0 0.0
        %1443 = vmatprep.subr.mxu0 0.0
        %1444 = vmatpush1.xpose.msra.mxu0 0.0
        %1445 = vmatprep.subr.mxu0 0.0
        %1446 = vmatpush1.xpose.msra.mxu0 0.0
        %1447 = vmatprep.subr.mxu0 0.0
        %1448 = vmatpush1.xpose.msra.mxu0 0.0
        %1449 = vmatprep.subr.mxu0 0.0
        %1450 = vmatpush1.xpose.msra.mxu0 0.0
        %1451 = vmatprep.subr.mxu0 0.0
        %1452 = vmatpush1.xpose.msra.mxu0 0.0
        %1453 = vmatprep.subr.mxu0 0.0
        %1454 = vmatpush1.xpose.msra.mxu0 0.0
        %1455 = vmatprep.subr.mxu0 0.0
        %1456 = vmatpush1.xpose.msra.mxu0 0.0
        %1457 = vmatprep.subr.mxu0 0.0
        %1458 = vmatpush1.xpose.msra.mxu0 0.0
        %1459 = vmatprep.subr.mxu0 0.0
        %1460 = vmatpush1.xpose.msra.mxu0 0.0
        %1461 = vmatprep.subr.mxu0 0.0
        %1462 = vmatpush1.xpose.msra.mxu0 0.0
        %1463 = vmatprep.subr.mxu0 0.0
        %1464 = vmatpush1.xpose.msra.mxu0 0.0
        %1465 = vmatprep.subr.mxu0 0.0
        %1466 = vmatpush1.xpose.msra.mxu0 0.0
        %1467 = vmatprep.subr.mxu0 0.0
        %1468 = vmatpush1.xpose.msra.mxu0 0.0
        %1469 = vmatprep.subr.mxu0 0.0
        %1470 = vmatpush1.xpose.msra.mxu0 0.0
        %1471 = vmatprep.subr.mxu0 0.0
        %1472 = vmatpush1.xpose.msra.mxu0 0.0
        %1473 = vmatprep.subr.mxu0 0.0
        %1474 = vmatpush1.xpose.msra.mxu0 0.0
        %1475 = vmatprep.subr.mxu0 0.0
        %1476 = vmatpush1.xpose.msra.mxu0 0.0
        %1477 = vmatprep.subr.mxu0 0.0
        %1478 = vmatpush1.xpose.msra.mxu0 0.0
        %1479 = vmatprep.subr.mxu0 0.0
        %1480 = vmatpush1.xpose.msra.mxu0 0.0
        %1481 = vmatprep.subr.mxu0 0.0
        %1482 = vmatpush1.xpose.msra.mxu0 0.0
        %1483 = vmatprep.subr.mxu0 0.0
        %1484 = vmatpush1.xpose.msra.mxu0 0.0
        %1485 = vmatprep.subr.mxu0 0.0
        %1486 = vmatpush1.xpose.msra.mxu0 0.0
        %1487 = vmatprep.subr.mxu0 0.0
        %1488 = vmatpush1.xpose.msra.mxu0 0.0
        %1489 = vmatprep.subr.mxu0 0.0
        %1490 = vmatpush1.xpose.msra.mxu0 0.0
        %1491 = vmatprep.mubr.f32.mxu0 0.0
        %1492 = vmatmul.mubr.f32.gmra.mrb[0].mxu0 %v1415
        %v1493 = vpop.f32.mrb[0].mxu0
        %v1494 = vadd.f32 0.0, %v1493
        %v1495 = vpop.f32.mrb[0].mxu0
        %1496 = vmatprep.mubr.f32.mxu0 0.0
        %1497 = vmatmul.mubr.f32.gmra.mrb[0].mxu0 %v1417
        %v1498 = vpop.f32.mrb[0].mxu0
        %v1499 = vadd.f32 0.0, %v1498
        %v1500 = vpop.f32.mrb[0].mxu0
        %1501 = vmatprep.mubr.f32.mxu0 0.0
        %1502 = vmatmul.mubr.f32.gmra.mrb[0].mxu0 %v1419
        %v1503 = vpop.f32.mrb[0].mxu0
        %v1504 = vadd.f32 0.0, %v1503
        %v1505 = vpop.f32.mrb[0].mxu0
        %1506 = vdwg.mxu0
        %v1507 = vmul.f32 %v1494, 0.25
        %v1508 = vmul.f32 %v1499, 0.25
        %v1509 = vmul.f32 %v1504, 0.25
        %v1510 = vsel %vm1268, %v1507, -inf
        %1511 = vmax.xlane.f32.xlu0 %v1510
        %v1512 = vpop.xlane.xlu0 %1511
        %v1513 = vsel %vm1268, %v1508, -inf
        %1514 = vmax.xlane.f32.xlu0 %v1513
        %v1515 = vpop.xlane.xlu0 %1514
        %v1516 = vsel %vm1275, %v1509, -inf
        %1517 = vmax.xlane.f32.xlu0 %v1516
        %v1518 = vpop.xlane.xlu0 %1517
        %v1519 = vsub.f32 %v1507, %v1512
        %v1520 = vsub.f32 %v1508, %v1515
        %v1521 = vsub.f32 %v1509, %v1518
        %v1522 = vmul.f32 %v1519, 1.442695
        %v1523 = vpow.pop %v1522
        %v1524 = vmul.f32 %v1520, 1.442695
        %v1525 = vpow.pop %v1524
        %v1526 = vmul.f32 %v1521, 1.442695
        %v1527 = vpow.pop %v1526
        %v1528 = vsel %vm1268, %v1523, 0.0
        %1529 = vadd.xlane.f32.xlu0 %v1528
        %v1530 = vpop.xlane.xlu0 %1529
        %v1531 = vsel %vm1268, %v1525, 0.0
        %1532 = vadd.xlane.f32.xlu0 %v1531
        %v1533 = vpop.xlane.xlu0 %1532
        %v1534 = vsel %vm1275, %v1527, 0.0
        %1535 = vadd.xlane.f32.xlu0 %v1534
        %v1536 = vpop.xlane.xlu0 %1535
        %v1537 = vrcp.pop %v1530
        %v1538 = vrcp.pop %v1533
        %v1539 = vrcp.pop %v1536
        %v1540 = vmul.f32 %v1523, %v1537
        %v1541 = vmul.f32 %v1525, %v1538
        %v1542 = vmul.f32 %v1527, %v1539
        %1543 = vrot.lane.b32.xlu0 %v1140, 48
        %v1544 = vpop.permute.xlu0 %1543
        %1545 = vrot.lane.b32.xlu0 %v1145, 48
        %v1546 = vpop.permute.xlu0 %1545
        %1547 = vrot.lane.b32.xlu0 %v1150, 48
        %v1548 = vpop.permute.xlu0 %1547
        %v1552 = vsel %vm1268, %v1540, 0
        %v1555 = vsel %vm1268, %v1541, 0
        %v1558 = vsel %vm1268, %v1542, 0
        %v1560 = vsel %vm1320, %v1548, 0
        %1562 = vmatprep.subr.mxu0 0.0
        %1563 = vmatpush1.msra.mxu0 %v1544
        %1564 = vmatprep.subr.mxu0 0.0
        %1565 = vmatpush1.msra.mxu0 %v1546
        %1566 = vmatprep.subr.mxu0 0.0
        %1567 = vmatpush1.msra.mxu0 %v1560
        %1568 = vmatprep.subr.mxu0 0.0
        %1569 = vmatpush1.msra.mxu0 0.0
        %1570 = vmatprep.subr.mxu0 0.0
        %1571 = vmatpush1.msra.mxu0 0.0
        %1572 = vmatprep.subr.mxu0 0.0
        %1573 = vmatpush1.msra.mxu0 0.0
        %1574 = vmatprep.subr.mxu0 0.0
        %1575 = vmatpush1.msra.mxu0 0.0
        %1576 = vmatprep.subr.mxu0 0.0
        %1577 = vmatpush1.msra.mxu0 0.0
        %1578 = vmatprep.subr.mxu0 0.0
        %1579 = vmatpush1.msra.mxu0 0.0
        %1580 = vmatprep.subr.mxu0 0.0
        %1581 = vmatpush1.msra.mxu0 0.0
        %1582 = vmatprep.subr.mxu0 0.0
        %1583 = vmatpush1.msra.mxu0 0.0
        %1584 = vmatprep.subr.mxu0 0.0
        %1585 = vmatpush1.msra.mxu0 0.0
        %1586 = vmatprep.subr.mxu0 0.0
        %1587 = vmatpush1.msra.mxu0 0.0
        %1588 = vmatprep.subr.mxu0 0.0
        %1589 = vmatpush1.msra.mxu0 0.0
        %1590 = vmatprep.subr.mxu0 0.0
        %1591 = vmatpush1.msra.mxu0 0.0
        %1592 = vmatprep.subr.mxu0 0.0
        %1593 = vmatpush1.msra.mxu0 0.0
        %1594 = vmatprep.subr.mxu0 0.0
        %1595 = vmatpush1.msra.mxu0 0.0
        %1596 = vmatprep.subr.mxu0 0.0
        %1597 = vmatpush1.msra.mxu0 0.0
        %1598 = vmatprep.subr.mxu0 0.0
        %1599 = vmatpush1.msra.mxu0 0.0
        %1600 = vmatprep.subr.mxu0 0.0
        %1601 = vmatpush1.msra.mxu0 0.0
        %1602 = vmatprep.subr.mxu0 0.0
        %1603 = vmatpush1.msra.mxu0 0.0
        %1604 = vmatprep.subr.mxu0 0.0
        %1605 = vmatpush1.msra.mxu0 0.0
        %1606 = vmatprep.subr.mxu0 0.0
        %1607 = vmatpush1.msra.mxu0 0.0
        %1608 = vmatprep.subr.mxu0 0.0
        %1609 = vmatpush1.msra.mxu0 0.0
        %1610 = vmatprep.subr.mxu0 0.0
        %1611 = vmatpush1.msra.mxu0 0.0
        %1612 = vmatprep.subr.mxu0 0.0
        %1613 = vmatpush1.msra.mxu0 0.0
        %1614 = vmatprep.subr.mxu0 0.0
        %1615 = vmatpush1.msra.mxu0 0.0
        %1616 = vmatprep.subr.mxu0 0.0
        %1617 = vmatpush1.msra.mxu0 0.0
        %1618 = vmatprep.subr.mxu0 0.0
        %1619 = vmatpush1.msra.mxu0 0.0
        %1620 = vmatprep.subr.mxu0 0.0
        %1621 = vmatpush1.msra.mxu0 0.0
        %1622 = vmatprep.subr.mxu0 0.0
        %1623 = vmatpush1.msra.mxu0 0.0
        %1624 = vmatprep.subr.mxu0 0.0
        %1625 = vmatpush1.msra.mxu0 0.0
        %1626 = vmatprep.mubr.f32.mxu0 0.0
        %1627 = vmatmul.mubr.f32.gmra.mrb[0].mxu0 %v1552
        %v1628 = vpop.f32.mrb[0].mxu0
        %v1629 = vadd.f32 0.0, %v1628
        %v1630 = vpop.f32.mrb[0].mxu0
        %1631 = vmatprep.mubr.f32.mxu0 0.0
        %1632 = vmatmul.mubr.f32.gmra.mrb[0].mxu0 %v1555
        %v1633 = vpop.f32.mrb[0].mxu0
        %v1634 = vadd.f32 0.0, %v1633
        %v1635 = vpop.f32.mrb[0].mxu0
        %1636 = vmatprep.mubr.f32.mxu0 0.0
        %1637 = vmatmul.mubr.f32.gmra.mrb[0].mxu0 %v1558
        %v1638 = vpop.f32.mrb[0].mxu0
        %v1639 = vadd.f32 0.0, %v1638
        %v1640 = vpop.f32.mrb[0].mxu0
        %1641 = vdwg.mxu0
        %1645 = vrot.lane.b32.xlu0 %v1629, 16
        %v1646 = vpop.permute.xlu0 %1645
        %1647 = vrot.lane.b32.xlu0 %v1634, 16
        %v1648 = vpop.permute.xlu0 %1647
        %1649 = vrot.lane.b32.xlu0 %v1639, 16
        %v1650 = vpop.permute.xlu0 %1649
        %v1654 = vsel %vm1172, %v1390, %v1646
        %v1655 = vsel %vm1172, %v1395, %v1648
        %v1656 = vsel %vm1172, %v1400, %v1650
        %vm1659 = vcmask 1046528
        %v1660 = vrot.slane %v1150, 1
        %v1661 = vrot.slane %v1155, 1
        %v1662 = vsel %vm1659, %v1660, %v1661
        %v1663 = vrot.slane %v1160, 1
        %v1664 = vsel %vm1659, %v1661, %v1663
        %1665 = vrot.lane.b32.xlu0 %v1662, 96
        %v1666 = vpop.permute.xlu0 %1665
        %1667 = vrot.lane.b32.xlu0 %v1664, 96
        %v1668 = vpop.permute.xlu0 %1667
        %1669 = vrot.lane.b32.xlu0 %v1663, 96
        %v1670 = vpop.permute.xlu0 %1669
        %v1671 = vsel %vm1172, %v1662, 0
        %v1673 = vsel %vm1172, %v1664, 0
        %v1675 = vsel %vm1172, %v1663, 0
        %v1677 = vsel %vm1172, %v1666, 0
        %v1679 = vsel %vm1172, %v1668, 0
        %v1681 = vsel %vm1172, %v1670, 0
        %1683 = vmatprep.subr.mxu0 0.0
        %1684 = vmatpush1.xpose.msra.mxu0 %v1677
        %1685 = vmatprep.subr.mxu0 0.0
        %1686 = vmatpush1.xpose.msra.mxu0 %v1679
        %1687 = vmatprep.subr.mxu0 0.0
        %1688 = vmatpush1.xpose.msra.mxu0 %v1681
        %1689 = vmatprep.subr.mxu0 0.0
        %1690 = vmatpush1.xpose.msra.mxu0 0.0
        %1691 = vmatprep.subr.mxu0 0.0
        %1692 = vmatpush1.xpose.msra.mxu0 0.0
        %1693 = vmatprep.subr.mxu0 0.0
        %1694 = vmatpush1.xpose.msra.mxu0 0.0
        %1695 = vmatprep.subr.mxu0 0.0
        %1696 = vmatpush1.xpose.msra.mxu0 0.0
        %1697 = vmatprep.subr.mxu0 0.0
        %1698 = vmatpush1.xpose.msra.mxu0 0.0
        %1699 = vmatprep.subr.mxu0 0.0
        %1700 = vmatpush1.xpose.msra.mxu0 0.0
        %1701 = vmatprep.subr.mxu0 0.0
        %1702 = vmatpush1.xpose.msra.mxu0 0.0
        %1703 = vmatprep.subr.mxu0 0.0
        %1704 = vmatpush1.xpose.msra.mxu0 0.0
        %1705 = vmatprep.subr.mxu0 0.0
        %1706 = vmatpush1.xpose.msra.mxu0 0.0
        %1707 = vmatprep.subr.mxu0 0.0
        %1708 = vmatpush1.xpose.msra.mxu0 0.0
        %1709 = vmatprep.subr.mxu0 0.0
        %1710 = vmatpush1.xpose.msra.mxu0 0.0
        %1711 = vmatprep.subr.mxu0 0.0
        %1712 = vmatpush1.xpose.msra.mxu0 0.0
        %1713 = vmatprep.subr.mxu0 0.0
        %1714 = vmatpush1.xpose.msra.mxu0 0.0
        %1715 = vmatprep.subr.mxu0 0.0
        %1716 = vmatpush1.xpose.msra.mxu0 0.0
        %1717 = vmatprep.subr.mxu0 0.0
        %1718 = vmatpush1.xpose.msra.mxu0 0.0
        %1719 = vmatprep.subr.mxu0 0.0
        %1720 = vmatpush1.xpose.msra.mxu0 0.0
        %1721 = vmatprep.subr.mxu0 0.0
        %1722 = vmatpush1.xpose.msra.mxu0 0.0
        %1723 = vmatprep.subr.mxu0 0.0
        %1724 = vmatpush1.xpose.msra.mxu0 0.0
        %1725 = vmatprep.subr.mxu0 0.0
        %1726 = vmatpush1.xpose.msra.mxu0 0.0
        %1727 = vmatprep.subr.mxu0 0.0
        %1728 = vmatpush1.xpose.msra.mxu0 0.0
        %1729 = vmatprep.subr.mxu0 0.0
        %1730 = vmatpush1.xpose.msra.mxu0 0.0
        %1731 = vmatprep.subr.mxu0 0.0
        %1732 = vmatpush1.xpose.msra.mxu0 0.0
        %1733 = vmatprep.subr.mxu0 0.0
        %1734 = vmatpush1.xpose.msra.mxu0 0.0
        %1735 = vmatprep.subr.mxu0 0.0
        %1736 = vmatpush1.xpose.msra.mxu0 0.0
        %1737 = vmatprep.subr.mxu0 0.0
        %1738 = vmatpush1.xpose.msra.mxu0 0.0
        %1739 = vmatprep.subr.mxu0 0.0
        %1740 = vmatpush1.xpose.msra.mxu0 0.0
        %1741 = vmatprep.subr.mxu0 0.0
        %1742 = vmatpush1.xpose.msra.mxu0 0.0
        %1743 = vmatprep.subr.mxu0 0.0
        %1744 = vmatpush1.xpose.msra.mxu0 0.0
        %1745 = vmatprep.subr.mxu0 0.0
        %1746 = vmatpush1.xpose.msra.mxu0 0.0
        %1747 = vmatprep.mubr.f32.mxu0 0.0
        %1748 = vmatmul.mubr.f32.gmra.mrb[0].mxu0 %v1671
        %v1749 = vpop.f32.mrb[0].mxu0
        %v1750 = vadd.f32 0.0, %v1749
        %v1751 = vpop.f32.mrb[0].mxu0
        %1752 = vmatprep.mubr.f32.mxu0 0.0
        %1753 = vmatmul.mubr.f32.gmra.mrb[0].mxu0 %v1673
        %v1754 = vpop.f32.mrb[0].mxu0
        %v1755 = vadd.f32 0.0, %v1754
        %v1756 = vpop.f32.mrb[0].mxu0
        %1757 = vmatprep.mubr.f32.mxu0 0.0
        %1758 = vmatmul.mubr.f32.gmra.mrb[0].mxu0 %v1675
        %v1759 = vpop.f32.mrb[0].mxu0
        %v1760 = vadd.f32 0.0, %v1759
        %v1761 = vpop.f32.mrb[0].mxu0
        %1762 = vdwg.mxu0
        %v1763 = vmul.f32 %v1750, 0.25
        %v1764 = vmul.f32 %v1755, 0.25
        %v1765 = vmul.f32 %v1760, 0.25
        %v1766 = vsel %vm1268, %v1763, -inf
        %1767 = vmax.xlane.f32.xlu0 %v1766
        %v1768 = vpop.xlane.xlu0 %1767
        %v1769 = vsel %vm1268, %v1764, -inf
        %1770 = vmax.xlane.f32.xlu0 %v1769
        %v1771 = vpop.xlane.xlu0 %1770
        %v1772 = vsel %vm1275, %v1765, -inf
        %1773 = vmax.xlane.f32.xlu0 %v1772
        %v1774 = vpop.xlane.xlu0 %1773
        %v1775 = vsub.f32 %v1763, %v1768
        %v1776 = vsub.f32 %v1764, %v1771
        %v1777 = vsub.f32 %v1765, %v1774
        %v1778 = vmul.f32 %v1775, 1.442695
        %v1779 = vpow.pop %v1778
        %v1780 = vmul.f32 %v1776, 1.442695
        %v1781 = vpow.pop %v1780
        %v1782 = vmul.f32 %v1777, 1.442695
        %v1783 = vpow.pop %v1782
        %v1784 = vsel %vm1268, %v1779, 0.0
        %1785 = vadd.xlane.f32.xlu0 %v1784
        %v1786 = vpop.xlane.xlu0 %1785
        %v1787 = vsel %vm1268, %v1781, 0.0
        %1788 = vadd.xlane.f32.xlu0 %v1787
        %v1789 = vpop.xlane.xlu0 %1788
        %v1790 = vsel %vm1275, %v1783, 0.0
        %1791 = vadd.xlane.f32.xlu0 %v1790
        %v1792 = vpop.xlane.xlu0 %1791
        %v1793 = vrcp.pop %v1786
        %v1794 = vrcp.pop %v1789
        %v1795 = vrcp.pop %v1792
        %v1796 = vmul.f32 %v1779, %v1793
        %v1797 = vmul.f32 %v1781, %v1794
        %v1798 = vmul.f32 %v1783, %v1795
        %1799 = vrot.lane.b32.xlu0 %v1662, 64
        %v1800 = vpop.permute.xlu0 %1799
        %1801 = vrot.lane.b32.xlu0 %v1664, 64
        %v1802 = vpop.permute.xlu0 %1801
        %1803 = vrot.lane.b32.xlu0 %v1663, 64
        %v1804 = vpop.permute.xlu0 %1803
        %v1808 = vsel %vm1268, %v1796, 0
        %v1811 = vsel %vm1268, %v1797, 0
        %v1814 = vsel %vm1268, %v1798, 0
        %v1816 = vsel %vm1320, %v1804, 0
        %1818 = vmatprep.subr.mxu0 0.0
        %1819 = vmatpush1.msra.mxu0 %v1800
        %1820 = vmatprep.subr.mxu0 0.0
        %1821 = vmatpush1.msra.mxu0 %v1802
        %1822 = vmatprep.subr.mxu0 0.0
        %1823 = vmatpush1.msra.mxu0 %v1816
        %1824 = vmatprep.subr.mxu0 0.0
        %1825 = vmatpush1.msra.mxu0 0.0
        %1826 = vmatprep.subr.mxu0 0.0
        %1827 = vmatpush1.msra.mxu0 0.0
        %1828 = vmatprep.subr.mxu0 0.0
        %1829 = vmatpush1.msra.mxu0 0.0
        %1830 = vmatprep.subr.mxu0 0.0
        %1831 = vmatpush1.msra.mxu0 0.0
        %1832 = vmatprep.subr.mxu0 0.0
        %1833 = vmatpush1.msra.mxu0 0.0
        %1834 = vmatprep.subr.mxu0 0.0
        %1835 = vmatpush1.msra.mxu0 0.0
        %1836 = vmatprep.subr.mxu0 0.0
        %1837 = vmatpush1.msra.mxu0 0.0
        %1838 = vmatprep.subr.mxu0 0.0
        %1839 = vmatpush1.msra.mxu0 0.0
        %1840 = vmatprep.subr.mxu0 0.0
        %1841 = vmatpush1.msra.mxu0 0.0
        %1842 = vmatprep.subr.mxu0 0.0
        %1843 = vmatpush1.msra.mxu0 0.0
        %1844 = vmatprep.subr.mxu0 0.0
        %1845 = vmatpush1.msra.mxu0 0.0
        %1846 = vmatprep.subr.mxu0 0.0
        %1847 = vmatpush1.msra.mxu0 0.0
        %1848 = vmatprep.subr.mxu0 0.0
        %1849 = vmatpush1.msra.mxu0 0.0
        %1850 = vmatprep.subr.mxu0 0.0
        %1851 = vmatpush1.msra.mxu0 0.0
        %1852 = vmatprep.subr.mxu0 0.0
        %1853 = vmatpush1.msra.mxu0 0.0
        %1854 = vmatprep.subr.mxu0 0.0
        %1855 = vmatpush1.msra.mxu0 0.0
        %1856 = vmatprep.subr.mxu0 0.0
        %1857 = vmatpush1.msra.mxu0 0.0
        %1858 = vmatprep.subr.mxu0 0.0
        %1859 = vmatpush1.msra.mxu0 0.0
        %1860 = vmatprep.subr.mxu0 0.0
        %1861 = vmatpush1.msra.mxu0 0.0
        %1862 = vmatprep.subr.mxu0 0.0
        %1863 = vmatpush1.msra.mxu0 0.0
        %1864 = vmatprep.subr.mxu0 0.0
        %1865 = vmatpush1.msra.mxu0 0.0
        %1866 = vmatprep.subr.mxu0 0.0
        %1867 = vmatpush1.msra.mxu0 0.0
        %1868 = vmatprep.subr.mxu0 0.0
        %1869 = vmatpush1.msra.mxu0 0.0
        %1870 = vmatprep.subr.mxu0 0.0
        %1871 = vmatpush1.msra.mxu0 0.0
        %1872 = vmatprep.subr.mxu0 0.0
        %1873 = vmatpush1.msra.mxu0 0.0
        %1874 = vmatprep.subr.mxu0 0.0
        %1875 = vmatpush1.msra.mxu0 0.0
        %1876 = vmatprep.subr.mxu0 0.0
        %1877 = vmatpush1.msra.mxu0 0.0
        %1878 = vmatprep.subr.mxu0 0.0
        %1879 = vmatpush1.msra.mxu0 0.0
        %1880 = vmatprep.subr.mxu0 0.0
        %1881 = vmatpush1.msra.mxu0 0.0
        %1882 = vmatprep.mubr.f32.mxu0 0.0
        %1883 = vmatmul.mubr.f32.gmra.mrb[0].mxu0 %v1808
        %v1884 = vpop.f32.mrb[0].mxu0
        %v1885 = vadd.f32 0.0, %v1884
        %v1886 = vpop.f32.mrb[0].mxu0
        %1887 = vmatprep.mubr.f32.mxu0 0.0
        %1888 = vmatmul.mubr.f32.gmra.mrb[0].mxu0 %v1811
        %v1889 = vpop.f32.mrb[0].mxu0
        %v1890 = vadd.f32 0.0, %v1889
        %v1891 = vpop.f32.mrb[0].mxu0
        %1892 = vmatprep.mubr.f32.mxu0 0.0
        %1893 = vmatmul.mubr.f32.gmra.mrb[0].mxu0 %v1814
        %v1894 = vpop.f32.mrb[0].mxu0
        %v1895 = vadd.f32 0.0, %v1894
        %v1896 = vpop.f32.mrb[0].mxu0
        %1897 = vdwg.mxu0
        %1898 = vrot.lane.b32.xlu0 %v1662, 112
        %v1899 = vpop.permute.xlu0 %1898
        %1900 = vrot.lane.b32.xlu0 %v1664, 112
        %v1901 = vpop.permute.xlu0 %1900
        %1902 = vrot.lane.b32.xlu0 %v1663, 112
        %v1903 = vpop.permute.xlu0 %1902
        %1904 = vrot.lane.b32.xlu0 %v1662, 80
        %v1905 = vpop.permute.xlu0 %1904
        %1906 = vrot.lane.b32.xlu0 %v1664, 80
        %v1907 = vpop.permute.xlu0 %1906
        %1908 = vrot.lane.b32.xlu0 %v1663, 80
        %v1909 = vpop.permute.xlu0 %1908
        %v1910 = vsel %vm1172, %v1899, 0
        %v1912 = vsel %vm1172, %v1901, 0
        %v1914 = vsel %vm1172, %v1903, 0
        %v1916 = vsel %vm1172, %v1905, 0
        %v1918 = vsel %vm1172, %v1907, 0
        %v1920 = vsel %vm1172, %v1909, 0
        %1922 = vmatprep.subr.mxu0 0.0
        %1923 = vmatpush1.xpose.msra.mxu0 %v1916
        %1924 = vmatprep.subr.mxu0 0.0
        %1925 = vmatpush1.xpose.msra.mxu0 %v1918
        %1926 = vmatprep.subr.mxu0 0.0
        %1927 = vmatpush1.xpose.msra.mxu0 %v1920
        %1928 = vmatprep.subr.mxu0 0.0
        %1929 = vmatpush1.xpose.msra.mxu0 0.0
        %1930 = vmatprep.subr.mxu0 0.0
        %1931 = vmatpush1.xpose.msra.mxu0 0.0
        %1932 = vmatprep.subr.mxu0 0.0
        %1933 = vmatpush1.xpose.msra.mxu0 0.0
        %1934 = vmatprep.subr.mxu0 0.0
        %1935 = vmatpush1.xpose.msra.mxu0 0.0
        %1936 = vmatprep.subr.mxu0 0.0
        %1937 = vmatpush1.xpose.msra.mxu0 0.0
        %1938 = vmatprep.subr.mxu0 0.0
        %1939 = vmatpush1.xpose.msra.mxu0 0.0
        %1940 = vmatprep.subr.mxu0 0.0
        %1941 = vmatpush1.xpose.msra.mxu0 0.0
        %1942 = vmatprep.subr.mxu0 0.0
        %1943 = vmatpush1.xpose.msra.mxu0 0.0
        %1944 = vmatprep.subr.mxu0 0.0
        %1945 = vmatpush1.xpose.msra.mxu0 0.0
        %1946 = vmatprep.subr.mxu0 0.0
        %1947 = vmatpush1.xpose.msra.mxu0 0.0
        %1948 = vmatprep.subr.mxu0 0.0
        %1949 = vmatpush1.xpose.msra.mxu0 0.0
        %1950 = vmatprep.subr.mxu0 0.0
        %1951 = vmatpush1.xpose.msra.mxu0 0.0
        %1952 = vmatprep.subr.mxu0 0.0
        %1953 = vmatpush1.xpose.msra.mxu0 0.0
        %1954 = vmatprep.subr.mxu0 0.0
        %1955 = vmatpush1.xpose.msra.mxu0 0.0
        %1956 = vmatprep.subr.mxu0 0.0
        %1957 = vmatpush1.xpose.msra.mxu0 0.0
        %1958 = vmatprep.subr.mxu0 0.0
        %1959 = vmatpush1.xpose.msra.mxu0 0.0
        %1960 = vmatprep.subr.mxu0 0.0
        %1961 = vmatpush1.xpose.msra.mxu0 0.0
        %1962 = vmatprep.subr.mxu0 0.0
        %1963 = vmatpush1.xpose.msra.mxu0 0.0
        %1964 = vmatprep.subr.mxu0 0.0
        %1965 = vmatpush1.xpose.msra.mxu0 0.0
        %1966 = vmatprep.subr.mxu0 0.0
        %1967 = vmatpush1.xpose.msra.mxu0 0.0
        %1968 = vmatprep.subr.mxu0 0.0
        %1969 = vmatpush1.xpose.msra.mxu0 0.0
        %1970 = vmatprep.subr.mxu0 0.0
        %1971 = vmatpush1.xpose.msra.mxu0 0.0
        %1972 = vmatprep.subr.mxu0 0.0
        %1973 = vmatpush1.xpose.msra.mxu0 0.0
        %1974 = vmatprep.subr.mxu0 0.0
        %1975 = vmatpush1.xpose.msra.mxu0 0.0
        %1976 = vmatprep.subr.mxu0 0.0
        %1977 = vmatpush1.xpose.msra.mxu0 0.0
        %1978 = vmatprep.subr.mxu0 0.0
        %1979 = vmatpush1.xpose.msra.mxu0 0.0
        %1980 = vmatprep.subr.mxu0 0.0
        %1981 = vmatpush1.xpose.msra.mxu0 0.0
        %1982 = vmatprep.subr.mxu0 0.0
        %1983 = vmatpush1.xpose.msra.mxu0 0.0
        %1984 = vmatprep.subr.mxu0 0.0
        %1985 = vmatpush1.xpose.msra.mxu0 0.0
        %1986 = vmatprep.mubr.f32.mxu0 0.0
        %1987 = vmatmul.mubr.f32.gmra.mrb[0].mxu0 %v1910
        %v1988 = vpop.f32.mrb[0].mxu0
        %v1989 = vadd.f32 0.0, %v1988
        %v1990 = vpop.f32.mrb[0].mxu0
        %1991 = vmatprep.mubr.f32.mxu0 0.0
        %1992 = vmatmul.mubr.f32.gmra.mrb[0].mxu0 %v1912
        %v1993 = vpop.f32.mrb[0].mxu0
        %v1994 = vadd.f32 0.0, %v1993
        %v1995 = vpop.f32.mrb[0].mxu0
        %1996 = vmatprep.mubr.f32.mxu0 0.0
        %1997 = vmatmul.mubr.f32.gmra.mrb[0].mxu0 %v1914
        %v1998 = vpop.f32.mrb[0].mxu0
        %v1999 = vadd.f32 0.0, %v1998
        %v2000 = vpop.f32.mrb[0].mxu0
        %2001 = vdwg.mxu0
        %v2002 = vmul.f32 %v1989, 0.25
        %v2003 = vmul.f32 %v1994, 0.25
        %v2004 = vmul.f32 %v1999, 0.25
        %v2005 = vsel %vm1268, %v2002, -inf
        %2006 = vmax.xlane.f32.xlu0 %v2005
        %v2007 = vpop.xlane.xlu0 %2006
        %v2008 = vsel %vm1268, %v2003, -inf
        %2009 = vmax.xlane.f32.xlu0 %v2008
        %v2010 = vpop.xlane.xlu0 %2009
        %v2011 = vsel %vm1275, %v2004, -inf
        %2012 = vmax.xlane.f32.xlu0 %v2011
        %v2013 = vpop.xlane.xlu0 %2012
        %v2014 = vsub.f32 %v2002, %v2007
        %v2015 = vsub.f32 %v2003, %v2010
        %v2016 = vsub.f32 %v2004, %v2013
        %v2017 = vmul.f32 %v2014, 1.442695
        %v2018 = vpow.pop %v2017
        %v2019 = vmul.f32 %v2015, 1.442695
        %v2020 = vpow.pop %v2019
        %v2021 = vmul.f32 %v2016, 1.442695
        %v2022 = vpow.pop %v2021
        %v2023 = vsel %vm1268, %v2018, 0.0
        %2024 = vadd.xlane.f32.xlu0 %v2023
        %v2025 = vpop.xlane.xlu0 %2024
        %v2026 = vsel %vm1268, %v2020, 0.0
        %2027 = vadd.xlane.f32.xlu0 %v2026
        %v2028 = vpop.xlane.xlu0 %2027
        %v2029 = vsel %vm1275, %v2022, 0.0
        %2030 = vadd.xlane.f32.xlu0 %v2029
        %v2031 = vpop.xlane.xlu0 %2030
        %v2032 = vrcp.pop %v2025
        %v2033 = vrcp.pop %v2028
        %v2034 = vrcp.pop %v2031
        %v2035 = vmul.f32 %v2018, %v2032
        %v2036 = vmul.f32 %v2020, %v2033
        %v2037 = vmul.f32 %v2022, %v2034
        %2038 = vrot.lane.b32.xlu0 %v1662, 48
        %v2039 = vpop.permute.xlu0 %2038
        %2040 = vrot.lane.b32.xlu0 %v1664, 48
        %v2041 = vpop.permute.xlu0 %2040
        %2042 = vrot.lane.b32.xlu0 %v1663, 48
        %v2043 = vpop.permute.xlu0 %2042
        %v2047 = vsel %vm1268, %v2035, 0
        %v2050 = vsel %vm1268, %v2036, 0
        %v2053 = vsel %vm1268, %v2037, 0
        %v2055 = vsel %vm1320, %v2043, 0
        %2057 = vmatprep.subr.mxu0 0.0
        %2058 = vmatpush1.msra.mxu0 %v2039
        %2059 = vmatprep.subr.mxu0 0.0
        %2060 = vmatpush1.msra.mxu0 %v2041
        %2061 = vmatprep.subr.mxu0 0.0
        %2062 = vmatpush1.msra.mxu0 %v2055
        %2063 = vmatprep.subr.mxu0 0.0
        %2064 = vmatpush1.msra.mxu0 0.0
        %2065 = vmatprep.subr.mxu0 0.0
        %2066 = vmatpush1.msra.mxu0 0.0
        %2067 = vmatprep.subr.mxu0 0.0
        %2068 = vmatpush1.msra.mxu0 0.0
        %2069 = vmatprep.subr.mxu0 0.0
        %2070 = vmatpush1.msra.mxu0 0.0
        %2071 = vmatprep.subr.mxu0 0.0
        %2072 = vmatpush1.msra.mxu0 0.0
        %2073 = vmatprep.subr.mxu0 0.0
        %2074 = vmatpush1.msra.mxu0 0.0
        %2075 = vmatprep.subr.mxu0 0.0
        %2076 = vmatpush1.msra.mxu0 0.0
        %2077 = vmatprep.subr.mxu0 0.0
        %2078 = vmatpush1.msra.mxu0 0.0
        %2079 = vmatprep.subr.mxu0 0.0
        %2080 = vmatpush1.msra.mxu0 0.0
        %2081 = vmatprep.subr.mxu0 0.0
        %2082 = vmatpush1.msra.mxu0 0.0
        %2083 = vmatprep.subr.mxu0 0.0
        %2084 = vmatpush1.msra.mxu0 0.0
        %2085 = vmatprep.subr.mxu0 0.0
        %2086 = vmatpush1.msra.mxu0 0.0
        %2087 = vmatprep.subr.mxu0 0.0
        %2088 = vmatpush1.msra.mxu0 0.0
        %2089 = vmatprep.subr.mxu0 0.0
        %2090 = vmatpush1.msra.mxu0 0.0
        %2091 = vmatprep.subr.mxu0 0.0
        %2092 = vmatpush1.msra.mxu0 0.0
        %2093 = vmatprep.subr.mxu0 0.0
        %2094 = vmatpush1.msra.mxu0 0.0
        %2095 = vmatprep.subr.mxu0 0.0
        %2096 = vmatpush1.msra.mxu0 0.0
        %2097 = vmatprep.subr.mxu0 0.0
        %2098 = vmatpush1.msra.mxu0 0.0
        %2099 = vmatprep.subr.mxu0 0.0
        %2100 = vmatpush1.msra.mxu0 0.0
        %2101 = vmatprep.subr.mxu0 0.0
        %2102 = vmatpush1.msra.mxu0 0.0
        %2103 = vmatprep.subr.mxu0 0.0
        %2104 = vmatpush1.msra.mxu0 0.0
        %2105 = vmatprep.subr.mxu0 0.0
        %2106 = vmatpush1.msra.mxu0 0.0
        %2107 = vmatprep.subr.mxu0 0.0
        %2108 = vmatpush1.msra.mxu0 0.0
        %2109 = vmatprep.subr.mxu0 0.0
        %2110 = vmatpush1.msra.mxu0 0.0
        %2111 = vmatprep.subr.mxu0 0.0
        %2112 = vmatpush1.msra.mxu0 0.0
        %2113 = vmatprep.subr.mxu0 0.0
        %2114 = vmatpush1.msra.mxu0 0.0
        %2115 = vmatprep.subr.mxu0 0.0
        %2116 = vmatpush1.msra.mxu0 0.0
        %2117 = vmatprep.subr.mxu0 0.0
        %2118 = vmatpush1.msra.mxu0 0.0
        %2119 = vmatprep.subr.mxu0 0.0
        %2120 = vmatpush1.msra.mxu0 0.0
        %2121 = vmatprep.mubr.f32.mxu0 0.0
        %2122 = vmatmul.mubr.f32.gmra.mrb[0].mxu0 %v2047
        %v2123 = vpop.f32.mrb[0].mxu0
        %v2124 = vadd.f32 0.0, %v2123
        %v2125 = vpop.f32.mrb[0].mxu0
        %2126 = vmatprep.mubr.f32.mxu0 0.0
        %2127 = vmatmul.mubr.f32.gmra.mrb[0].mxu0 %v2050
        %v2128 = vpop.f32.mrb[0].mxu0
        %v2129 = vadd.f32 0.0, %v2128
        %v2130 = vpop.f32.mrb[0].mxu0
        %2131 = vmatprep.mubr.f32.mxu0 0.0
        %2132 = vmatmul.mubr.f32.gmra.mrb[0].mxu0 %v2053
        %v2133 = vpop.f32.mrb[0].mxu0
        %v2134 = vadd.f32 0.0, %v2133
        %v2135 = vpop.f32.mrb[0].mxu0
        %2136 = vdwg.mxu0
        %2140 = vrot.lane.b32.xlu0 %v2124, 16
        %v2141 = vpop.permute.xlu0 %2140
        %2142 = vrot.lane.b32.xlu0 %v2129, 16
        %v2143 = vpop.permute.xlu0 %2142
        %2144 = vrot.lane.b32.xlu0 %v2134, 16
        %v2145 = vpop.permute.xlu0 %2144
        %v2149 = vsel %vm1172, %v1885, %v2141
        %v2150 = vsel %vm1172, %v1890, %v2143
        %v2151 = vsel %vm1172, %v1895, %v2145
        %v2155 = vrot.slane %v2149, 7
        %v2156 = vrot.slane %v2150, 7
        %v2157 = vsel %vm1320, %v2155, %v2156
        %v2158 = vrot.slane %v2151, 7
        %v2159 = vsel %vm1320, %v2156, %v2158
        %v2161 = vsel %vm1320, %v1656, %v2155
        %v2162 = vld [vmem:[%s763] sm:$0xff]
        %v2163 = vld [vmem:[%s763 + $0x8] sm:$0xff]
        %v2164 = vld [vmem:[%s763 + $0x10] sm:$0xff]
        %v2165 = vld [vmem:[%s763 + $0x18] sm:$0xff]
        %v2166 = vld [vmem:[%s766] sm:$0x1]
        %v2168 = vlaneseq
        %v2169 = vshrl.u32 %v2168, 7
        %v2170 = vsub.s32 0, %v2169
        %v2171 = vrot.slane %v2166, %v2170
        %v2174 = vsel %vm1057, %v1654, 0
        %v2177 = vsel %vm1057, %v1655, 0
        %v2180 = vsel %vm1057, %v2161, 0
        %v2182 = vsel %vm1057, %v2157, 0
        %v2184 = vsel %vm1057, %v2159, 0
        %2186 = vmatprep.subr.mxu0 0.0
        %2187 = vmatpush1.msra.mxu0 %v2162
        %2188 = vmatprep.subr.mxu0 0.0
        %2189 = vmatpush1.msra.mxu0 %v2163
        %2190 = vmatprep.subr.mxu0 0.0
        %2191 = vmatpush1.msra.mxu0 %v2164
        %2192 = vmatprep.subr.mxu0 0.0
        %2193 = vmatpush1.msra.mxu0 %v2165
        %2194 = vmatprep.subr.mxu0 0.0
        %2195 = vmatpush1.msra.mxu0 0.0
        %2196 = vmatprep.subr.mxu0 0.0
        %2197 = vmatpush1.msra.mxu0 0.0
        %2198 = vmatprep.subr.mxu0 0.0
        %2199 = vmatpush1.msra.mxu0 0.0
        %2200 = vmatprep.subr.mxu0 0.0
        %2201 = vmatpush1.msra.mxu0 0.0
        %2202 = vmatprep.subr.mxu0 0.0
        %2203 = vmatpush1.msra.mxu0 0.0
        %2204 = vmatprep.subr.mxu0 0.0
        %2205 = vmatpush1.msra.mxu0 0.0
        %2206 = vmatprep.subr.mxu0 0.0
        %2207 = vmatpush1.msra.mxu0 0.0
        %2208 = vmatprep.subr.mxu0 0.0
        %2209 = vmatpush1.msra.mxu0 0.0
        %2210 = vmatprep.subr.mxu0 0.0
        %2211 = vmatpush1.msra.mxu0 0.0
        %2212 = vmatprep.subr.mxu0 0.0
        %2213 = vmatpush1.msra.mxu0 0.0
        %2214 = vmatprep.subr.mxu0 0.0
        %2215 = vmatpush1.msra.mxu0 0.0
        %2216 = vmatprep.subr.mxu0 0.0
        %2217 = vmatpush1.msra.mxu0 0.0
        %2218 = vmatprep.subr.mxu0 0.0
        %2219 = vmatpush1.msra.mxu0 0.0
        %2220 = vmatprep.subr.mxu0 0.0
        %2221 = vmatpush1.msra.mxu0 0.0
        %2222 = vmatprep.subr.mxu0 0.0
        %2223 = vmatpush1.msra.mxu0 0.0
        %2224 = vmatprep.subr.mxu0 0.0
        %2225 = vmatpush1.msra.mxu0 0.0
        %2226 = vmatprep.subr.mxu0 0.0
        %2227 = vmatpush1.msra.mxu0 0.0
        %2228 = vmatprep.subr.mxu0 0.0
        %2229 = vmatpush1.msra.mxu0 0.0
        %2230 = vmatprep.subr.mxu0 0.0
        %2231 = vmatpush1.msra.mxu0 0.0
        %2232 = vmatprep.subr.mxu0 0.0
        %2233 = vmatpush1.msra.mxu0 0.0
        %2234 = vmatprep.subr.mxu0 0.0
        %2235 = vmatpush1.msra.mxu0 0.0
        %2236 = vmatprep.subr.mxu0 0.0
        %2237 = vmatpush1.msra.mxu0 0.0
        %2238 = vmatprep.subr.mxu0 0.0
        %2239 = vmatpush1.msra.mxu0 0.0
        %2240 = vmatprep.subr.mxu0 0.0
        %2241 = vmatpush1.msra.mxu0 0.0
        %2242 = vmatprep.subr.mxu0 0.0
        %2243 = vmatpush1.msra.mxu0 0.0
        %2244 = vmatprep.subr.mxu0 0.0
        %2245 = vmatpush1.msra.mxu0 0.0
        %2246 = vmatprep.subr.mxu0 0.0
        %2247 = vmatpush1.msra.mxu0 0.0
        %2248 = vmatprep.subr.mxu0 0.0
        %2249 = vmatpush1.msra.mxu0 0.0
        %2250 = vmatprep.mubr.f32.mxu0 0.0
        %2251 = vmatmul.mubr.f32.gmra.mrb[0].mxu0 %v2174
        %v2252 = vpop.f32.mrb[0].mxu0
        %v2253 = vadd.f32 %v2171, %v2252
        %v2254 = vpop.f32.mrb[0].mxu0
        %2255 = vmatprep.mubr.f32.mxu0 0.0
        %2256 = vmatmul.mubr.f32.gmra.mrb[0].mxu0 %v2177
        %v2257 = vpop.f32.mrb[0].mxu0
        %v2258 = vadd.f32 %v2171, %v2257
        %v2259 = vpop.f32.mrb[0].mxu0
        %2260 = vmatprep.mubr.f32.mxu0 0.0
        %2261 = vmatmul.mubr.f32.gmra.mrb[0].mxu0 %v2180
        %v2262 = vpop.f32.mrb[0].mxu0
        %v2263 = vadd.f32 %v2171, %v2262
        %v2264 = vpop.f32.mrb[0].mxu0
        %2265 = vmatprep.mubr.f32.mxu0 0.0
        %2266 = vmatmul.mubr.f32.gmra.mrb[0].mxu0 %v2182
        %v2267 = vpop.f32.mrb[0].mxu0
        %v2268 = vadd.f32 %v2171, %v2267
        %v2269 = vpop.f32.mrb[0].mxu0
        %2270 = vmatprep.mubr.f32.mxu0 0.0
        %2271 = vmatmul.mubr.f32.gmra.mrb[0].mxu0 %v2184
        %v2272 = vpop.f32.mrb[0].mxu0
        %v2273 = vadd.f32 %v2171, %v2272
        %v2274 = vpop.f32.mrb[0].mxu0
        %2275 = vdwg.mxu0
        %v2276 = vld [vmem:[%s770] sm:$0x3]
        %v2277 = vadd.f32 %v1041, %v2253
        %v2278 = vadd.f32 %v1042, %v2258
        %v2279 = vadd.f32 %v1043, %v2263
        %v2280 = vadd.f32 %v1044, %v2268
        %v2281 = vadd.f32 %v1045, %v2273
        %v2282 = vsel %vm1057, %v2277, 0.0
        %2283 = vadd.xlane.f32.xlu0 %v2282
        %v2284 = vpop.xlane.xlu0 %2283
        %v2285 = vsel %vm1057, %v2278, 0.0
        %2286 = vadd.xlane.f32.xlu0 %v2285
        %v2287 = vpop.xlane.xlu0 %2286
        %v2288 = vsel %vm1057, %v2279, 0.0
        %2289 = vadd.xlane.f32.xlu0 %v2288
        %v2290 = vpop.xlane.xlu0 %2289
        %v2291 = vsel %vm1057, %v2280, 0.0
        %2292 = vadd.xlane.f32.xlu0 %v2291
        %v2293 = vpop.xlane.xlu0 %2292
        %vm2294 = vcmask 254976
        %v2295 = vsel %vm2294, %v2281, 0.0
        %2296 = vadd.xlane.f32.xlu0 %v2295
        %v2297 = vpop.xlane.xlu0 %2296
        %v2298 = vrcp.pop 32.0
        %v2299 = vmul.f32 %v2284, %v2298
        %v2300 = vmul.f32 %v2287, %v2298
        %v2301 = vmul.f32 %v2290, %v2298
        %v2302 = vmul.f32 %v2293, %v2298
        %v2303 = vmul.f32 %v2297, %v2298
        %v2304 = vsub.f32 %v2277, %v2299
        %v2305 = vsub.f32 %v2278, %v2300
        %v2306 = vsub.f32 %v2279, %v2301
        %v2307 = vsub.f32 %v2280, %v2302
        %v2308 = vsub.f32 %v2281, %v2303
        %v2309 = vmul.f32 %v2304, %v2304
        %v2310 = vmul.f32 %v2305, %v2305
        %v2311 = vmul.f32 %v2306, %v2306
        %v2312 = vmul.f32 %v2307, %v2307
        %v2313 = vmul.f32 %v2308, %v2308
        %v2314 = vsel %vm1057, %v2309, 0.0
        %2315 = vadd.xlane.f32.xlu0 %v2314
        %v2316 = vpop.xlane.xlu0 %2315
        %v2317 = vsel %vm1057, %v2310, 0.0
        %2318 = vadd.xlane.f32.xlu0 %v2317
        %v2319 = vpop.xlane.xlu0 %2318
        %v2320 = vsel %vm1057, %v2311, 0.0
        %2321 = vadd.xlane.f32.xlu0 %v2320
        %v2322 = vpop.xlane.xlu0 %2321
        %v2323 = vsel %vm1057, %v2312, 0.0
        %2324 = vadd.xlane.f32.xlu0 %v2323
        %v2325 = vpop.xlane.xlu0 %2324
        %v2326 = vsel %vm2294, %v2313, 0.0
        %2327 = vadd.xlane.f32.xlu0 %v2326
        %v2328 = vpop.xlane.xlu0 %2327
        %v2329 = vmul.f32 %v2316, %v2298
        %v2330 = vmul.f32 %v2319, %v2298
        %v2331 = vmul.f32 %v2322, %v2298
        %v2332 = vmul.f32 %v2325, %v2298
        %v2333 = vmul.f32 %v2328, %v2298
        %v2334 = vadd.f32 %v2329, 1e-12
        %v2335 = vadd.f32 %v2330, 1e-12
        %v2336 = vadd.f32 %v2331, 1e-12
        %v2337 = vadd.f32 %v2332, 1e-12
        %v2338 = vadd.f32 %v2333, 1e-12
        %v2339 = vrsqrt.pop %v2334
        %v2340 = vrsqrt.pop %v2335
        %v2341 = vrsqrt.pop %v2336
        %v2342 = vrsqrt.pop %v2337
        %v2343 = vrsqrt.pop %v2338
        %v2344 = vmul.f32 %v2304, %v2339
        %v2345 = vmul.f32 %v2305, %v2340
        %v2346 = vmul.f32 %v2306, %v2341
        %v2347 = vmul.f32 %v2307, %v2342
        %v2348 = vmul.f32 %v2308, %v2343
        %v2349 = vlaneseq
        %v2350 = vshrl.u32 %v2349, 7
        %v2351 = vsub.s32 0, %v2350
        %v2352 = vrot.slane %v2276, %v2351
        %v2353 = vmul.f32 %v2344, %v2352
        %v2354 = vmul.f32 %v2345, %v2352
        %v2355 = vmul.f32 %v2346, %v2352
        %v2356 = vmul.f32 %v2347, %v2352
        %v2357 = vmul.f32 %v2348, %v2352
        %v2358 = vlaneseq
        %v2359 = vshrl.u32 %v2358, 7
        %v2360 = vsub.s32 1, %v2359
        %v2361 = vrot.slane %v2276, %v2360
        %v2362 = vadd.f32 %v2353, %v2361
        %v2363 = vadd.f32 %v2354, %v2361
        %v2364 = vadd.f32 %v2355, %v2361
        %v2365 = vadd.f32 %v2356, %v2361
        %v2366 = vadd.f32 %v2357, %v2361
        %v2367 = vld [vmem:[%s775] sm:$0xff]
        %v2368 = vld [vmem:[%s775 + $0x8] sm:$0xff]
        %v2369 = vld [vmem:[%s775 + $0x10] sm:$0xff]
        %v2370 = vld [vmem:[%s775 + $0x18] sm:$0xff]
        %v2371 = vld [vmem:[%s778] sm:$0x1]
        %v2373 = vlaneseq
        %v2374 = vshrl.u32 %v2373, 7
        %v2375 = vsub.s32 0, %v2374
        %v2376 = vrot.slane %v2371, %v2375
        %v2379 = vsel %vm1057, %v2362, 0
        %v2382 = vsel %vm1057, %v2363, 0
        %v2385 = vsel %vm1057, %v2364, 0
        %v2388 = vsel %vm1057, %v2365, 0
        %v2391 = vsel %vm1057, %v2366, 0
        %2393 = vmatprep.subr.mxu0 0.0
        %2394 = vmatpush1.msra.mxu0 %v2367
        %2395 = vmatprep.subr.mxu0 0.0
        %2396 = vmatpush1.msra.mxu0 %v2368
        %2397 = vmatprep.subr.mxu0 0.0
        %2398 = vmatpush1.msra.mxu0 %v2369
        %2399 = vmatprep.subr.mxu0 0.0
        %2400 = vmatpush1.msra.mxu0 %v2370
        %2401 = vmatprep.subr.mxu0 0.0
        %2402 = vmatpush1.msra.mxu0 0.0
        %2403 = vmatprep.subr.mxu0 0.0
        %2404 = vmatpush1.msra.mxu0 0.0
        %2405 = vmatprep.subr.mxu0 0.0
        %2406 = vmatpush1.msra.mxu0 0.0
        %2407 = vmatprep.subr.mxu0 0.0
        %2408 = vmatpush1.msra.mxu0 0.0
        %2409 = vmatprep.subr.mxu0 0.0
        %2410 = vmatpush1.msra.mxu0 0.0
        %2411 = vmatprep.subr.mxu0 0.0
        %2412 = vmatpush1.msra.mxu0 0.0
        %2413 = vmatprep.subr.mxu0 0.0
        %2414 = vmatpush1.msra.mxu0 0.0
        %2415 = vmatprep.subr.mxu0 0.0
        %2416 = vmatpush1.msra.mxu0 0.0
        %2417 = vmatprep.subr.mxu0 0.0
        %2418 = vmatpush1.msra.mxu0 0.0
        %2419 = vmatprep.subr.mxu0 0.0
        %2420 = vmatpush1.msra.mxu0 0.0
        %2421 = vmatprep.subr.mxu0 0.0
        %2422 = vmatpush1.msra.mxu0 0.0
        %2423 = vmatprep.subr.mxu0 0.0
        %2424 = vmatpush1.msra.mxu0 0.0
        %2425 = vmatprep.subr.mxu0 0.0
        %2426 = vmatpush1.msra.mxu0 0.0
        %2427 = vmatprep.subr.mxu0 0.0
        %2428 = vmatpush1.msra.mxu0 0.0
        %2429 = vmatprep.subr.mxu0 0.0
        %2430 = vmatpush1.msra.mxu0 0.0
        %2431 = vmatprep.subr.mxu0 0.0
        %2432 = vmatpush1.msra.mxu0 0.0
        %2433 = vmatprep.subr.mxu0 0.0
        %2434 = vmatpush1.msra.mxu0 0.0
        %2435 = vmatprep.subr.mxu0 0.0
        %2436 = vmatpush1.msra.mxu0 0.0
        %2437 = vmatprep.subr.mxu0 0.0
        %2438 = vmatpush1.msra.mxu0 0.0
        %2439 = vmatprep.subr.mxu0 0.0
        %2440 = vmatpush1.msra.mxu0 0.0
        %2441 = vmatprep.subr.mxu0 0.0
        %2442 = vmatpush1.msra.mxu0 0.0
        %2443 = vmatprep.subr.mxu0 0.0
        %2444 = vmatpush1.msra.mxu0 0.0
        %2445 = vmatprep.subr.mxu0 0.0
        %2446 = vmatpush1.msra.mxu0 0.0
        %2447 = vmatprep.subr.mxu0 0.0
        %2448 = vmatpush1.msra.mxu0 0.0
        %2449 = vmatprep.subr.mxu0 0.0
        %2450 = vmatpush1.msra.mxu0 0.0
        %2451 = vmatprep.subr.mxu0 0.0
        %2452 = vmatpush1.msra.mxu0 0.0
        %2453 = vmatprep.subr.mxu0 0.0
        %2454 = vmatpush1.msra.mxu0 0.0
        %2455 = vmatprep.subr.mxu0 0.0
        %2456 = vmatpush1.msra.mxu0 0.0
        %2457 = vmatprep.mubr.f32.mxu0 0.0
        %2458 = vmatmul.mubr.f32.gmra.mrb[0].mxu0 %v2379
        %v2459 = vpop.f32.mrb[0].mxu0
        %v2460 = vadd.f32 %v2376, %v2459
        %v2461 = vpop.f32.mrb[0].mxu0
        %2462 = vmatprep.mubr.f32.mxu0 0.0
        %2463 = vmatmul.mubr.f32.gmra.mrb[0].mxu0 %v2382
        %v2464 = vpop.f32.mrb[0].mxu0
        %v2465 = vadd.f32 %v2376, %v2464
        %v2466 = vpop.f32.mrb[0].mxu0
        %2467 = vmatprep.mubr.f32.mxu0 0.0
        %2468 = vmatmul.mubr.f32.gmra.mrb[0].mxu0 %v2385
        %v2469 = vpop.f32.mrb[0].mxu0
        %v2470 = vadd.f32 %v2376, %v2469
        %v2471 = vpop.f32.mrb[0].mxu0
        %2472 = vmatprep.mubr.f32.mxu0 0.0
        %2473 = vmatmul.mubr.f32.gmra.mrb[0].mxu0 %v2388
        %v2474 = vpop.f32.mrb[0].mxu0
        %v2475 = vadd.f32 %v2376, %v2474
        %v2476 = vpop.f32.mrb[0].mxu0
        %2477 = vmatprep.mubr.f32.mxu0 0.0
        %2478 = vmatmul.mubr.f32.gmra.mrb[0].mxu0 %v2391
        %v2479 = vpop.f32.mrb[0].mxu0
        %v2480 = vadd.f32 %v2376, %v2479
        %v2481 = vpop.f32.mrb[0].mxu0
        %2482 = vdwg.mxu0
        %v2483 = vmul.f32 %v2460, 0.5
        %v2484 = vmul.f32 %v2465, 0.5
        %v2485 = vmul.f32 %v2470, 0.5
        %v2486 = vmul.f32 %v2475, 0.5
        %v2487 = vmul.f32 %v2480, 0.5
        %v2488 = vmul.f32 %v2460, 0.70710677
        %v2489 = vmul.f32 %v2465, 0.70710677
        %v2490 = vmul.f32 %v2470, 0.70710677
        %v2491 = vmul.f32 %v2475, 0.70710677
        %v2492 = vmul.f32 %v2480, 0.70710677
        %vm2493 = vcmp.ge.f32.partialorder %v2488, 0.0
        %vm2494 = vcmp.ge.f32.partialorder %v2489, 0.0
        %vm2495 = vcmp.ge.f32.partialorder %v2490, 0.0
        %vm2496 = vcmp.ge.f32.partialorder %v2491, 0.0
        %vm2497 = vcmp.ge.f32.partialorder %v2492, 0.0
        %v2498 = vsel %vm2493, 1.0, -1.0
        %v2499 = vsel %vm2494, 1.0, -1.0
        %v2500 = vsel %vm2495, 1.0, -1.0
        %v2501 = vsel %vm2496, 1.0, -1.0
        %v2502 = vsel %vm2497, 1.0, -1.0
        %v2503 = vand.u32 2147483647, %v2488
        %v2504 = vand.u32 2147483647, %v2489
        %v2505 = vand.u32 2147483647, %v2490
        %v2506 = vand.u32 2147483647, %v2491
        %v2507 = vand.u32 2147483647, %v2492
        %v2508 = vmul.f32 %v2503, 0.3275911
        %v2509 = vmul.f32 %v2504, 0.3275911
        %v2510 = vmul.f32 %v2505, 0.3275911
        %v2511 = vmul.f32 %v2506, 0.3275911
        %v2512 = vmul.f32 %v2507, 0.3275911
        %v2513 = vadd.f32 %v2508, 1.0
        %v2514 = vadd.f32 %v2509, 1.0
        %v2515 = vadd.f32 %v2510, 1.0
        %v2516 = vadd.f32 %v2511, 1.0
        %v2517 = vadd.f32 %v2512, 1.0
        %v2518 = vrcp.pop %v2513
        %v2519 = vmul.f32 1.0, %v2518
        %v2520 = vrcp.pop %v2514
        %v2521 = vmul.f32 1.0, %v2520
        %v2522 = vrcp.pop %v2515
        %v2523 = vmul.f32 1.0, %v2522
        %v2524 = vrcp.pop %v2516
        %v2525 = vmul.f32 1.0, %v2524
        %v2526 = vrcp.pop %v2517
        %v2527 = vmul.f32 1.0, %v2526
        %v2528 = vmul.f32 %v2519, 1.0614054
        %v2529 = vmul.f32 %v2521, 1.0614054
        %v2530 = vmul.f32 %v2523, 1.0614054
        %v2531 = vmul.f32 %v2525, 1.0614054
        %v2532 = vmul.f32 %v2527, 1.0614054
        %v2533 = vadd.f32 %v2528, -1.4531521
        %v2534 = vadd.f32 %v2529, -1.4531521
        %v2535 = vadd.f32 %v2530, -1.4531521
        %v2536 = vadd.f32 %v2531, -1.4531521
        %v2537 = vadd.f32 %v2532, -1.4531521
        %v2538 = vmul.f32 %v2533, %v2519
        %v2539 = vmul.f32 %v2534, %v2521
        %v2540 = vmul.f32 %v2535, %v2523
        %v2541 = vmul.f32 %v2536, %v2525
        %v2542 = vmul.f32 %v2537, %v2527
        %v2543 = vadd.f32 %v2538, 1.4214138
        %v2544 = vadd.f32 %v2539, 1.4214138
        %v2545 = vadd.f32 %v2540, 1.4214138
        %v2546 = vadd.f32 %v2541, 1.4214138
        %v2547 = vadd.f32 %v2542, 1.4214138
        %v2548 = vmul.f32 %v2543, %v2519
        %v2549 = vmul.f32 %v2544, %v2521
        %v2550 = vmul.f32 %v2545, %v2523
        %v2551 = vmul.f32 %v2546, %v2525
        %v2552 = vmul.f32 %v2547, %v2527
        %v2553 = vadd.f32 %v2548, -0.28449672
        %v2554 = vadd.f32 %v2549, -0.28449672
        %v2555 = vadd.f32 %v2550, -0.28449672
        %v2556 = vadd.f32 %v2551, -0.28449672
        %v2557 = vadd.f32 %v2552, -0.28449672
        %v2558 = vmul.f32 %v2553, %v2519
        %v2559 = vmul.f32 %v2554, %v2521
        %v2560 = vmul.f32 %v2555, %v2523
        %v2561 = vmul.f32 %v2556, %v2525
        %v2562 = vmul.f32 %v2557, %v2527
        %v2563 = vadd.f32 %v2558, 0.2548296
        %v2564 = vadd.f32 %v2559, 0.2548296
        %v2565 = vadd.f32 %v2560, 0.2548296
        %v2566 = vadd.f32 %v2561, 0.2548296
        %v2567 = vadd.f32 %v2562, 0.2548296
        %v2568 = vmul.f32 %v2563, %v2519
        %v2569 = vmul.f32 %v2564, %v2521
        %v2570 = vmul.f32 %v2565, %v2523
        %v2571 = vmul.f32 %v2566, %v2525
        %v2572 = vmul.f32 %v2567, %v2527
        %v2573 = vsub.f32 0.0, %v2503
        %v2574 = vsub.f32 0.0, %v2504
        %v2575 = vsub.f32 0.0, %v2505
        %v2576 = vsub.f32 0.0, %v2506
        %v2577 = vsub.f32 0.0, %v2507
        %v2578 = vmul.f32 %v2573, %v2503
        %v2579 = vmul.f32 %v2574, %v2504
        %v2580 = vmul.f32 %v2575, %v2505
        %v2581 = vmul.f32 %v2576, %v2506
        %v2582 = vmul.f32 %v2577, %v2507
        %v2583 = vmul.f32 %v2578, 1.442695
        %v2584 = vpow.pop %v2583
        %v2585 = vmul.f32 %v2579, 1.442695
        %v2586 = vpow.pop %v2585
        %v2587 = vmul.f32 %v2580, 1.442695
        %v2588 = vpow.pop %v2587
        %v2589 = vmul.f32 %v2581, 1.442695
        %v2590 = vpow.pop %v2589
        %v2591 = vmul.f32 %v2582, 1.442695
        %v2592 = vpow.pop %v2591
        %v2593 = vmul.f32 %v2568, %v2584
        %v2594 = vmul.f32 %v2569, %v2586
        %v2595 = vmul.f32 %v2570, %v2588
        %v2596 = vmul.f32 %v2571, %v2590
        %v2597 = vmul.f32 %v2572, %v2592
        %v2598 = vsub.f32 1.0, %v2593
        %v2599 = vsub.f32 1.0, %v2594
        %v2600 = vsub.f32 1.0, %v2595
        %v2601 = vsub.f32 1.0, %v2596
        %v2602 = vsub.f32 1.0, %v2597
        %v2603 = vmul.f32 %v2498, %v2598
        %v2604 = vmul.f32 %v2499, %v2599
        %v2605 = vmul.f32 %v2500, %v2600
        %v2606 = vmul.f32 %v2501, %v2601
        %v2607 = vmul.f32 %v2502, %v2602
        %v2608 = vadd.f32 %v2603, 1.0
        %v2609 = vadd.f32 %v2604, 1.0
        %v2610 = vadd.f32 %v2605, 1.0
        %v2611 = vadd.f32 %v2606, 1.0
        %v2612 = vadd.f32 %v2607, 1.0
        %v2613 = vmul.f32 %v2483, %v2608
        %v2614 = vmul.f32 %v2484, %v2609
        %v2615 = vmul.f32 %v2485, %v2610
        %v2616 = vmul.f32 %v2486, %v2611
        %v2617 = vmul.f32 %v2487, %v2612
        %v2618 = vld [vmem:[%s783] sm:$0xff]
        %v2619 = vld [vmem:[%s783 + $0x8] sm:$0xff]
        %v2620 = vld [vmem:[%s783 + $0x10] sm:$0xff]
        %v2621 = vld [vmem:[%s783 + $0x18] sm:$0xff]
        %v2622 = vld [vmem:[%s783 + $0x20] sm:$0xff]
        %v2623 = vld [vmem:[%s783 + $0x28] sm:$0xff]
        %v2624 = vld [vmem:[%s783 + $0x30] sm:$0xff]
        %v2625 = vld [vmem:[%s783 + $0x38] sm:$0xff]
        %v2626 = vld [vmem:[%s786] sm:$0x1]
        %v2628 = vlaneseq
        %v2629 = vshrl.u32 %v2628, 7
        %v2630 = vsub.s32 0, %v2629
        %v2631 = vrot.slane %v2626, %v2630
        %vm2633 = vcmask 523264
        %v2635 = vsel %vm2633, %v2613, 0
        %v2638 = vsel %vm2633, %v2614, 0
        %v2641 = vsel %vm2633, %v2615, 0
        %v2644 = vsel %vm2633, %v2616, 0
        %v2647 = vsel %vm2633, %v2617, 0
        %2649 = vmatprep.subr.mxu0 0.0
        %2650 = vmatpush1.msra.mxu0 %v2618
        %2651 = vmatprep.subr.mxu0 0.0
        %2652 = vmatpush1.msra.mxu0 %v2619
        %2653 = vmatprep.subr.mxu0 0.0
        %2654 = vmatpush1.msra.mxu0 %v2620
        %2655 = vmatprep.subr.mxu0 0.0
        %2656 = vmatpush1.msra.mxu0 %v2621
        %2657 = vmatprep.subr.mxu0 0.0
        %2658 = vmatpush1.msra.mxu0 %v2622
        %2659 = vmatprep.subr.mxu0 0.0
        %2660 = vmatpush1.msra.mxu0 %v2623
        %2661 = vmatprep.subr.mxu0 0.0
        %2662 = vmatpush1.msra.mxu0 %v2624
        %2663 = vmatprep.subr.mxu0 0.0
        %2664 = vmatpush1.msra.mxu0 %v2625
        %2665 = vmatprep.subr.mxu0 0.0
        %2666 = vmatpush1.msra.mxu0 0.0
        %2667 = vmatprep.subr.mxu0 0.0
        %2668 = vmatpush1.msra.mxu0 0.0
        %2669 = vmatprep.subr.mxu0 0.0
        %2670 = vmatpush1.msra.mxu0 0.0
        %2671 = vmatprep.subr.mxu0 0.0
        %2672 = vmatpush1.msra.mxu0 0.0
        %2673 = vmatprep.subr.mxu0 0.0
        %2674 = vmatpush1.msra.mxu0 0.0
        %2675 = vmatprep.subr.mxu0 0.0
        %2676 = vmatpush1.msra.mxu0 0.0
        %2677 = vmatprep.subr.mxu0 0.0
        %2678 = vmatpush1.msra.mxu0 0.0
        %2679 = vmatprep.subr.mxu0 0.0
        %2680 = vmatpush1.msra.mxu0 0.0
        %2681 = vmatprep.subr.mxu0 0.0
        %2682 = vmatpush1.msra.mxu0 0.0
        %2683 = vmatprep.subr.mxu0 0.0
        %2684 = vmatpush1.msra.mxu0 0.0
        %2685 = vmatprep.subr.mxu0 0.0
        %2686 = vmatpush1.msra.mxu0 0.0
        %2687 = vmatprep.subr.mxu0 0.0
        %2688 = vmatpush1.msra.mxu0 0.0
        %2689 = vmatprep.subr.mxu0 0.0
        %2690 = vmatpush1.msra.mxu0 0.0
        %2691 = vmatprep.subr.mxu0 0.0
        %2692 = vmatpush1.msra.mxu0 0.0
        %2693 = vmatprep.subr.mxu0 0.0
        %2694 = vmatpush1.msra.mxu0 0.0
        %2695 = vmatprep.subr.mxu0 0.0
        %2696 = vmatpush1.msra.mxu0 0.0
        %2697 = vmatprep.subr.mxu0 0.0
        %2698 = vmatpush1.msra.mxu0 0.0
        %2699 = vmatprep.subr.mxu0 0.0
        %2700 = vmatpush1.msra.mxu0 0.0
        %2701 = vmatprep.subr.mxu0 0.0
        %2702 = vmatpush1.msra.mxu0 0.0
        %2703 = vmatprep.subr.mxu0 0.0
        %2704 = vmatpush1.msra.mxu0 0.0
        %2705 = vmatprep.subr.mxu0 0.0
        %2706 = vmatpush1.msra.mxu0 0.0
        %2707 = vmatprep.subr.mxu0 0.0
        %2708 = vmatpush1.msra.mxu0 0.0
        %2709 = vmatprep.subr.mxu0 0.0
        %2710 = vmatpush1.msra.mxu0 0.0
        %2711 = vmatprep.subr.mxu0 0.0
        %2712 = vmatpush1.msra.mxu0 0.0
        %2713 = vmatprep.mubr.f32.mxu0 0.0
        %2714 = vmatmul.mubr.f32.gmra.mrb[0].mxu0 %v2635
        %v2715 = vpop.f32.mrb[0].mxu0
        %v2716 = vadd.f32 %v2631, %v2715
        %v2717 = vpop.f32.mrb[0].mxu0
        %2718 = vmatprep.mubr.f32.mxu0 0.0
        %2719 = vmatmul.mubr.f32.gmra.mrb[0].mxu0 %v2638
        %v2720 = vpop.f32.mrb[0].mxu0
        %v2721 = vadd.f32 %v2631, %v2720
        %v2722 = vpop.f32.mrb[0].mxu0
        %2723 = vmatprep.mubr.f32.mxu0 0.0
        %2724 = vmatmul.mubr.f32.gmra.mrb[0].mxu0 %v2641
        %v2725 = vpop.f32.mrb[0].mxu0
        %v2726 = vadd.f32 %v2631, %v2725
        %v2727 = vpop.f32.mrb[0].mxu0
        %2728 = vmatprep.mubr.f32.mxu0 0.0
        %2729 = vmatmul.mubr.f32.gmra.mrb[0].mxu0 %v2644
        %v2730 = vpop.f32.mrb[0].mxu0
        %v2731 = vadd.f32 %v2631, %v2730
        %v2732 = vpop.f32.mrb[0].mxu0
        %2733 = vmatprep.mubr.f32.mxu0 0.0
        %2734 = vmatmul.mubr.f32.gmra.mrb[0].mxu0 %v2647
        %v2735 = vpop.f32.mrb[0].mxu0
        %v2736 = vadd.f32 %v2631, %v2735
        %v2737 = vpop.f32.mrb[0].mxu0
        %2738 = vdwg.mxu0
        %v2739 = vld [vmem:[%s790] sm:$0x3]
        %v2740 = vadd.f32 %v2362, %v2716
        %v2741 = vadd.f32 %v2363, %v2721
        %v2742 = vadd.f32 %v2364, %v2726
        %v2743 = vadd.f32 %v2365, %v2731
        %v2744 = vadd.f32 %v2366, %v2736
        %v2745 = vsel %vm1057, %v2740, 0.0
        %2746 = vadd.xlane.f32.xlu0 %v2745
        %v2747 = vpop.xlane.xlu0 %2746
        %v2748 = vsel %vm1057, %v2741, 0.0
        %2749 = vadd.xlane.f32.xlu0 %v2748
        %v2750 = vpop.xlane.xlu0 %2749
        %v2751 = vsel %vm1057, %v2742, 0.0
        %2752 = vadd.xlane.f32.xlu0 %v2751
        %v2753 = vpop.xlane.xlu0 %2752
        %v2754 = vsel %vm1057, %v2743, 0.0
        %2755 = vadd.xlane.f32.xlu0 %v2754
        %v2756 = vpop.xlane.xlu0 %2755
        %v2757 = vsel %vm2294, %v2744, 0.0
        %2758 = vadd.xlane.f32.xlu0 %v2757
        %v2759 = vpop.xlane.xlu0 %2758
        %v2760 = vmul.f32 %v2747, %v2298
        %v2761 = vmul.f32 %v2750, %v2298
        %v2762 = vmul.f32 %v2753, %v2298
        %v2763 = vmul.f32 %v2756, %v2298
        %v2764 = vmul.f32 %v2759, %v2298
        %v2765 = vsub.f32 %v2740, %v2760
        %v2766 = vsub.f32 %v2741, %v2761
        %v2767 = vsub.f32 %v2742, %v2762
        %v2768 = vsub.f32 %v2743, %v2763
        %v2769 = vsub.f32 %v2744, %v2764
        %v2770 = vmul.f32 %v2765, %v2765
        %v2771 = vmul.f32 %v2766, %v2766
        %v2772 = vmul.f32 %v2767, %v2767
        %v2773 = vmul.f32 %v2768, %v2768
        %v2774 = vmul.f32 %v2769, %v2769
        %v2775 = vsel %vm1057, %v2770, 0.0
        %2776 = vadd.xlane.f32.xlu0 %v2775
        %v2777 = vpop.xlane.xlu0 %2776
        %v2778 = vsel %vm1057, %v2771, 0.0
        %2779 = vadd.xlane.f32.xlu0 %v2778
        %v2780 = vpop.xlane.xlu0 %2779
        %v2781 = vsel %vm1057, %v2772, 0.0
        %2782 = vadd.xlane.f32.xlu0 %v2781
        %v2783 = vpop.xlane.xlu0 %2782
        %v2784 = vsel %vm1057, %v2773, 0.0
        %2785 = vadd.xlane.f32.xlu0 %v2784
        %v2786 = vpop.xlane.xlu0 %2785
        %v2787 = vsel %vm2294, %v2774, 0.0
        %2788 = vadd.xlane.f32.xlu0 %v2787
        %v2789 = vpop.xlane.xlu0 %2788
        %v2790 = vmul.f32 %v2777, %v2298
        %v2791 = vmul.f32 %v2780, %v2298
        %v2792 = vmul.f32 %v2783, %v2298
        %v2793 = vmul.f32 %v2786, %v2298
        %v2794 = vmul.f32 %v2789, %v2298
        %v2795 = vadd.f32 %v2790, 1e-12
        %v2796 = vadd.f32 %v2791, 1e-12
        %v2797 = vadd.f32 %v2792, 1e-12
        %v2798 = vadd.f32 %v2793, 1e-12
        %v2799 = vadd.f32 %v2794, 1e-12
        %v2800 = vrsqrt.pop %v2795
        %v2801 = vrsqrt.pop %v2796
        %v2802 = vrsqrt.pop %v2797
        %v2803 = vrsqrt.pop %v2798
        %v2804 = vrsqrt.pop %v2799
        %v2805 = vmul.f32 %v2765, %v2800
        %v2806 = vmul.f32 %v2766, %v2801
        %v2807 = vmul.f32 %v2767, %v2802
        %v2808 = vmul.f32 %v2768, %v2803
        %v2809 = vmul.f32 %v2769, %v2804
        %v2810 = vlaneseq
        %v2811 = vshrl.u32 %v2810, 7
        %v2812 = vsub.s32 0, %v2811
        %v2813 = vrot.slane %v2739, %v2812
        %v2814 = vmul.f32 %v2805, %v2813
        %v2815 = vmul.f32 %v2806, %v2813
        %v2816 = vmul.f32 %v2807, %v2813
        %v2817 = vmul.f32 %v2808, %v2813
        %v2818 = vmul.f32 %v2809, %v2813
        %v2819 = vlaneseq
        %v2820 = vshrl.u32 %v2819, 7
        %v2821 = vsub.s32 1, %v2820
        %v2822 = vrot.slane %v2739, %v2821
        %v2823 = vadd.f32 %v2814, %v2822
        %v2824 = vadd.f32 %v2815, %v2822
        %v2825 = vadd.f32 %v2816, %v2822
        %v2826 = vadd.f32 %v2817, %v2822
        %v2827 = vadd.f32 %v2818, %v2822
        %2828 = vst.msk [vmem:[#allocation2] sm:$0xff] %vm1057, %v2823
        %2829 = vst.msk [vmem:[#allocation2 + $0x8] sm:$0xff] %vm1057, %v2824
        %2830 = vst.msk [vmem:[#allocation2 + $0x10] sm:$0xff] %vm1057, %v2825
        %2831 = vst.msk [vmem:[#allocation2 + $0x18] sm:$0xff] %vm1057, %v2826
        %2832 = vst.msk [vmem:[#allocation2 + $0x20] sm:$0x3] %vm2294, %v2827
        %s2833 = sadd.s32 %s34, 1
        %s2834 = smul.u32 %s2833, 40
        %s2835 = scalar_lea.vmem %s20, %s2834
        %2836 = vst.msk [vmem:[%s2835] sm:$0xff] %vm1057, %v2823
        %2837 = vst.msk [vmem:[%s2835 + $0x8] sm:$0xff] %vm1057, %v2824
        %2838 = vst.msk [vmem:[%s2835 + $0x10] sm:$0xff] %vm1057, %v2825
        %2839 = vst.msk [vmem:[%s2835 + $0x18] sm:$0xff] %vm1057, %v2826
        %2840 = vst.msk [vmem:[%s2835 + $0x20] sm:$0x3] %vm2294, %v2827
        %p2841 = scmp.eq.s32.totalorder %s34, 11
        // Predicated region
        $region105: #{vit_forward.1} parent=99 // pred_check
          %p2842 = pneg %p2841
        $region106: #{vit_forward.1} parent=99 // pred_check_branch
          %2844 = sbr.rel (%p2842) target = $region108
        $region107: #{vit_forward.1} parent=99 // pred_region
          %v2845 = vsel %vm1320, %v2823, %v2825
          %v2846 = vld [vmem:[%s16] sm:$0xff]
          %v2847 = vld [vmem:[%s16 + $0x8] sm:$0xff]
          %v2848 = vld [vmem:[%s16 + $0x10] sm:$0xff]
          %v2849 = vld [vmem:[%s16 + $0x18] sm:$0xff]
          %v2850 = vld [vmem:[%s17] sm:$0x1]
          %v2852 = vlaneseq
          %v2853 = vshrl.u32 %v2852, 7
          %v2854 = vsub.s32 0, %v2853
          %v2855 = vrot.slane %v2850, %v2854
          %v2858 = vsel %vm1057, %v2845, 0
          %2860 = vmatprep.subr.mxu0 0.0
          %2861 = vmatpush1.msra.mxu0 %v2846
          %2862 = vmatprep.subr.mxu0 0.0
          %2863 = vmatpush1.msra.mxu0 %v2847
          %2864 = vmatprep.subr.mxu0 0.0
          %2865 = vmatpush1.msra.mxu0 %v2848
          %2866 = vmatprep.subr.mxu0 0.0
          %2867 = vmatpush1.msra.mxu0 %v2849
          %2868 = vmatprep.subr.mxu0 0.0
          %2869 = vmatpush1.msra.mxu0 0.0
          %2870 = vmatprep.subr.mxu0 0.0
          %2871 = vmatpush1.msra.mxu0 0.0
          %2872 = vmatprep.subr.mxu0 0.0
          %2873 = vmatpush1.msra.mxu0 0.0
          %2874 = vmatprep.subr.mxu0 0.0
          %2875 = vmatpush1.msra.mxu0 0.0
          %2876 = vmatprep.subr.mxu0 0.0
          %2877 = vmatpush1.msra.mxu0 0.0
          %2878 = vmatprep.subr.mxu0 0.0
          %2879 = vmatpush1.msra.mxu0 0.0
          %2880 = vmatprep.subr.mxu0 0.0
          %2881 = vmatpush1.msra.mxu0 0.0
          %2882 = vmatprep.subr.mxu0 0.0
          %2883 = vmatpush1.msra.mxu0 0.0
          %2884 = vmatprep.subr.mxu0 0.0
          %2885 = vmatpush1.msra.mxu0 0.0
          %2886 = vmatprep.subr.mxu0 0.0
          %2887 = vmatpush1.msra.mxu0 0.0
          %2888 = vmatprep.subr.mxu0 0.0
          %2889 = vmatpush1.msra.mxu0 0.0
          %2890 = vmatprep.subr.mxu0 0.0
          %2891 = vmatpush1.msra.mxu0 0.0
          %2892 = vmatprep.subr.mxu0 0.0
          %2893 = vmatpush1.msra.mxu0 0.0
          %2894 = vmatprep.subr.mxu0 0.0
          %2895 = vmatpush1.msra.mxu0 0.0
          %2896 = vmatprep.subr.mxu0 0.0
          %2897 = vmatpush1.msra.mxu0 0.0
          %2898 = vmatprep.subr.mxu0 0.0
          %2899 = vmatpush1.msra.mxu0 0.0
          %2900 = vmatprep.subr.mxu0 0.0
          %2901 = vmatpush1.msra.mxu0 0.0
          %2902 = vmatprep.subr.mxu0 0.0
          %2903 = vmatpush1.msra.mxu0 0.0
          %2904 = vmatprep.subr.mxu0 0.0
          %2905 = vmatpush1.msra.mxu0 0.0
          %2906 = vmatprep.subr.mxu0 0.0
          %2907 = vmatpush1.msra.mxu0 0.0
          %2908 = vmatprep.subr.mxu0 0.0
          %2909 = vmatpush1.msra.mxu0 0.0
          %2910 = vmatprep.subr.mxu0 0.0
          %2911 = vmatpush1.msra.mxu0 0.0
          %2912 = vmatprep.subr.mxu0 0.0
          %2913 = vmatpush1.msra.mxu0 0.0
          %2914 = vmatprep.subr.mxu0 0.0
          %2915 = vmatpush1.msra.mxu0 0.0
          %2916 = vmatprep.subr.mxu0 0.0
          %2917 = vmatpush1.msra.mxu0 0.0
          %2918 = vmatprep.subr.mxu0 0.0
          %2919 = vmatpush1.msra.mxu0 0.0
          %2920 = vmatprep.subr.mxu0 0.0
          %2921 = vmatpush1.msra.mxu0 0.0
          %2922 = vmatprep.subr.mxu0 0.0
          %2923 = vmatpush1.msra.mxu0 0.0
          %2924 = vmatprep.mubr.f32.mxu0 0.0
          %2925 = vmatmul.mubr.f32.gmra.mrb[0].mxu0 %v2858
          %v2926 = vpop.f32.mrb[0].mxu0
          %v2927 = vadd.f32 %v2855, %v2926
          %v2928 = vpop.f32.mrb[0].mxu0
          %2929 = vdwg.mxu0
          %v2930 = vtanh.pop %v2927
          %v2931 = vld [vmem:[%s18] sm:$0xff]
          %v2932 = vld [vmem:[%s18 + $0x8] sm:$0xff]
          %v2933 = vld [vmem:[%s18 + $0x10] sm:$0xff]
          %v2934 = vld [vmem:[%s18 + $0x18] sm:$0xff]
          %v2935 = vld [vmem:[%s19] sm:$0x1]
          %v2937 = vlaneseq
          %v2938 = vshrl.u32 %v2937, 7
          %v2939 = vsub.s32 0, %v2938
          %v2940 = vrot.slane %v2935, %v2939
          %v2943 = vsel %vm1057, %v2930, 0
          %2945 = vmatprep.subr.mxu0 0.0
          %2946 = vmatpush1.msra.mxu0 %v2931
          %2947 = vmatprep.subr.mxu0 0.0
          %2948 = vmatpush1.msra.mxu0 %v2932
          %2949 = vmatprep.subr.mxu0 0.0
          %2950 = vmatpush1.msra.mxu0 %v2933
          %2951 = vmatprep.subr.mxu0 0.0
          %2952 = vmatpush1.msra.mxu0 %v2934
          %2953 = vmatprep.subr.mxu0 0.0
          %2954 = vmatpush1.msra.mxu0 0.0
          %2955 = vmatprep.subr.mxu0 0.0
          %2956 = vmatpush1.msra.mxu0 0.0
          %2957 = vmatprep.subr.mxu0 0.0
          %2958 = vmatpush1.msra.mxu0 0.0
          %2959 = vmatprep.subr.mxu0 0.0
          %2960 = vmatpush1.msra.mxu0 0.0
          %2961 = vmatprep.subr.mxu0 0.0
          %2962 = vmatpush1.msra.mxu0 0.0
          %2963 = vmatprep.subr.mxu0 0.0
          %2964 = vmatpush1.msra.mxu0 0.0
          %2965 = vmatprep.subr.mxu0 0.0
          %2966 = vmatpush1.msra.mxu0 0.0
          %2967 = vmatprep.subr.mxu0 0.0
          %2968 = vmatpush1.msra.mxu0 0.0
          %2969 = vmatprep.subr.mxu0 0.0
          %2970 = vmatpush1.msra.mxu0 0.0
          %2971 = vmatprep.subr.mxu0 0.0
          %2972 = vmatpush1.msra.mxu0 0.0
          %2973 = vmatprep.subr.mxu0 0.0
          %2974 = vmatpush1.msra.mxu0 0.0
          %2975 = vmatprep.subr.mxu0 0.0
          %2976 = vmatpush1.msra.mxu0 0.0
          %2977 = vmatprep.subr.mxu0 0.0
          %2978 = vmatpush1.msra.mxu0 0.0
          %2979 = vmatprep.subr.mxu0 0.0
          %2980 = vmatpush1.msra.mxu0 0.0
          %2981 = vmatprep.subr.mxu0 0.0
          %2982 = vmatpush1.msra.mxu0 0.0
          %2983 = vmatprep.subr.mxu0 0.0
          %2984 = vmatpush1.msra.mxu0 0.0
          %2985 = vmatprep.subr.mxu0 0.0
          %2986 = vmatpush1.msra.mxu0 0.0
          %2987 = vmatprep.subr.mxu0 0.0
          %2988 = vmatpush1.msra.mxu0 0.0
          %2989 = vmatprep.subr.mxu0 0.0
          %2990 = vmatpush1.msra.mxu0 0.0
          %2991 = vmatprep.subr.mxu0 0.0
          %2992 = vmatpush1.msra.mxu0 0.0
          %2993 = vmatprep.subr.mxu0 0.0
          %2994 = vmatpush1.msra.mxu0 0.0
          %2995 = vmatprep.subr.mxu0 0.0
          %2996 = vmatpush1.msra.mxu0 0.0
          %2997 = vmatprep.subr.mxu0 0.0
          %2998 = vmatpush1.msra.mxu0 0.0
          %2999 = vmatprep.subr.mxu0 0.0
          %3000 = vmatpush1.msra.mxu0 0.0
          %3001 = vmatprep.subr.mxu0 0.0
          %3002 = vmatpush1.msra.mxu0 0.0
          %3003 = vmatprep.subr.mxu0 0.0
          %3004 = vmatpush1.msra.mxu0 0.0
          %3005 = vmatprep.subr.mxu0 0.0
          %3006 = vmatpush1.msra.mxu0 0.0
          %3007 = vmatprep.subr.mxu0 0.0
          %3008 = vmatpush1.msra.mxu0 0.0
          %3009 = vmatprep.mubr.f32.mxu0 0.0
          %3010 = vmatmul.mubr.f32.gmra.mrb[0].mxu0 %v2943
          %v3011 = vpop.f32.mrb[0].mxu0
          %v3012 = vadd.f32 %v2940, %v3011
          %v3013 = vpop.f32.mrb[0].mxu0
          %3014 = vdwg.mxu0
          %vm3015 = vcmask 74752
          %3016 = vst.msk [vmem:[#allocation3] sm:$0x3] %vm3015, %v3012
        $region108: #{vit_forward.1} parent=99 // pred_fallthru
          _
        // Predicated region
        $region109: #{vit_forward.1} parent=99 // pred_check
          %p3017 = pneg %p517
        $region110: #{vit_forward.1} parent=99 // pred_check_branch
          %3019 = sbr.rel (%p3017) target = $region112
        $region111: #{vit_forward.1} parent=99 // pred_region
          _
        $region112: #{vit_forward.1} parent=99 // pred_fallthru
          _
        // Predicated region
        $region113: #{vit_forward.1} parent=99 // pred_check
          %p3020 = pneg %p538
        $region114: #{vit_forward.1} parent=99 // pred_check_branch
          %3022 = sbr.rel (%p3020) target = $region116
        $region115: #{vit_forward.1} parent=99 // pred_region
          %s3024 = ssub.s32 32, 32
          %3025 = vsyncadd [#allocation4], %s3024
          %s3027 = sshll.u32 [#allocation3], 4
          %s3028 = int_to_ptr.vmem [resolvable:$true] %s3027
          %3030 = dma.vmem_to_hbm [thread:$0]  %s3028, 32, %s21, [#allocation4]
        $region116: #{vit_forward.1} parent=99 // pred_fallthru
          _
        // Predicated region
        $region117: #{vit_forward.1} parent=99 // pred_check
          %p3031 = pneg %p517
        $region118: #{vit_forward.1} parent=99 // pred_check_branch
          %3033 = sbr.rel (%p3031) target = $region120
        $region119: #{vit_forward.1} parent=99 // pred_region
          _
        $region120: #{vit_forward.1} parent=99 // pred_fallthru
          _
        // Predicated region
        $region121: #{vit_forward.1} parent=99 // pred_check
          %p3034 = pneg %p538
        $region122: #{vit_forward.1} parent=99 // pred_check_branch
          %3036 = sbr.rel (%p3034) target = $region124
        $region123: #{vit_forward.1} parent=99 // pred_region
          %3037 = dma.done [#allocation4], 32
        $region124: #{vit_forward.1} parent=99 // pred_fallthru
          _
      $region100: #{vit_forward.1} parent=5 // pred_fallthru
        _
      %p3038 = scmp.le.s32.totalorder 2, %s29
      // Predicated region
      $region125: #{vit_forward.1} parent=5 // pred_check
        %p3039 = pneg %p3038
      $region126: #{vit_forward.1} parent=5 // pred_check_branch
        %3041 = sbr.rel (%p3039) target = $region128
      $region127: #{vit_forward.1} parent=5 // pred_region
        %s3042 = ssub.s32 %s29, 2
      $region128: #{vit_forward.1} parent=5 // pred_fallthru
        _
    $region6: #{vit_forward.1} parent=1 // loop_footer
      %s33 = sadd.s32 1, %s29
    $region7: #{vit_forward.1} parent=1 // loop_footer_branch
      %28 = sbr.rel target = $region3
    $region8: #{vit_forward.1} parent=1 // loop_exit
      _
    %3043 = vsyncpa [#allocation4], 1
    %s3044 = scalar_lea.sflag [#allocation4], 1
    %3045 = vsyncpa %s3044, 1

</llo_original>
